<compile_context>
chip_gen: v5e
topology: v5e:2x2
jax: 0.10.0
libtpu: 0.0.40
codegen_flags: <defaults>
</compile_context>

<pallas_src>
import math

import jax
import jax.numpy as jnp
from jax.experimental import pallas as pl
from jax.experimental.pallas import tpu as pltpu


def _downsample_kernel(w_ref, x_ref, o_ref):
    # Block shapes:
    #   w_ref: (C, C)                 resident conv weight
    #   x_ref: (C, 2*Td, Th, W)       Td depth-pairs x Th input rows x full W
    #   o_ref: (C, Td, Th//2, W//2)   output slab
    _, two_td, Th, W = x_ref.shape
    Td = two_td // 2
    Rh = Th // 2
    Wh = W // 2

    # Exact 0/1 lane-compaction matrices (select even / odd W columns).  Built once
    # per grid step, shared by every row below; the MXU performs the compaction so
    # no lane-strided slicing or minor-dim reshape is needed.
    rows = jax.lax.broadcasted_iota(jnp.int32, (W, Wh), 0)
    cols = jax.lax.broadcasted_iota(jnp.int32, (W, Wh), 1)
    s_even = (rows == 2 * cols).astype(jnp.float32)
    s_odd = (rows == 2 * cols + 1).astype(jnp.float32)

    wmat = w_ref[...].astype(jnp.float32)  # (C, C)

    # Static unroll over the (depth-pair, output-row) tiles of this block; the
    # wrapper bounds Td * Rh so the unrolled body stays compact.
    for td in range(Td):
        d0 = 2 * td
        for r in range(Rh):
            r0 = 2 * r
            # MaxPool over the 2x2 (D, H) window, one (C, W) row strip at a time.
            a = jnp.maximum(x_ref[:, d0, r0, :], x_ref[:, d0, r0 + 1, :])
            b = jnp.maximum(x_ref[:, d0 + 1, r0, :], x_ref[:, d0 + 1, r0 + 1, :])
            xh = jnp.maximum(a, b).astype(jnp.float32)            # (C, W)
            # MaxPool over the W pairs + compaction to W/2 lanes (MXU).
            p_even = jnp.dot(xh, s_even, preferred_element_type=jnp.float32)
            p_odd = jnp.dot(xh, s_odd, preferred_element_type=jnp.float32)
            pooled = jnp.maximum(p_even, p_odd)                    # (C, Wh)
            # 1x1x1 bias-free Conv3d == channel-mixing matmul.
            z = jnp.dot(wmat, pooled, preferred_element_type=jnp.float32)
            o_ref[:, td, r, :] = z.astype(o_ref.dtype)


def _pick_tiles(Dh, H, C, W, itemsize, slab_budget=4 * 2**20, unroll_cap=64):
    """Pick (Td, Th): Td output-depth slices and Th input rows per grid step.

    Constraints:
      - Th divides H; Th is a multiple of 16 (so Rh = Th/2 is a multiple of 8 for the
        output block-shape rule) or Th == H (full dimension),
      - Td divides Dh,
      - the unrolled in-kernel loop Td * Rh stays <= unroll_cap,
      - the per-step x slab (C * 2*Td * Th * W bytes) stays under slab_budget when
        possible (bigger DMAs -> closer to the HBM roofline)."""
    Hh = H // 2
    cands = [t for t in range(16, H + 1, 16) if H % t == 0 and t // 2 <= unroll_cap]
    if Hh <= unroll_cap and H not in cands:
        cands.append(H)
    if not cands:
        # TODO(synk): H with no multiple-of-16 divisor and Hh > unroll_cap; fall back
        # to the full dimension (bigger unroll / VMEM block, still correct).
        cands = [H]
    per_row = 2 * C * W * itemsize            # one H row across a depth pair
    fitting = [t for t in cands if t * per_row <= slab_budget]
    Th = max(fitting) if fitting else min(cands)
    Rh = Th // 2

    Td = 1
    for t in range(1, Dh + 1):
        if Dh % t == 0 and t * Rh <= unroll_cap and t * Th * per_row <= slab_budget:
            Td = t
    return Td, Th


def down_sample(x, w):
    """DownSample forward: MaxPool3d(2, 2) followed by a bias-free 1x1x1 Conv3d.

    x: (N, C, D, H, W)  (NCDHW, as in PyTorch)
    w: (C, C) conv weight (squeezed from PyTorch's (C, C, 1, 1, 1))
    returns: (N, C, D//2, H//2, W//2)
    """
    N, C, D, H, W = x.shape
    assert w.shape == (C, C)
    # TODO(synk): odd spatial sizes (PyTorch floor-pools and drops the last plane)
    # are not handled; UNet stages use even sizes.
    assert D % 2 == 0 and H % 2 == 0 and W % 2 == 0, "even D/H/W required"
    Dh, Hh, Wh = D // 2, H // 2, W // 2

    itemsize = jnp.dtype(x.dtype).itemsize
    Td, Th = _pick_tiles(Dh, H, C, W, itemsize)
    Rh = Th // 2

    grid = (N, Dh // Td, Hh // Rh)

    # Explicit VMEM budget: double-buffered x / out slabs + resident weight + headroom.
    x_block = 2 * Td * C * Th * W * itemsize
    o_block = Td * C * Rh * Wh * itemsize
    w_bytes = C * C * jnp.dtype(w.dtype).itemsize
    vmem_need = 2 * x_block + 2 * o_block + 2 * w_bytes + (2 << 20)
    vmem_limit = int(min(48 * 2**20, max(vmem_need, 16 * 2**20)))

    out_elems = N * C * Dh * Hh * Wh
    n_rows = N * Dh * Hh                          # output row strips
    cost = pl.CostEstimate(
        flops=2 * C * out_elems                   # 1x1x1 conv
        + 4 * C * W * Wh * n_rows,                # lane-compaction matmuls
        transcendentals=0,
        bytes_accessed=x.size * itemsize + out_elems * itemsize + w_bytes,
    )

    return pl.pallas_call(
        _downsample_kernel,
        out_shape=jax.ShapeDtypeStruct((N, C, Dh, Hh, Wh), x.dtype),
        grid_spec=pltpu.PrefetchScalarGridSpec(
            num_scalar_prefetch=0,
            grid=grid,
            in_specs=[
                pl.BlockSpec((C, C), lambda n, d, h: (0, 0)),           # weight, resident
                pl.BlockSpec((None, C, 2 * Td, Th, W),
                             lambda n, d, h: (n, 0, d, h, 0)),          # x slab
            ],
            out_specs=pl.BlockSpec((None, C, Td, Rh, Wh),
                                   lambda n, d, h: (n, 0, d, h, 0)),
        ),
        compiler_params=pltpu.CompilerParams(
            dimension_semantics=("parallel", "parallel", "parallel"),
            vmem_limit_bytes=vmem_limit,
        ),
        cost_estimate=cost,
    )(w, x)


if __name__ == "__main__":
    key = jax.random.PRNGKey(0)
    k_x, k_w = jax.random.split(key)

    N, C, D, H, W = 2, 4, 8, 16, 16
    x = jax.random.normal(k_x, (N, C, D, H, W), dtype=jnp.float32)

    # Conv3d(C, C, 1, bias=False) default init: U(-1/sqrt(fan_in), 1/sqrt(fan_in)), fan_in = C.
    bound = 1.0 / math.sqrt(C)
    w = jax.random.uniform(k_w, (C, C), minval=-bound, maxval=bound, dtype=jnp.float32)

    out = jax.block_until_ready(down_sample(x, w))

    # Pure-JAX reference of the same forward pass.
    pooled = x.reshape(N, C, D // 2, 2, H // 2, 2, W // 2, 2).max(axis=(3, 5, 7))
    ref = jnp.einsum("oc,ncdhw->nodhw", w, pooled)

    assert out.shape == (N, C, D // 2, H // 2, W // 2)
    assert jnp.allclose(out, ref, atol=1e-4, rtol=1e-4), float(jnp.max(jnp.abs(out - ref)))

    print("KERNEL_OK")
</pallas_src>

<mosaic_0001>
module attributes {stable_mosaic.version = 11 : i64} {
  func.func @_downsample_kernel(%arg0: i32, %arg1: i32, %arg2: i32, %arg3: memref<4x4xf32, #tpu.memory_space<vmem>>, %arg4: memref<1x4x8x16x16xf32, #tpu.memory_space<vmem>>, %arg5: memref<1x4x4x8x8xf32, #tpu.memory_space<vmem>>) attributes {dimension_semantics = [#tpu.dimension_semantics<parallel>, #tpu.dimension_semantics<parallel>, #tpu.dimension_semantics<parallel>], iteration_bounds = array<i64: 2, 1, 1>, scalar_prefetch = 0 : i64, scratch_operands = 0 : i64, tpu.core_type = #tpu.core_type<tc>, window_params = [{pipeline_mode = #tpu.pipeline_mode<synchronous>, transform_indices = @transform_0, window_bounds = array<i64: 4, 4>}, {transform_indices = @transform_1, window_bounds = array<i64: 1, 4, 8, 16, 16>}, {transform_indices = @transform_2, window_bounds = array<i64: 1, 4, 4, 8, 8>}]} {
    %0 = tpu.iota {dimensions = array<i32: 0>} : vector<16x8xi32>
    %1 = tpu.iota {dimensions = array<i32: 1>} : vector<16x8xi32>
    %c2_i32 = arith.constant 2 : i32
    %2 = vector.broadcast %c2_i32 : i32 to vector<16x8xi32>
    %3 = arith.muli %2, %1 : vector<16x8xi32>
    %4 = arith.cmpi eq, %0, %3 : vector<16x8xi32>
    %5 = arith.extui %4 : vector<16x8xi1> to vector<16x8xi32>
    %6 = arith.sitofp %5 : vector<16x8xi32> to vector<16x8xf32>
    %c2_i32_0 = arith.constant 2 : i32
    %7 = vector.broadcast %c2_i32_0 : i32 to vector<16x8xi32>
    %8 = arith.muli %7, %1 : vector<16x8xi32>
    %c1_i32 = arith.constant 1 : i32
    %9 = vector.broadcast %c1_i32 : i32 to vector<16x8xi32>
    %10 = arith.addi %8, %9 : vector<16x8xi32>
    %11 = arith.cmpi eq, %0, %10 : vector<16x8xi32>
    %12 = arith.extui %11 : vector<16x8xi1> to vector<16x8xi32>
    %13 = arith.sitofp %12 : vector<16x8xi32> to vector<16x8xf32>
    %c0 = arith.constant 0 : index
    %c0_1 = arith.constant 0 : index
    %14 = vector.load %arg3[%c0, %c0_1] : memref<4x4xf32, #tpu.memory_space<vmem>>, vector<4x4xf32>
    %c0_2 = arith.constant 0 : index
    %c0_3 = arith.constant 0 : index
    %c0_4 = arith.constant 0 : index
    %c0_5 = arith.constant 0 : index
    %c0_6 = arith.constant 0 : index
    %15 = vector.load %arg4[%c0_2, %c0_3, %c0_4, %c0_5, %c0_6] : memref<1x4x8x16x16xf32, #tpu.memory_space<vmem>>, vector<1x4x1x1x16xf32>
    %16 = vector.shape_cast %15 : vector<1x4x1x1x16xf32> to vector<4x16xf32>
    %c0_7 = arith.constant 0 : index
    %c0_8 = arith.constant 0 : index
    %c0_9 = arith.constant 0 : index
    %c1 = arith.constant 1 : index
    %c0_10 = arith.constant 0 : index
    %17 = vector.load %arg4[%c0_7, %c0_8, %c0_9, %c1, %c0_10] : memref<1x4x8x16x16xf32, #tpu.memory_space<vmem>>, vector<1x4x1x1x16xf32>
    %18 = vector.shape_cast %17 : vector<1x4x1x1x16xf32> to vector<4x16xf32>
    %19 = arith.maximumf %16, %18 : vector<4x16xf32>
    %c0_11 = arith.constant 0 : index
    %c0_12 = arith.constant 0 : index
    %c1_13 = arith.constant 1 : index
    %c0_14 = arith.constant 0 : index
    %c0_15 = arith.constant 0 : index
    %20 = vector.load %arg4[%c0_11, %c0_12, %c1_13, %c0_14, %c0_15] : memref<1x4x8x16x16xf32, #tpu.memory_space<vmem>>, vector<1x4x1x1x16xf32>
    %21 = vector.shape_cast %20 : vector<1x4x1x1x16xf32> to vector<4x16xf32>
    %c0_16 = arith.constant 0 : index
    %c0_17 = arith.constant 0 : index
    %c1_18 = arith.constant 1 : index
    %c1_19 = arith.constant 1 : index
    %c0_20 = arith.constant 0 : index
    %22 = vector.load %arg4[%c0_16, %c0_17, %c1_18, %c1_19, %c0_20] : memref<1x4x8x16x16xf32, #tpu.memory_space<vmem>>, vector<1x4x1x1x16xf32>
    %23 = vector.shape_cast %22 : vector<1x4x1x1x16xf32> to vector<4x16xf32>
    %24 = arith.maximumf %21, %23 : vector<4x16xf32>
    %25 = arith.maximumf %19, %24 : vector<4x16xf32>
    %cst = arith.constant dense<0.000000e+00> : vector<4x8xf32>
    %26 = tpu.matmul %25, %6, %cst {dimension_numbers = #tpu.dot_dimension_numbers<[1], [0], [0], [1], [0, 0, 1, 1], [], []>} : vector<4x16xf32>, vector<16x8xf32>, vector<4x8xf32> -> vector<4x8xf32>
    %cst_21 = arith.constant dense<0.000000e+00> : vector<4x8xf32>
    %27 = tpu.matmul %25, %13, %cst_21 {dimension_numbers = #tpu.dot_dimension_numbers<[1], [0], [0], [1], [0, 0, 1, 1], [], []>} : vector<4x16xf32>, vector<16x8xf32>, vector<4x8xf32> -> vector<4x8xf32>
    %28 = arith.maximumf %26, %27 : vector<4x8xf32>
    %cst_22 = arith.constant dense<0.000000e+00> : vector<4x8xf32>
    %29 = tpu.matmul %14, %28, %cst_22 {dimension_numbers = #tpu.dot_dimension_numbers<[1], [0], [0], [1], [0, 0, 1, 1], [], []>} : vector<4x4xf32>, vector<4x8xf32>, vector<4x8xf32> -> vector<4x8xf32>
    %c0_23 = arith.constant 0 : index
    %c0_24 = arith.constant 0 : index
    %c0_25 = arith.constant 0 : index
    %c0_26 = arith.constant 0 : index
    %c0_27 = arith.constant 0 : index
    %30 = vector.load %arg5[%c0_23, %c0_24, %c0_25, %c0_26, %c0_27] : memref<1x4x4x8x8xf32, #tpu.memory_space<vmem>>, vector<1x4x1x1x8xf32>
    %31 = vector.shape_cast %30 : vector<1x4x1x1x8xf32> to vector<4x8xf32>
    %32 = vector.shape_cast %29 : vector<4x8xf32> to vector<1x4x1x1x8xf32>
    tpu.vector_store %arg5[%c0_23, %c0_24, %c0_25, %c0_26, %c0_27], %32 {strides = array<i32>} : memref<1x4x4x8x8xf32, #tpu.memory_space<vmem>>, vector<1x4x1x1x8xf32>,
    %c0_28 = arith.constant 0 : index
    %c0_29 = arith.constant 0 : index
    %c0_30 = arith.constant 0 : index
    %c2 = arith.constant 2 : index
    %c0_31 = arith.constant 0 : index
    %33 = vector.load %arg4[%c0_28, %c0_29, %c0_30, %c2, %c0_31] : memref<1x4x8x16x16xf32, #tpu.memory_space<vmem>>, vector<1x4x1x1x16xf32>
    %34 = vector.shape_cast %33 : vector<1x4x1x1x16xf32> to vector<4x16xf32>
    %c0_32 = arith.constant 0 : index
    %c0_33 = arith.constant 0 : index
    %c0_34 = arith.constant 0 : index
    %c3 = arith.constant 3 : index
    %c0_35 = arith.constant 0 : index
    %35 = vector.load %arg4[%c0_32, %c0_33, %c0_34, %c3, %c0_35] : memref<1x4x8x16x16xf32, #tpu.memory_space<vmem>>, vector<1x4x1x1x16xf32>
    %36 = vector.shape_cast %35 : vector<1x4x1x1x16xf32> to vector<4x16xf32>
    %37 = arith.maximumf %34, %36 : vector<4x16xf32>
    %c0_36 = arith.constant 0 : index
    %c0_37 = arith.constant 0 : index
    %c1_38 = arith.constant 1 : index
    %c2_39 = arith.constant 2 : index
    %c0_40 = arith.constant 0 : index
    %38 = vector.load %arg4[%c0_36, %c0_37, %c1_38, %c2_39, %c0_40] : memref<1x4x8x16x16xf32, #tpu.memory_space<vmem>>, vector<1x4x1x1x16xf32>
    %39 = vector.shape_cast %38 : vector<1x4x1x1x16xf32> to vector<4x16xf32>
    %c0_41 = arith.constant 0 : index
    %c0_42 = arith.constant 0 : index
    %c1_43 = arith.constant 1 : index
    %c3_44 = arith.constant 3 : index
    %c0_45 = arith.constant 0 : index
    %40 = vector.load %arg4[%c0_41, %c0_42, %c1_43, %c3_44, %c0_45] : memref<1x4x8x16x16xf32, #tpu.memory_space<vmem>>, vector<1x4x1x1x16xf32>
    %41 = vector.shape_cast %40 : vector<1x4x1x1x16xf32> to vector<4x16xf32>
    %42 = arith.maximumf %39, %41 : vector<4x16xf32>
    %43 = arith.maximumf %37, %42 : vector<4x16xf32>
    %cst_46 = arith.constant dense<0.000000e+00> : vector<4x8xf32>
    %44 = tpu.matmul %43, %6, %cst_46 {dimension_numbers = #tpu.dot_dimension_numbers<[1], [0], [0], [1], [0, 0, 1, 1], [], []>} : vector<4x16xf32>, vector<16x8xf32>, vector<4x8xf32> -> vector<4x8xf32>
    %cst_47 = arith.constant dense<0.000000e+00> : vector<4x8xf32>
    %45 = tpu.matmul %43, %13, %cst_47 {dimension_numbers = #tpu.dot_dimension_numbers<[1], [0], [0], [1], [0, 0, 1, 1], [], []>} : vector<4x16xf32>, vector<16x8xf32>, vector<4x8xf32> -> vector<4x8xf32>
    %46 = arith.maximumf %44, %45 : vector<4x8xf32>
    %cst_48 = arith.constant dense<0.000000e+00> : vector<4x8xf32>
    %47 = tpu.matmul %14, %46, %cst_48 {dimension_numbers = #tpu.dot_dimension_numbers<[1], [0], [0], [1], [0, 0, 1, 1], [], []>} : vector<4x4xf32>, vector<4x8xf32>, vector<4x8xf32> -> vector<4x8xf32>
    %c0_49 = arith.constant 0 : index
    %c0_50 = arith.constant 0 : index
    %c0_51 = arith.constant 0 : index
    %c1_52 = arith.constant 1 : index
    %c0_53 = arith.constant 0 : index
    %48 = vector.load %arg5[%c0_49, %c0_50, %c0_51, %c1_52, %c0_53] : memref<1x4x4x8x8xf32, #tpu.memory_space<vmem>>, vector<1x4x1x1x8xf32>
    %49 = vector.shape_cast %48 : vector<1x4x1x1x8xf32> to vector<4x8xf32>
    %50 = vector.shape_cast %47 : vector<4x8xf32> to vector<1x4x1x1x8xf32>
    tpu.vector_store %arg5[%c0_49, %c0_50, %c0_51, %c1_52, %c0_53], %50 {strides = array<i32>} : memref<1x4x4x8x8xf32, #tpu.memory_space<vmem>>, vector<1x4x1x1x8xf32>,
    %c0_54 = arith.constant 0 : index
    %c0_55 = arith.constant 0 : index
    %c0_56 = arith.constant 0 : index
    %c4 = arith.constant 4 : index
    %c0_57 = arith.constant 0 : index
    %51 = vector.load %arg4[%c0_54, %c0_55, %c0_56, %c4, %c0_57] : memref<1x4x8x16x16xf32, #tpu.memory_space<vmem>>, vector<1x4x1x1x16xf32>
    %52 = vector.shape_cast %51 : vector<1x4x1x1x16xf32> to vector<4x16xf32>
    %c0_58 = arith.constant 0 : index
    %c0_59 = arith.constant 0 : index
    %c0_60 = arith.constant 0 : index
    %c5 = arith.constant 5 : index
    %c0_61 = arith.constant 0 : index
    %53 = vector.load %arg4[%c0_58, %c0_59, %c0_60, %c5, %c0_61] : memref<1x4x8x16x16xf32, #tpu.memory_space<vmem>>, vector<1x4x1x1x16xf32>
    %54 = vector.shape_cast %53 : vector<1x4x1x1x16xf32> to vector<4x16xf32>
    %55 = arith.maximumf %52, %54 : vector<4x16xf32>
    %c0_62 = arith.constant 0 : index
    %c0_63 = arith.constant 0 : index
    %c1_64 = arith.constant 1 : index
    %c4_65 = arith.constant 4 : index
    %c0_66 = arith.constant 0 : index
    %56 = vector.load %arg4[%c0_62, %c0_63, %c1_64, %c4_65, %c0_66] : memref<1x4x8x16x16xf32, #tpu.memory_space<vmem>>, vector<1x4x1x1x16xf32>
    %57 = vector.shape_cast %56 : vector<1x4x1x1x16xf32> to vector<4x16xf32>
    %c0_67 = arith.constant 0 : index
    %c0_68 = arith.constant 0 : index
    %c1_69 = arith.constant 1 : index
    %c5_70 = arith.constant 5 : index
    %c0_71 = arith.constant 0 : index
    %58 = vector.load %arg4[%c0_67, %c0_68, %c1_69, %c5_70, %c0_71] : memref<1x4x8x16x16xf32, #tpu.memory_space<vmem>>, vector<1x4x1x1x16xf32>
    %59 = vector.shape_cast %58 : vector<1x4x1x1x16xf32> to vector<4x16xf32>
    %60 = arith.maximumf %57, %59 : vector<4x16xf32>
    %61 = arith.maximumf %55, %60 : vector<4x16xf32>
    %cst_72 = arith.constant dense<0.000000e+00> : vector<4x8xf32>
    %62 = tpu.matmul %61, %6, %cst_72 {dimension_numbers = #tpu.dot_dimension_numbers<[1], [0], [0], [1], [0, 0, 1, 1], [], []>} : vector<4x16xf32>, vector<16x8xf32>, vector<4x8xf32> -> vector<4x8xf32>
    %cst_73 = arith.constant dense<0.000000e+00> : vector<4x8xf32>
    %63 = tpu.matmul %61, %13, %cst_73 {dimension_numbers = #tpu.dot_dimension_numbers<[1], [0], [0], [1], [0, 0, 1, 1], [], []>} : vector<4x16xf32>, vector<16x8xf32>, vector<4x8xf32> -> vector<4x8xf32>
    %64 = arith.maximumf %62, %63 : vector<4x8xf32>
    %cst_74 = arith.constant dense<0.000000e+00> : vector<4x8xf32>
    %65 = tpu.matmul %14, %64, %cst_74 {dimension_numbers = #tpu.dot_dimension_numbers<[1], [0], [0], [1], [0, 0, 1, 1], [], []>} : vector<4x4xf32>, vector<4x8xf32>, vector<4x8xf32> -> vector<4x8xf32>
    %c0_75 = arith.constant 0 : index
    %c0_76 = arith.constant 0 : index
    %c0_77 = arith.constant 0 : index
    %c2_78 = arith.constant 2 : index
    %c0_79 = arith.constant 0 : index
    %66 = vector.load %arg5[%c0_75, %c0_76, %c0_77, %c2_78, %c0_79] : memref<1x4x4x8x8xf32, #tpu.memory_space<vmem>>, vector<1x4x1x1x8xf32>
    %67 = vector.shape_cast %66 : vector<1x4x1x1x8xf32> to vector<4x8xf32>
    %68 = vector.shape_cast %65 : vector<4x8xf32> to vector<1x4x1x1x8xf32>
    tpu.vector_store %arg5[%c0_75, %c0_76, %c0_77, %c2_78, %c0_79], %68 {strides = array<i32>} : memref<1x4x4x8x8xf32, #tpu.memory_space<vmem>>, vector<1x4x1x1x8xf32>,
    %c0_80 = arith.constant 0 : index
    %c0_81 = arith.constant 0 : index
    %c0_82 = arith.constant 0 : index
    %c6 = arith.constant 6 : index
    %c0_83 = arith.constant 0 : index
    %69 = vector.load %arg4[%c0_80, %c0_81, %c0_82, %c6, %c0_83] : memref<1x4x8x16x16xf32, #tpu.memory_space<vmem>>, vector<1x4x1x1x16xf32>
    %70 = vector.shape_cast %69 : vector<1x4x1x1x16xf32> to vector<4x16xf32>
    %c0_84 = arith.constant 0 : index
    %c0_85 = arith.constant 0 : index
    %c0_86 = arith.constant 0 : index
    %c7 = arith.constant 7 : index
    %c0_87 = arith.constant 0 : index
    %71 = vector.load %arg4[%c0_84, %c0_85, %c0_86, %c7, %c0_87] : memref<1x4x8x16x16xf32, #tpu.memory_space<vmem>>, vector<1x4x1x1x16xf32>
    %72 = vector.shape_cast %71 : vector<1x4x1x1x16xf32> to vector<4x16xf32>
    %73 = arith.maximumf %70, %72 : vector<4x16xf32>
    %c0_88 = arith.constant 0 : index
    %c0_89 = arith.constant 0 : index
    %c1_90 = arith.constant 1 : index
    %c6_91 = arith.constant 6 : index
    %c0_92 = arith.constant 0 : index
    %74 = vector.load %arg4[%c0_88, %c0_89, %c1_90, %c6_91, %c0_92] : memref<1x4x8x16x16xf32, #tpu.memory_space<vmem>>, vector<1x4x1x1x16xf32>
    %75 = vector.shape_cast %74 : vector<1x4x1x1x16xf32> to vector<4x16xf32>
    %c0_93 = arith.constant 0 : index
    %c0_94 = arith.constant 0 : index
    %c1_95 = arith.constant 1 : index
    %c7_96 = arith.constant 7 : index
    %c0_97 = arith.constant 0 : index
    %76 = vector.load %arg4[%c0_93, %c0_94, %c1_95, %c7_96, %c0_97] : memref<1x4x8x16x16xf32, #tpu.memory_space<vmem>>, vector<1x4x1x1x16xf32>
    %77 = vector.shape_cast %76 : vector<1x4x1x1x16xf32> to vector<4x16xf32>
    %78 = arith.maximumf %75, %77 : vector<4x16xf32>
    %79 = arith.maximumf %73, %78 : vector<4x16xf32>
    %cst_98 = arith.constant dense<0.000000e+00> : vector<4x8xf32>
    %80 = tpu.matmul %79, %6, %cst_98 {dimension_numbers = #tpu.dot_dimension_numbers<[1], [0], [0], [1], [0, 0, 1, 1], [], []>} : vector<4x16xf32>, vector<16x8xf32>, vector<4x8xf32> -> vector<4x8xf32>
    %cst_99 = arith.constant dense<0.000000e+00> : vector<4x8xf32>
    %81 = tpu.matmul %79, %13, %cst_99 {dimension_numbers = #tpu.dot_dimension_numbers<[1], [0], [0], [1], [0, 0, 1, 1], [], []>} : vector<4x16xf32>, vector<16x8xf32>, vector<4x8xf32> -> vector<4x8xf32>
    %82 = arith.maximumf %80, %81 : vector<4x8xf32>
    %cst_100 = arith.constant dense<0.000000e+00> : vector<4x8xf32>
    %83 = tpu.matmul %14, %82, %cst_100 {dimension_numbers = #tpu.dot_dimension_numbers<[1], [0], [0], [1], [0, 0, 1, 1], [], []>} : vector<4x4xf32>, vector<4x8xf32>, vector<4x8xf32> -> vector<4x8xf32>
    %c0_101 = arith.constant 0 : index
    %c0_102 = arith.constant 0 : index
    %c0_103 = arith.constant 0 : index
    %c3_104 = arith.constant 3 : index
    %c0_105 = arith.constant 0 : index
    %84 = vector.load %arg5[%c0_101, %c0_102, %c0_103, %c3_104, %c0_105] : memref<1x4x4x8x8xf32, #tpu.memory_space<vmem>>, vector<1x4x1x1x8xf32>
    %85 = vector.shape_cast %84 : vector<1x4x1x1x8xf32> to vector<4x8xf32>
    %86 = vector.shape_cast %83 : vector<4x8xf32> to vector<1x4x1x1x8xf32>
    tpu.vector_store %arg5[%c0_101, %c0_102, %c0_103, %c3_104, %c0_105], %86 {strides = array<i32>} : memref<1x4x4x8x8xf32, #tpu.memory_space<vmem>>, vector<1x4x1x1x8xf32>,
    %c0_106 = arith.constant 0 : index
    %c0_107 = arith.constant 0 : index
    %c0_108 = arith.constant 0 : index
    %c8 = arith.constant 8 : index
    %c0_109 = arith.constant 0 : index
    %87 = vector.load %arg4[%c0_106, %c0_107, %c0_108, %c8, %c0_109] : memref<1x4x8x16x16xf32, #tpu.memory_space<vmem>>, vector<1x4x1x1x16xf32>
    %88 = vector.shape_cast %87 : vector<1x4x1x1x16xf32> to vector<4x16xf32>
    %c0_110 = arith.constant 0 : index
    %c0_111 = arith.constant 0 : index
    %c0_112 = arith.constant 0 : index
    %c9 = arith.constant 9 : index
    %c0_113 = arith.constant 0 : index
    %89 = vector.load %arg4[%c0_110, %c0_111, %c0_112, %c9, %c0_113] : memref<1x4x8x16x16xf32, #tpu.memory_space<vmem>>, vector<1x4x1x1x16xf32>
    %90 = vector.shape_cast %89 : vector<1x4x1x1x16xf32> to vector<4x16xf32>
    %91 = arith.maximumf %88, %90 : vector<4x16xf32>
    %c0_114 = arith.constant 0 : index
    %c0_115 = arith.constant 0 : index
    %c1_116 = arith.constant 1 : index
    %c8_117 = arith.constant 8 : index
    %c0_118 = arith.constant 0 : index
    %92 = vector.load %arg4[%c0_114, %c0_115, %c1_116, %c8_117, %c0_118] : memref<1x4x8x16x16xf32, #tpu.memory_space<vmem>>, vector<1x4x1x1x16xf32>
    %93 = vector.shape_cast %92 : vector<1x4x1x1x16xf32> to vector<4x16xf32>
    %c0_119 = arith.constant 0 : index
    %c0_120 = arith.constant 0 : index
    %c1_121 = arith.constant 1 : index
    %c9_122 = arith.constant 9 : index
    %c0_123 = arith.constant 0 : index
    %94 = vector.load %arg4[%c0_119, %c0_120, %c1_121, %c9_122, %c0_123] : memref<1x4x8x16x16xf32, #tpu.memory_space<vmem>>, vector<1x4x1x1x16xf32>
    %95 = vector.shape_cast %94 : vector<1x4x1x1x16xf32> to vector<4x16xf32>
    %96 = arith.maximumf %93, %95 : vector<4x16xf32>
    %97 = arith.maximumf %91, %96 : vector<4x16xf32>
    %cst_124 = arith.constant dense<0.000000e+00> : vector<4x8xf32>
    %98 = tpu.matmul %97, %6, %cst_124 {dimension_numbers = #tpu.dot_dimension_numbers<[1], [0], [0], [1], [0, 0, 1, 1], [], []>} : vector<4x16xf32>, vector<16x8xf32>, vector<4x8xf32> -> vector<4x8xf32>
    %cst_125 = arith.constant dense<0.000000e+00> : vector<4x8xf32>
    %99 = tpu.matmul %97, %13, %cst_125 {dimension_numbers = #tpu.dot_dimension_numbers<[1], [0], [0], [1], [0, 0, 1, 1], [], []>} : vector<4x16xf32>, vector<16x8xf32>, vector<4x8xf32> -> vector<4x8xf32>
    %100 = arith.maximumf %98, %99 : vector<4x8xf32>
    %cst_126 = arith.constant dense<0.000000e+00> : vector<4x8xf32>
    %101 = tpu.matmul %14, %100, %cst_126 {dimension_numbers = #tpu.dot_dimension_numbers<[1], [0], [0], [1], [0, 0, 1, 1], [], []>} : vector<4x4xf32>, vector<4x8xf32>, vector<4x8xf32> -> vector<4x8xf32>
    %c0_127 = arith.constant 0 : index
    %c0_128 = arith.constant 0 : index
    %c0_129 = arith.constant 0 : index
    %c4_130 = arith.constant 4 : index
    %c0_131 = arith.constant 0 : index
    %102 = vector.load %arg5[%c0_127, %c0_128, %c0_129, %c4_130, %c0_131] : memref<1x4x4x8x8xf32, #tpu.memory_space<vmem>>, vector<1x4x1x1x8xf32>
    %103 = vector.shape_cast %102 : vector<1x4x1x1x8xf32> to vector<4x8xf32>
    %104 = vector.shape_cast %101 : vector<4x8xf32> to vector<1x4x1x1x8xf32>
    tpu.vector_store %arg5[%c0_127, %c0_128, %c0_129, %c4_130, %c0_131], %104 {strides = array<i32>} : memref<1x4x4x8x8xf32, #tpu.memory_space<vmem>>, vector<1x4x1x1x8xf32>,
    %c0_132 = arith.constant 0 : index
    %c0_133 = arith.constant 0 : index
    %c0_134 = arith.constant 0 : index
    %c10 = arith.constant 10 : index
    %c0_135 = arith.constant 0 : index
    %105 = vector.load %arg4[%c0_132, %c0_133, %c0_134, %c10, %c0_135] : memref<1x4x8x16x16xf32, #tpu.memory_space<vmem>>, vector<1x4x1x1x16xf32>
    %106 = vector.shape_cast %105 : vector<1x4x1x1x16xf32> to vector<4x16xf32>
    %c0_136 = arith.constant 0 : index
    %c0_137 = arith.constant 0 : index
    %c0_138 = arith.constant 0 : index
    %c11 = arith.constant 11 : index
    %c0_139 = arith.constant 0 : index
    %107 = vector.load %arg4[%c0_136, %c0_137, %c0_138, %c11, %c0_139] : memref<1x4x8x16x16xf32, #tpu.memory_space<vmem>>, vector<1x4x1x1x16xf32>
    %108 = vector.shape_cast %107 : vector<1x4x1x1x16xf32> to vector<4x16xf32>
    %109 = arith.maximumf %106, %108 : vector<4x16xf32>
    %c0_140 = arith.constant 0 : index
    %c0_141 = arith.constant 0 : index
    %c1_142 = arith.constant 1 : index
    %c10_143 = arith.constant 10 : index
    %c0_144 = arith.constant 0 : index
    %110 = vector.load %arg4[%c0_140, %c0_141, %c1_142, %c10_143, %c0_144] : memref<1x4x8x16x16xf32, #tpu.memory_space<vmem>>, vector<1x4x1x1x16xf32>
    %111 = vector.shape_cast %110 : vector<1x4x1x1x16xf32> to vector<4x16xf32>
    %c0_145 = arith.constant 0 : index
    %c0_146 = arith.constant 0 : index
    %c1_147 = arith.constant 1 : index
    %c11_148 = arith.constant 11 : index
    %c0_149 = arith.constant 0 : index
    %112 = vector.load %arg4[%c0_145, %c0_146, %c1_147, %c11_148, %c0_149] : memref<1x4x8x16x16xf32, #tpu.memory_space<vmem>>, vector<1x4x1x1x16xf32>
    %113 = vector.shape_cast %112 : vector<1x4x1x1x16xf32> to vector<4x16xf32>
    %114 = arith.maximumf %111, %113 : vector<4x16xf32>
    %115 = arith.maximumf %109, %114 : vector<4x16xf32>
    %cst_150 = arith.constant dense<0.000000e+00> : vector<4x8xf32>
    %116 = tpu.matmul %115, %6, %cst_150 {dimension_numbers = #tpu.dot_dimension_numbers<[1], [0], [0], [1], [0, 0, 1, 1], [], []>} : vector<4x16xf32>, vector<16x8xf32>, vector<4x8xf32> -> vector<4x8xf32>
    %cst_151 = arith.constant dense<0.000000e+00> : vector<4x8xf32>
    %117 = tpu.matmul %115, %13, %cst_151 {dimension_numbers = #tpu.dot_dimension_numbers<[1], [0], [0], [1], [0, 0, 1, 1], [], []>} : vector<4x16xf32>, vector<16x8xf32>, vector<4x8xf32> -> vector<4x8xf32>
    %118 = arith.maximumf %116, %117 : vector<4x8xf32>
    %cst_152 = arith.constant dense<0.000000e+00> : vector<4x8xf32>
    %119 = tpu.matmul %14, %118, %cst_152 {dimension_numbers = #tpu.dot_dimension_numbers<[1], [0], [0], [1], [0, 0, 1, 1], [], []>} : vector<4x4xf32>, vector<4x8xf32>, vector<4x8xf32> -> vector<4x8xf32>
    %c0_153 = arith.constant 0 : index
    %c0_154 = arith.constant 0 : index
    %c0_155 = arith.constant 0 : index
    %c5_156 = arith.constant 5 : index
    %c0_157 = arith.constant 0 : index
    %120 = vector.load %arg5[%c0_153, %c0_154, %c0_155, %c5_156, %c0_157] : memref<1x4x4x8x8xf32, #tpu.memory_space<vmem>>, vector<1x4x1x1x8xf32>
    %121 = vector.shape_cast %120 : vector<1x4x1x1x8xf32> to vector<4x8xf32>
    %122 = vector.shape_cast %119 : vector<4x8xf32> to vector<1x4x1x1x8xf32>
    tpu.vector_store %arg5[%c0_153, %c0_154, %c0_155, %c5_156, %c0_157], %122 {strides = array<i32>} : memref<1x4x4x8x8xf32, #tpu.memory_space<vmem>>, vector<1x4x1x1x8xf32>,
    %c0_158 = arith.constant 0 : index
    %c0_159 = arith.constant 0 : index
    %c0_160 = arith.constant 0 : index
    %c12 = arith.constant 12 : index
    %c0_161 = arith.constant 0 : index
    %123 = vector.load %arg4[%c0_158, %c0_159, %c0_160, %c12, %c0_161] : memref<1x4x8x16x16xf32, #tpu.memory_space<vmem>>, vector<1x4x1x1x16xf32>
    %124 = vector.shape_cast %123 : vector<1x4x1x1x16xf32> to vector<4x16xf32>
    %c0_162 = arith.constant 0 : index
    %c0_163 = arith.constant 0 : index
    %c0_164 = arith.constant 0 : index
    %c13 = arith.constant 13 : index
    %c0_165 = arith.constant 0 : index
    %125 = vector.load %arg4[%c0_162, %c0_163, %c0_164, %c13, %c0_165] : memref<1x4x8x16x16xf32, #tpu.memory_space<vmem>>, vector<1x4x1x1x16xf32>
    %126 = vector.shape_cast %125 : vector<1x4x1x1x16xf32> to vector<4x16xf32>
    %127 = arith.maximumf %124, %126 : vector<4x16xf32>
    %c0_166 = arith.constant 0 : index
    %c0_167 = arith.constant 0 : index
    %c1_168 = arith.constant 1 : index
    %c12_169 = arith.constant 12 : index
    %c0_170 = arith.constant 0 : index
    %128 = vector.load %arg4[%c0_166, %c0_167, %c1_168, %c12_169, %c0_170] : memref<1x4x8x16x16xf32, #tpu.memory_space<vmem>>, vector<1x4x1x1x16xf32>
    %129 = vector.shape_cast %128 : vector<1x4x1x1x16xf32> to vector<4x16xf32>
    %c0_171 = arith.constant 0 : index
    %c0_172 = arith.constant 0 : index
    %c1_173 = arith.constant 1 : index
    %c13_174 = arith.constant 13 : index
    %c0_175 = arith.constant 0 : index
    %130 = vector.load %arg4[%c0_171, %c0_172, %c1_173, %c13_174, %c0_175] : memref<1x4x8x16x16xf32, #tpu.memory_space<vmem>>, vector<1x4x1x1x16xf32>
    %131 = vector.shape_cast %130 : vector<1x4x1x1x16xf32> to vector<4x16xf32>
    %132 = arith.maximumf %129, %131 : vector<4x16xf32>
    %133 = arith.maximumf %127, %132 : vector<4x16xf32>
    %cst_176 = arith.constant dense<0.000000e+00> : vector<4x8xf32>
    %134 = tpu.matmul %133, %6, %cst_176 {dimension_numbers = #tpu.dot_dimension_numbers<[1], [0], [0], [1], [0, 0, 1, 1], [], []>} : vector<4x16xf32>, vector<16x8xf32>, vector<4x8xf32> -> vector<4x8xf32>
    %cst_177 = arith.constant dense<0.000000e+00> : vector<4x8xf32>
    %135 = tpu.matmul %133, %13, %cst_177 {dimension_numbers = #tpu.dot_dimension_numbers<[1], [0], [0], [1], [0, 0, 1, 1], [], []>} : vector<4x16xf32>, vector<16x8xf32>, vector<4x8xf32> -> vector<4x8xf32>
    %136 = arith.maximumf %134, %135 : vector<4x8xf32>
    %cst_178 = arith.constant dense<0.000000e+00> : vector<4x8xf32>
    %137 = tpu.matmul %14, %136, %cst_178 {dimension_numbers = #tpu.dot_dimension_numbers<[1], [0], [0], [1], [0, 0, 1, 1], [], []>} : vector<4x4xf32>, vector<4x8xf32>, vector<4x8xf32> -> vector<4x8xf32>
    %c0_179 = arith.constant 0 : index
    %c0_180 = arith.constant 0 : index
    %c0_181 = arith.constant 0 : index
    %c6_182 = arith.constant 6 : index
    %c0_183 = arith.constant 0 : index
    %138 = vector.load %arg5[%c0_179, %c0_180, %c0_181, %c6_182, %c0_183] : memref<1x4x4x8x8xf32, #tpu.memory_space<vmem>>, vector<1x4x1x1x8xf32>
    %139 = vector.shape_cast %138 : vector<1x4x1x1x8xf32> to vector<4x8xf32>
    %140 = vector.shape_cast %137 : vector<4x8xf32> to vector<1x4x1x1x8xf32>
    tpu.vector_store %arg5[%c0_179, %c0_180, %c0_181, %c6_182, %c0_183], %140 {strides = array<i32>} : memref<1x4x4x8x8xf32, #tpu.memory_space<vmem>>, vector<1x4x1x1x8xf32>,
    %c0_184 = arith.constant 0 : index
    %c0_185 = arith.constant 0 : index
    %c0_186 = arith.constant 0 : index
    %c14 = arith.constant 14 : index
    %c0_187 = arith.constant 0 : index
    %141 = vector.load %arg4[%c0_184, %c0_185, %c0_186, %c14, %c0_187] : memref<1x4x8x16x16xf32, #tpu.memory_space<vmem>>, vector<1x4x1x1x16xf32>
    %142 = vector.shape_cast %141 : vector<1x4x1x1x16xf32> to vector<4x16xf32>
    %c0_188 = arith.constant 0 : index
    %c0_189 = arith.constant 0 : index
    %c0_190 = arith.constant 0 : index
    %c15 = arith.constant 15 : index
    %c0_191 = arith.constant 0 : index
    %143 = vector.load %arg4[%c0_188, %c0_189, %c0_190, %c15, %c0_191] : memref<1x4x8x16x16xf32, #tpu.memory_space<vmem>>, vector<1x4x1x1x16xf32>
    %144 = vector.shape_cast %143 : vector<1x4x1x1x16xf32> to vector<4x16xf32>
    %145 = arith.maximumf %142, %144 : vector<4x16xf32>
    %c0_192 = arith.constant 0 : index
    %c0_193 = arith.constant 0 : index
    %c1_194 = arith.constant 1 : index
    %c14_195 = arith.constant 14 : index
    %c0_196 = arith.constant 0 : index
    %146 = vector.load %arg4[%c0_192, %c0_193, %c1_194, %c14_195, %c0_196] : memref<1x4x8x16x16xf32, #tpu.memory_space<vmem>>, vector<1x4x1x1x16xf32>
    %147 = vector.shape_cast %146 : vector<1x4x1x1x16xf32> to vector<4x16xf32>
    %c0_197 = arith.constant 0 : index
    %c0_198 = arith.constant 0 : index
    %c1_199 = arith.constant 1 : index
    %c15_200 = arith.constant 15 : index
    %c0_201 = arith.constant 0 : index
    %148 = vector.load %arg4[%c0_197, %c0_198, %c1_199, %c15_200, %c0_201] : memref<1x4x8x16x16xf32, #tpu.memory_space<vmem>>, vector<1x4x1x1x16xf32>
    %149 = vector.shape_cast %148 : vector<1x4x1x1x16xf32> to vector<4x16xf32>
    %150 = arith.maximumf %147, %149 : vector<4x16xf32>
    %151 = arith.maximumf %145, %150 : vector<4x16xf32>
    %cst_202 = arith.constant dense<0.000000e+00> : vector<4x8xf32>
    %152 = tpu.matmul %151, %6, %cst_202 {dimension_numbers = #tpu.dot_dimension_numbers<[1], [0], [0], [1], [0, 0, 1, 1], [], []>} : vector<4x16xf32>, vector<16x8xf32>, vector<4x8xf32> -> vector<4x8xf32>
    %cst_203 = arith.constant dense<0.000000e+00> : vector<4x8xf32>
    %153 = tpu.matmul %151, %13, %cst_203 {dimension_numbers = #tpu.dot_dimension_numbers<[1], [0], [0], [1], [0, 0, 1, 1], [], []>} : vector<4x16xf32>, vector<16x8xf32>, vector<4x8xf32> -> vector<4x8xf32>
    %154 = arith.maximumf %152, %153 : vector<4x8xf32>
    %cst_204 = arith.constant dense<0.000000e+00> : vector<4x8xf32>
    %155 = tpu.matmul %14, %154, %cst_204 {dimension_numbers = #tpu.dot_dimension_numbers<[1], [0], [0], [1], [0, 0, 1, 1], [], []>} : vector<4x4xf32>, vector<4x8xf32>, vector<4x8xf32> -> vector<4x8xf32>
    %c0_205 = arith.constant 0 : index
    %c0_206 = arith.constant 0 : index
    %c0_207 = arith.constant 0 : index
    %c7_208 = arith.constant 7 : index
    %c0_209 = arith.constant 0 : index
    %156 = vector.load %arg5[%c0_205, %c0_206, %c0_207, %c7_208, %c0_209] : memref<1x4x4x8x8xf32, #tpu.memory_space<vmem>>, vector<1x4x1x1x8xf32>
    %157 = vector.shape_cast %156 : vector<1x4x1x1x8xf32> to vector<4x8xf32>
    %158 = vector.shape_cast %155 : vector<4x8xf32> to vector<1x4x1x1x8xf32>
    tpu.vector_store %arg5[%c0_205, %c0_206, %c0_207, %c7_208, %c0_209], %158 {strides = array<i32>} : memref<1x4x4x8x8xf32, #tpu.memory_space<vmem>>, vector<1x4x1x1x8xf32>,
    %c0_210 = arith.constant 0 : index
    %c0_211 = arith.constant 0 : index
    %c2_212 = arith.constant 2 : index
    %c0_213 = arith.constant 0 : index
    %c0_214 = arith.constant 0 : index
    %159 = vector.load %arg4[%c0_210, %c0_211, %c2_212, %c0_213, %c0_214] : memref<1x4x8x16x16xf32, #tpu.memory_space<vmem>>, vector<1x4x1x1x16xf32>
    %160 = vector.shape_cast %159 : vector<1x4x1x1x16xf32> to vector<4x16xf32>
    %c0_215 = arith.constant 0 : index
    %c0_216 = arith.constant 0 : index
    %c2_217 = arith.constant 2 : index
    %c1_218 = arith.constant 1 : index
    %c0_219 = arith.constant 0 : index
    %161 = vector.load %arg4[%c0_215, %c0_216, %c2_217, %c1_218, %c0_219] : memref<1x4x8x16x16xf32, #tpu.memory_space<vmem>>, vector<1x4x1x1x16xf32>
    %162 = vector.shape_cast %161 : vector<1x4x1x1x16xf32> to vector<4x16xf32>
    %163 = arith.maximumf %160, %162 : vector<4x16xf32>
    %c0_220 = arith.constant 0 : index
    %c0_221 = arith.constant 0 : index
    %c3_222 = arith.constant 3 : index
    %c0_223 = arith.constant 0 : index
    %c0_224 = arith.constant 0 : index
    %164 = vector.load %arg4[%c0_220, %c0_221, %c3_222, %c0_223, %c0_224] : memref<1x4x8x16x16xf32, #tpu.memory_space<vmem>>, vector<1x4x1x1x16xf32>
    %165 = vector.shape_cast %164 : vector<1x4x1x1x16xf32> to vector<4x16xf32>
    %c0_225 = arith.constant 0 : index
    %c0_226 = arith.constant 0 : index
    %c3_227 = arith.constant 3 : index
    %c1_228 = arith.constant 1 : index
    %c0_229 = arith.constant 0 : index
    %166 = vector.load %arg4[%c0_225, %c0_226, %c3_227, %c1_228, %c0_229] : memref<1x4x8x16x16xf32, #tpu.memory_space<vmem>>, vector<1x4x1x1x16xf32>
    %167 = vector.shape_cast %166 : vector<1x4x1x1x16xf32> to vector<4x16xf32>
    %168 = arith.maximumf %165, %167 : vector<4x16xf32>
    %169 = arith.maximumf %163, %168 : vector<4x16xf32>
    %cst_230 = arith.constant dense<0.000000e+00> : vector<4x8xf32>
    %170 = tpu.matmul %169, %6, %cst_230 {dimension_numbers = #tpu.dot_dimension_numbers<[1], [0], [0], [1], [0, 0, 1, 1], [], []>} : vector<4x16xf32>, vector<16x8xf32>, vector<4x8xf32> -> vector<4x8xf32>
    %cst_231 = arith.constant dense<0.000000e+00> : vector<4x8xf32>
    %171 = tpu.matmul %169, %13, %cst_231 {dimension_numbers = #tpu.dot_dimension_numbers<[1], [0], [0], [1], [0, 0, 1, 1], [], []>} : vector<4x16xf32>, vector<16x8xf32>, vector<4x8xf32> -> vector<4x8xf32>
    %172 = arith.maximumf %170, %171 : vector<4x8xf32>
    %cst_232 = arith.constant dense<0.000000e+00> : vector<4x8xf32>
    %173 = tpu.matmul %14, %172, %cst_232 {dimension_numbers = #tpu.dot_dimension_numbers<[1], [0], [0], [1], [0, 0, 1, 1], [], []>} : vector<4x4xf32>, vector<4x8xf32>, vector<4x8xf32> -> vector<4x8xf32>
    %c0_233 = arith.constant 0 : index
    %c0_234 = arith.constant 0 : index
    %c1_235 = arith.constant 1 : index
    %c0_236 = arith.constant 0 : index
    %c0_237 = arith.constant 0 : index
    %174 = vector.load %arg5[%c0_233, %c0_234, %c1_235, %c0_236, %c0_237] : memref<1x4x4x8x8xf32, #tpu.memory_space<vmem>>, vector<1x4x1x1x8xf32>
    %175 = vector.shape_cast %174 : vector<1x4x1x1x8xf32> to vector<4x8xf32>
    %176 = vector.shape_cast %173 : vector<4x8xf32> to vector<1x4x1x1x8xf32>
    tpu.vector_store %arg5[%c0_233, %c0_234, %c1_235, %c0_236, %c0_237], %176 {strides = array<i32>} : memref<1x4x4x8x8xf32, #tpu.memory_space<vmem>>, vector<1x4x1x1x8xf32>,
    %c0_238 = arith.constant 0 : index
    %c0_239 = arith.constant 0 : index
    %c2_240 = arith.constant 2 : index
    %c2_241 = arith.constant 2 : index
    %c0_242 = arith.constant 0 : index
    %177 = vector.load %arg4[%c0_238, %c0_239, %c2_240, %c2_241, %c0_242] : memref<1x4x8x16x16xf32, #tpu.memory_space<vmem>>, vector<1x4x1x1x16xf32>
    %178 = vector.shape_cast %177 : vector<1x4x1x1x16xf32> to vector<4x16xf32>
    %c0_243 = arith.constant 0 : index
    %c0_244 = arith.constant 0 : index
    %c2_245 = arith.constant 2 : index
    %c3_246 = arith.constant 3 : index
    %c0_247 = arith.constant 0 : index
    %179 = vector.load %arg4[%c0_243, %c0_244, %c2_245, %c3_246, %c0_247] : memref<1x4x8x16x16xf32, #tpu.memory_space<vmem>>, vector<1x4x1x1x16xf32>
    %180 = vector.shape_cast %179 : vector<1x4x1x1x16xf32> to vector<4x16xf32>
    %181 = arith.maximumf %178, %180 : vector<4x16xf32>
    %c0_248 = arith.constant 0 : index
    %c0_249 = arith.constant 0 : index
    %c3_250 = arith.constant 3 : index
    %c2_251 = arith.constant 2 : index
    %c0_252 = arith.constant 0 : index
    %182 = vector.load %arg4[%c0_248, %c0_249, %c3_250, %c2_251, %c0_252] : memref<1x4x8x16x16xf32, #tpu.memory_space<vmem>>, vector<1x4x1x1x16xf32>
    %183 = vector.shape_cast %182 : vector<1x4x1x1x16xf32> to vector<4x16xf32>
    %c0_253 = arith.constant 0 : index
    %c0_254 = arith.constant 0 : index
    %c3_255 = arith.constant 3 : index
    %c3_256 = arith.constant 3 : index
    %c0_257 = arith.constant 0 : index
    %184 = vector.load %arg4[%c0_253, %c0_254, %c3_255, %c3_256, %c0_257] : memref<1x4x8x16x16xf32, #tpu.memory_space<vmem>>, vector<1x4x1x1x16xf32>
    %185 = vector.shape_cast %184 : vector<1x4x1x1x16xf32> to vector<4x16xf32>
    %186 = arith.maximumf %183, %185 : vector<4x16xf32>
    %187 = arith.maximumf %181, %186 : vector<4x16xf32>
    %cst_258 = arith.constant dense<0.000000e+00> : vector<4x8xf32>
    %188 = tpu.matmul %187, %6, %cst_258 {dimension_numbers = #tpu.dot_dimension_numbers<[1], [0], [0], [1], [0, 0, 1, 1], [], []>} : vector<4x16xf32>, vector<16x8xf32>, vector<4x8xf32> -> vector<4x8xf32>
    %cst_259 = arith.constant dense<0.000000e+00> : vector<4x8xf32>
    %189 = tpu.matmul %187, %13, %cst_259 {dimension_numbers = #tpu.dot_dimension_numbers<[1], [0], [0], [1], [0, 0, 1, 1], [], []>} : vector<4x16xf32>, vector<16x8xf32>, vector<4x8xf32> -> vector<4x8xf32>
    %190 = arith.maximumf %188, %189 : vector<4x8xf32>
    %cst_260 = arith.constant dense<0.000000e+00> : vector<4x8xf32>
    %191 = tpu.matmul %14, %190, %cst_260 {dimension_numbers = #tpu.dot_dimension_numbers<[1], [0], [0], [1], [0, 0, 1, 1], [], []>} : vector<4x4xf32>, vector<4x8xf32>, vector<4x8xf32> -> vector<4x8xf32>
    %c0_261 = arith.constant 0 : index
    %c0_262 = arith.constant 0 : index
    %c1_263 = arith.constant 1 : index
    %c1_264 = arith.constant 1 : index
    %c0_265 = arith.constant 0 : index
    %192 = vector.load %arg5[%c0_261, %c0_262, %c1_263, %c1_264, %c0_265] : memref<1x4x4x8x8xf32, #tpu.memory_space<vmem>>, vector<1x4x1x1x8xf32>
    %193 = vector.shape_cast %192 : vector<1x4x1x1x8xf32> to vector<4x8xf32>
    %194 = vector.shape_cast %191 : vector<4x8xf32> to vector<1x4x1x1x8xf32>
    tpu.vector_store %arg5[%c0_261, %c0_262, %c1_263, %c1_264, %c0_265], %194 {strides = array<i32>} : memref<1x4x4x8x8xf32, #tpu.memory_space<vmem>>, vector<1x4x1x1x8xf32>,
    %c0_266 = arith.constant 0 : index
    %c0_267 = arith.constant 0 : index
    %c2_268 = arith.constant 2 : index
    %c4_269 = arith.constant 4 : index
    %c0_270 = arith.constant 0 : index
    %195 = vector.load %arg4[%c0_266, %c0_267, %c2_268, %c4_269, %c0_270] : memref<1x4x8x16x16xf32, #tpu.memory_space<vmem>>, vector<1x4x1x1x16xf32>
    %196 = vector.shape_cast %195 : vector<1x4x1x1x16xf32> to vector<4x16xf32>
    %c0_271 = arith.constant 0 : index
    %c0_272 = arith.constant 0 : index
    %c2_273 = arith.constant 2 : index
    %c5_274 = arith.constant 5 : index
    %c0_275 = arith.constant 0 : index
    %197 = vector.load %arg4[%c0_271, %c0_272, %c2_273, %c5_274, %c0_275] : memref<1x4x8x16x16xf32, #tpu.memory_space<vmem>>, vector<1x4x1x1x16xf32>
    %198 = vector.shape_cast %197 : vector<1x4x1x1x16xf32> to vector<4x16xf32>
    %199 = arith.maximumf %196, %198 : vector<4x16xf32>
    %c0_276 = arith.constant 0 : index
    %c0_277 = arith.constant 0 : index
    %c3_278 = arith.constant 3 : index
    %c4_279 = arith.constant 4 : index
    %c0_280 = arith.constant 0 : index
    %200 = vector.load %arg4[%c0_276, %c0_277, %c3_278, %c4_279, %c0_280] : memref<1x4x8x16x16xf32, #tpu.memory_space<vmem>>, vector<1x4x1x1x16xf32>
    %201 = vector.shape_cast %200 : vector<1x4x1x1x16xf32> to vector<4x16xf32>
    %c0_281 = arith.constant 0 : index
    %c0_282 = arith.constant 0 : index
    %c3_283 = arith.constant 3 : index
    %c5_284 = arith.constant 5 : index
    %c0_285 = arith.constant 0 : index
    %202 = vector.load %arg4[%c0_281, %c0_282, %c3_283, %c5_284, %c0_285] : memref<1x4x8x16x16xf32, #tpu.memory_space<vmem>>, vector<1x4x1x1x16xf32>
    %203 = vector.shape_cast %202 : vector<1x4x1x1x16xf32> to vector<4x16xf32>
    %204 = arith.maximumf %201, %203 : vector<4x16xf32>
    %205 = arith.maximumf %199, %204 : vector<4x16xf32>
    %cst_286 = arith.constant dense<0.000000e+00> : vector<4x8xf32>
    %206 = tpu.matmul %205, %6, %cst_286 {dimension_numbers = #tpu.dot_dimension_numbers<[1], [0], [0], [1], [0, 0, 1, 1], [], []>} : vector<4x16xf32>, vector<16x8xf32>, vector<4x8xf32> -> vector<4x8xf32>
    %cst_287 = arith.constant dense<0.000000e+00> : vector<4x8xf32>
    %207 = tpu.matmul %205, %13, %cst_287 {dimension_numbers = #tpu.dot_dimension_numbers<[1], [0], [0], [1], [0, 0, 1, 1], [], []>} : vector<4x16xf32>, vector<16x8xf32>, vector<4x8xf32> -> vector<4x8xf32>
    %208 = arith.maximumf %206, %207 : vector<4x8xf32>
    %cst_288 = arith.constant dense<0.000000e+00> : vector<4x8xf32>
    %209 = tpu.matmul %14, %208, %cst_288 {dimension_numbers = #tpu.dot_dimension_numbers<[1], [0], [0], [1], [0, 0, 1, 1], [], []>} : vector<4x4xf32>, vector<4x8xf32>, vector<4x8xf32> -> vector<4x8xf32>
    %c0_289 = arith.constant 0 : index
    %c0_290 = arith.constant 0 : index
    %c1_291 = arith.constant 1 : index
    %c2_292 = arith.constant 2 : index
    %c0_293 = arith.constant 0 : index
    %210 = vector.load %arg5[%c0_289, %c0_290, %c1_291, %c2_292, %c0_293] : memref<1x4x4x8x8xf32, #tpu.memory_space<vmem>>, vector<1x4x1x1x8xf32>
    %211 = vector.shape_cast %210 : vector<1x4x1x1x8xf32> to vector<4x8xf32>
    %212 = vector.shape_cast %209 : vector<4x8xf32> to vector<1x4x1x1x8xf32>
    tpu.vector_store %arg5[%c0_289, %c0_290, %c1_291, %c2_292, %c0_293], %212 {strides = array<i32>} : memref<1x4x4x8x8xf32, #tpu.memory_space<vmem>>, vector<1x4x1x1x8xf32>,
    %c0_294 = arith.constant 0 : index
    %c0_295 = arith.constant 0 : index
    %c2_296 = arith.constant 2 : index
    %c6_297 = arith.constant 6 : index
    %c0_298 = arith.constant 0 : index
    %213 = vector.load %arg4[%c0_294, %c0_295, %c2_296, %c6_297, %c0_298] : memref<1x4x8x16x16xf32, #tpu.memory_space<vmem>>, vector<1x4x1x1x16xf32>
    %214 = vector.shape_cast %213 : vector<1x4x1x1x16xf32> to vector<4x16xf32>
    %c0_299 = arith.constant 0 : index
    %c0_300 = arith.constant 0 : index
    %c2_301 = arith.constant 2 : index
    %c7_302 = arith.constant 7 : index
    %c0_303 = arith.constant 0 : index
    %215 = vector.load %arg4[%c0_299, %c0_300, %c2_301, %c7_302, %c0_303] : memref<1x4x8x16x16xf32, #tpu.memory_space<vmem>>, vector<1x4x1x1x16xf32>
    %216 = vector.shape_cast %215 : vector<1x4x1x1x16xf32> to vector<4x16xf32>
    %217 = arith.maximumf %214, %216 : vector<4x16xf32>
    %c0_304 = arith.constant 0 : index
    %c0_305 = arith.constant 0 : index
    %c3_306 = arith.constant 3 : index
    %c6_307 = arith.constant 6 : index
    %c0_308 = arith.constant 0 : index
    %218 = vector.load %arg4[%c0_304, %c0_305, %c3_306, %c6_307, %c0_308] : memref<1x4x8x16x16xf32, #tpu.memory_space<vmem>>, vector<1x4x1x1x16xf32>
    %219 = vector.shape_cast %218 : vector<1x4x1x1x16xf32> to vector<4x16xf32>
    %c0_309 = arith.constant 0 : index
    %c0_310 = arith.constant 0 : index
    %c3_311 = arith.constant 3 : index
    %c7_312 = arith.constant 7 : index
    %c0_313 = arith.constant 0 : index
    %220 = vector.load %arg4[%c0_309, %c0_310, %c3_311, %c7_312, %c0_313] : memref<1x4x8x16x16xf32, #tpu.memory_space<vmem>>, vector<1x4x1x1x16xf32>
    %221 = vector.shape_cast %220 : vector<1x4x1x1x16xf32> to vector<4x16xf32>
    %222 = arith.maximumf %219, %221 : vector<4x16xf32>
    %223 = arith.maximumf %217, %222 : vector<4x16xf32>
    %cst_314 = arith.constant dense<0.000000e+00> : vector<4x8xf32>
    %224 = tpu.matmul %223, %6, %cst_314 {dimension_numbers = #tpu.dot_dimension_numbers<[1], [0], [0], [1], [0, 0, 1, 1], [], []>} : vector<4x16xf32>, vector<16x8xf32>, vector<4x8xf32> -> vector<4x8xf32>
    %cst_315 = arith.constant dense<0.000000e+00> : vector<4x8xf32>
    %225 = tpu.matmul %223, %13, %cst_315 {dimension_numbers = #tpu.dot_dimension_numbers<[1], [0], [0], [1], [0, 0, 1, 1], [], []>} : vector<4x16xf32>, vector<16x8xf32>, vector<4x8xf32> -> vector<4x8xf32>
    %226 = arith.maximumf %224, %225 : vector<4x8xf32>
    %cst_316 = arith.constant dense<0.000000e+00> : vector<4x8xf32>
    %227 = tpu.matmul %14, %226, %cst_316 {dimension_numbers = #tpu.dot_dimension_numbers<[1], [0], [0], [1], [0, 0, 1, 1], [], []>} : vector<4x4xf32>, vector<4x8xf32>, vector<4x8xf32> -> vector<4x8xf32>
    %c0_317 = arith.constant 0 : index
    %c0_318 = arith.constant 0 : index
    %c1_319 = arith.constant 1 : index
    %c3_320 = arith.constant 3 : index
    %c0_321 = arith.constant 0 : index
    %228 = vector.load %arg5[%c0_317, %c0_318, %c1_319, %c3_320, %c0_321] : memref<1x4x4x8x8xf32, #tpu.memory_space<vmem>>, vector<1x4x1x1x8xf32>
    %229 = vector.shape_cast %228 : vector<1x4x1x1x8xf32> to vector<4x8xf32>
    %230 = vector.shape_cast %227 : vector<4x8xf32> to vector<1x4x1x1x8xf32>
    tpu.vector_store %arg5[%c0_317, %c0_318, %c1_319, %c3_320, %c0_321], %230 {strides = array<i32>} : memref<1x4x4x8x8xf32, #tpu.memory_space<vmem>>, vector<1x4x1x1x8xf32>,
    %c0_322 = arith.constant 0 : index
    %c0_323 = arith.constant 0 : index
    %c2_324 = arith.constant 2 : index
    %c8_325 = arith.constant 8 : index
    %c0_326 = arith.constant 0 : index
    %231 = vector.load %arg4[%c0_322, %c0_323, %c2_324, %c8_325, %c0_326] : memref<1x4x8x16x16xf32, #tpu.memory_space<vmem>>, vector<1x4x1x1x16xf32>
    %232 = vector.shape_cast %231 : vector<1x4x1x1x16xf32> to vector<4x16xf32>
    %c0_327 = arith.constant 0 : index
    %c0_328 = arith.constant 0 : index
    %c2_329 = arith.constant 2 : index
    %c9_330 = arith.constant 9 : index
    %c0_331 = arith.constant 0 : index
    %233 = vector.load %arg4[%c0_327, %c0_328, %c2_329, %c9_330, %c0_331] : memref<1x4x8x16x16xf32, #tpu.memory_space<vmem>>, vector<1x4x1x1x16xf32>
    %234 = vector.shape_cast %233 : vector<1x4x1x1x16xf32> to vector<4x16xf32>
    %235 = arith.maximumf %232, %234 : vector<4x16xf32>
    %c0_332 = arith.constant 0 : index
    %c0_333 = arith.constant 0 : index
    %c3_334 = arith.constant 3 : index
    %c8_335 = arith.constant 8 : index
    %c0_336 = arith.constant 0 : index
    %236 = vector.load %arg4[%c0_332, %c0_333, %c3_334, %c8_335, %c0_336] : memref<1x4x8x16x16xf32, #tpu.memory_space<vmem>>, vector<1x4x1x1x16xf32>
    %237 = vector.shape_cast %236 : vector<1x4x1x1x16xf32> to vector<4x16xf32>
    %c0_337 = arith.constant 0 : index
    %c0_338 = arith.constant 0 : index
    %c3_339 = arith.constant 3 : index
    %c9_340 = arith.constant 9 : index
    %c0_341 = arith.constant 0 : index
    %238 = vector.load %arg4[%c0_337, %c0_338, %c3_339, %c9_340, %c0_341] : memref<1x4x8x16x16xf32, #tpu.memory_space<vmem>>, vector<1x4x1x1x16xf32>
    %239 = vector.shape_cast %238 : vector<1x4x1x1x16xf32> to vector<4x16xf32>
    %240 = arith.maximumf %237, %239 : vector<4x16xf32>
    %241 = arith.maximumf %235, %240 : vector<4x16xf32>
    %cst_342 = arith.constant dense<0.000000e+00> : vector<4x8xf32>
    %242 = tpu.matmul %241, %6, %cst_342 {dimension_numbers = #tpu.dot_dimension_numbers<[1], [0], [0], [1], [0, 0, 1, 1], [], []>} : vector<4x16xf32>, vector<16x8xf32>, vector<4x8xf32> -> vector<4x8xf32>
    %cst_343 = arith.constant dense<0.000000e+00> : vector<4x8xf32>
    %243 = tpu.matmul %241, %13, %cst_343 {dimension_numbers = #tpu.dot_dimension_numbers<[1], [0], [0], [1], [0, 0, 1, 1], [], []>} : vector<4x16xf32>, vector<16x8xf32>, vector<4x8xf32> -> vector<4x8xf32>
    %244 = arith.maximumf %242, %243 : vector<4x8xf32>
    %cst_344 = arith.constant dense<0.000000e+00> : vector<4x8xf32>
    %245 = tpu.matmul %14, %244, %cst_344 {dimension_numbers = #tpu.dot_dimension_numbers<[1], [0], [0], [1], [0, 0, 1, 1], [], []>} : vector<4x4xf32>, vector<4x8xf32>, vector<4x8xf32> -> vector<4x8xf32>
    %c0_345 = arith.constant 0 : index
    %c0_346 = arith.constant 0 : index
    %c1_347 = arith.constant 1 : index
    %c4_348 = arith.constant 4 : index
    %c0_349 = arith.constant 0 : index
    %246 = vector.load %arg5[%c0_345, %c0_346, %c1_347, %c4_348, %c0_349] : memref<1x4x4x8x8xf32, #tpu.memory_space<vmem>>, vector<1x4x1x1x8xf32>
    %247 = vector.shape_cast %246 : vector<1x4x1x1x8xf32> to vector<4x8xf32>
    %248 = vector.shape_cast %245 : vector<4x8xf32> to vector<1x4x1x1x8xf32>
    tpu.vector_store %arg5[%c0_345, %c0_346, %c1_347, %c4_348, %c0_349], %248 {strides = array<i32>} : memref<1x4x4x8x8xf32, #tpu.memory_space<vmem>>, vector<1x4x1x1x8xf32>,
    %c0_350 = arith.constant 0 : index
    %c0_351 = arith.constant 0 : index
    %c2_352 = arith.constant 2 : index
    %c10_353 = arith.constant 10 : index
    %c0_354 = arith.constant 0 : index
    %249 = vector.load %arg4[%c0_350, %c0_351, %c2_352, %c10_353, %c0_354] : memref<1x4x8x16x16xf32, #tpu.memory_space<vmem>>, vector<1x4x1x1x16xf32>
    %250 = vector.shape_cast %249 : vector<1x4x1x1x16xf32> to vector<4x16xf32>
    %c0_355 = arith.constant 0 : index
    %c0_356 = arith.constant 0 : index
    %c2_357 = arith.constant 2 : index
    %c11_358 = arith.constant 11 : index
    %c0_359 = arith.constant 0 : index
    %251 = vector.load %arg4[%c0_355, %c0_356, %c2_357, %c11_358, %c0_359] : memref<1x4x8x16x16xf32, #tpu.memory_space<vmem>>, vector<1x4x1x1x16xf32>
    %252 = vector.shape_cast %251 : vector<1x4x1x1x16xf32> to vector<4x16xf32>
    %253 = arith.maximumf %250, %252 : vector<4x16xf32>
    %c0_360 = arith.constant 0 : index
    %c0_361 = arith.constant 0 : index
    %c3_362 = arith.constant 3 : index
    %c10_363 = arith.constant 10 : index
    %c0_364 = arith.constant 0 : index
    %254 = vector.load %arg4[%c0_360, %c0_361, %c3_362, %c10_363, %c0_364] : memref<1x4x8x16x16xf32, #tpu.memory_space<vmem>>, vector<1x4x1x1x16xf32>
    %255 = vector.shape_cast %254 : vector<1x4x1x1x16xf32> to vector<4x16xf32>
    %c0_365 = arith.constant 0 : index
    %c0_366 = arith.constant 0 : index
    %c3_367 = arith.constant 3 : index
    %c11_368 = arith.constant 11 : index
    %c0_369 = arith.constant 0 : index
    %256 = vector.load %arg4[%c0_365, %c0_366, %c3_367, %c11_368, %c0_369] : memref<1x4x8x16x16xf32, #tpu.memory_space<vmem>>, vector<1x4x1x1x16xf32>
    %257 = vector.shape_cast %256 : vector<1x4x1x1x16xf32> to vector<4x16xf32>
    %258 = arith.maximumf %255, %257 : vector<4x16xf32>
    %259 = arith.maximumf %253, %258 : vector<4x16xf32>
    %cst_370 = arith.constant dense<0.000000e+00> : vector<4x8xf32>
    %260 = tpu.matmul %259, %6, %cst_370 {dimension_numbers = #tpu.dot_dimension_numbers<[1], [0], [0], [1], [0, 0, 1, 1], [], []>} : vector<4x16xf32>, vector<16x8xf32>, vector<4x8xf32> -> vector<4x8xf32>
    %cst_371 = arith.constant dense<0.000000e+00> : vector<4x8xf32>
    %261 = tpu.matmul %259, %13, %cst_371 {dimension_numbers = #tpu.dot_dimension_numbers<[1], [0], [0], [1], [0, 0, 1, 1], [], []>} : vector<4x16xf32>, vector<16x8xf32>, vector<4x8xf32> -> vector<4x8xf32>
    %262 = arith.maximumf %260, %261 : vector<4x8xf32>
    %cst_372 = arith.constant dense<0.000000e+00> : vector<4x8xf32>
    %263 = tpu.matmul %14, %262, %cst_372 {dimension_numbers = #tpu.dot_dimension_numbers<[1], [0], [0], [1], [0, 0, 1, 1], [], []>} : vector<4x4xf32>, vector<4x8xf32>, vector<4x8xf32> -> vector<4x8xf32>
    %c0_373 = arith.constant 0 : index
    %c0_374 = arith.constant 0 : index
    %c1_375 = arith.constant 1 : index
    %c5_376 = arith.constant 5 : index
    %c0_377 = arith.constant 0 : index
    %264 = vector.load %arg5[%c0_373, %c0_374, %c1_375, %c5_376, %c0_377] : memref<1x4x4x8x8xf32, #tpu.memory_space<vmem>>, vector<1x4x1x1x8xf32>
    %265 = vector.shape_cast %264 : vector<1x4x1x1x8xf32> to vector<4x8xf32>
    %266 = vector.shape_cast %263 : vector<4x8xf32> to vector<1x4x1x1x8xf32>
    tpu.vector_store %arg5[%c0_373, %c0_374, %c1_375, %c5_376, %c0_377], %266 {strides = array<i32>} : memref<1x4x4x8x8xf32, #tpu.memory_space<vmem>>, vector<1x4x1x1x8xf32>,
    %c0_378 = arith.constant 0 : index
    %c0_379 = arith.constant 0 : index
    %c2_380 = arith.constant 2 : index
    %c12_381 = arith.constant 12 : index
    %c0_382 = arith.constant 0 : index
    %267 = vector.load %arg4[%c0_378, %c0_379, %c2_380, %c12_381, %c0_382] : memref<1x4x8x16x16xf32, #tpu.memory_space<vmem>>, vector<1x4x1x1x16xf32>
    %268 = vector.shape_cast %267 : vector<1x4x1x1x16xf32> to vector<4x16xf32>
    %c0_383 = arith.constant 0 : index
    %c0_384 = arith.constant 0 : index
    %c2_385 = arith.constant 2 : index
    %c13_386 = arith.constant 13 : index
    %c0_387 = arith.constant 0 : index
    %269 = vector.load %arg4[%c0_383, %c0_384, %c2_385, %c13_386, %c0_387] : memref<1x4x8x16x16xf32, #tpu.memory_space<vmem>>, vector<1x4x1x1x16xf32>
    %270 = vector.shape_cast %269 : vector<1x4x1x1x16xf32> to vector<4x16xf32>
    %271 = arith.maximumf %268, %270 : vector<4x16xf32>
    %c0_388 = arith.constant 0 : index
    %c0_389 = arith.constant 0 : index
    %c3_390 = arith.constant 3 : index
    %c12_391 = arith.constant 12 : index
    %c0_392 = arith.constant 0 : index
    %272 = vector.load %arg4[%c0_388, %c0_389, %c3_390, %c12_391, %c0_392] : memref<1x4x8x16x16xf32, #tpu.memory_space<vmem>>, vector<1x4x1x1x16xf32>
    %273 = vector.shape_cast %272 : vector<1x4x1x1x16xf32> to vector<4x16xf32>
    %c0_393 = arith.constant 0 : index
    %c0_394 = arith.constant 0 : index
    %c3_395 = arith.constant 3 : index
    %c13_396 = arith.constant 13 : index
    %c0_397 = arith.constant 0 : index
    %274 = vector.load %arg4[%c0_393, %c0_394, %c3_395, %c13_396, %c0_397] : memref<1x4x8x16x16xf32, #tpu.memory_space<vmem>>, vector<1x4x1x1x16xf32>
    %275 = vector.shape_cast %274 : vector<1x4x1x1x16xf32> to vector<4x16xf32>
    %276 = arith.maximumf %273, %275 : vector<4x16xf32>
    %277 = arith.maximumf %271, %276 : vector<4x16xf32>
    %cst_398 = arith.constant dense<0.000000e+00> : vector<4x8xf32>
    %278 = tpu.matmul %277, %6, %cst_398 {dimension_numbers = #tpu.dot_dimension_numbers<[1], [0], [0], [1], [0, 0, 1, 1], [], []>} : vector<4x16xf32>, vector<16x8xf32>, vector<4x8xf32> -> vector<4x8xf32>
    %cst_399 = arith.constant dense<0.000000e+00> : vector<4x8xf32>
    %279 = tpu.matmul %277, %13, %cst_399 {dimension_numbers = #tpu.dot_dimension_numbers<[1], [0], [0], [1], [0, 0, 1, 1], [], []>} : vector<4x16xf32>, vector<16x8xf32>, vector<4x8xf32> -> vector<4x8xf32>
    %280 = arith.maximumf %278, %279 : vector<4x8xf32>
    %cst_400 = arith.constant dense<0.000000e+00> : vector<4x8xf32>
    %281 = tpu.matmul %14, %280, %cst_400 {dimension_numbers = #tpu.dot_dimension_numbers<[1], [0], [0], [1], [0, 0, 1, 1], [], []>} : vector<4x4xf32>, vector<4x8xf32>, vector<4x8xf32> -> vector<4x8xf32>
    %c0_401 = arith.constant 0 : index
    %c0_402 = arith.constant 0 : index
    %c1_403 = arith.constant 1 : index
    %c6_404 = arith.constant 6 : index
    %c0_405 = arith.constant 0 : index
    %282 = vector.load %arg5[%c0_401, %c0_402, %c1_403, %c6_404, %c0_405] : memref<1x4x4x8x8xf32, #tpu.memory_space<vmem>>, vector<1x4x1x1x8xf32>
    %283 = vector.shape_cast %282 : vector<1x4x1x1x8xf32> to vector<4x8xf32>
    %284 = vector.shape_cast %281 : vector<4x8xf32> to vector<1x4x1x1x8xf32>
    tpu.vector_store %arg5[%c0_401, %c0_402, %c1_403, %c6_404, %c0_405], %284 {strides = array<i32>} : memref<1x4x4x8x8xf32, #tpu.memory_space<vmem>>, vector<1x4x1x1x8xf32>,
    %c0_406 = arith.constant 0 : index
    %c0_407 = arith.constant 0 : index
    %c2_408 = arith.constant 2 : index
    %c14_409 = arith.constant 14 : index
    %c0_410 = arith.constant 0 : index
    %285 = vector.load %arg4[%c0_406, %c0_407, %c2_408, %c14_409, %c0_410] : memref<1x4x8x16x16xf32, #tpu.memory_space<vmem>>, vector<1x4x1x1x16xf32>
    %286 = vector.shape_cast %285 : vector<1x4x1x1x16xf32> to vector<4x16xf32>
    %c0_411 = arith.constant 0 : index
    %c0_412 = arith.constant 0 : index
    %c2_413 = arith.constant 2 : index
    %c15_414 = arith.constant 15 : index
    %c0_415 = arith.constant 0 : index
    %287 = vector.load %arg4[%c0_411, %c0_412, %c2_413, %c15_414, %c0_415] : memref<1x4x8x16x16xf32, #tpu.memory_space<vmem>>, vector<1x4x1x1x16xf32>
    %288 = vector.shape_cast %287 : vector<1x4x1x1x16xf32> to vector<4x16xf32>
    %289 = arith.maximumf %286, %288 : vector<4x16xf32>
    %c0_416 = arith.constant 0 : index
    %c0_417 = arith.constant 0 : index
    %c3_418 = arith.constant 3 : index
    %c14_419 = arith.constant 14 : index
    %c0_420 = arith.constant 0 : index
    %290 = vector.load %arg4[%c0_416, %c0_417, %c3_418, %c14_419, %c0_420] : memref<1x4x8x16x16xf32, #tpu.memory_space<vmem>>, vector<1x4x1x1x16xf32>
    %291 = vector.shape_cast %290 : vector<1x4x1x1x16xf32> to vector<4x16xf32>
    %c0_421 = arith.constant 0 : index
    %c0_422 = arith.constant 0 : index
    %c3_423 = arith.constant 3 : index
    %c15_424 = arith.constant 15 : index
    %c0_425 = arith.constant 0 : index
    %292 = vector.load %arg4[%c0_421, %c0_422, %c3_423, %c15_424, %c0_425] : memref<1x4x8x16x16xf32, #tpu.memory_space<vmem>>, vector<1x4x1x1x16xf32>
    %293 = vector.shape_cast %292 : vector<1x4x1x1x16xf32> to vector<4x16xf32>
    %294 = arith.maximumf %291, %293 : vector<4x16xf32>
    %295 = arith.maximumf %289, %294 : vector<4x16xf32>
    %cst_426 = arith.constant dense<0.000000e+00> : vector<4x8xf32>
    %296 = tpu.matmul %295, %6, %cst_426 {dimension_numbers = #tpu.dot_dimension_numbers<[1], [0], [0], [1], [0, 0, 1, 1], [], []>} : vector<4x16xf32>, vector<16x8xf32>, vector<4x8xf32> -> vector<4x8xf32>
    %cst_427 = arith.constant dense<0.000000e+00> : vector<4x8xf32>
    %297 = tpu.matmul %295, %13, %cst_427 {dimension_numbers = #tpu.dot_dimension_numbers<[1], [0], [0], [1], [0, 0, 1, 1], [], []>} : vector<4x16xf32>, vector<16x8xf32>, vector<4x8xf32> -> vector<4x8xf32>
    %298 = arith.maximumf %296, %297 : vector<4x8xf32>
    %cst_428 = arith.constant dense<0.000000e+00> : vector<4x8xf32>
    %299 = tpu.matmul %14, %298, %cst_428 {dimension_numbers = #tpu.dot_dimension_numbers<[1], [0], [0], [1], [0, 0, 1, 1], [], []>} : vector<4x4xf32>, vector<4x8xf32>, vector<4x8xf32> -> vector<4x8xf32>
    %c0_429 = arith.constant 0 : index
    %c0_430 = arith.constant 0 : index
    %c1_431 = arith.constant 1 : index
    %c7_432 = arith.constant 7 : index
    %c0_433 = arith.constant 0 : index
    %300 = vector.load %arg5[%c0_429, %c0_430, %c1_431, %c7_432, %c0_433] : memref<1x4x4x8x8xf32, #tpu.memory_space<vmem>>, vector<1x4x1x1x8xf32>
    %301 = vector.shape_cast %300 : vector<1x4x1x1x8xf32> to vector<4x8xf32>
    %302 = vector.shape_cast %299 : vector<4x8xf32> to vector<1x4x1x1x8xf32>
    tpu.vector_store %arg5[%c0_429, %c0_430, %c1_431, %c7_432, %c0_433], %302 {strides = array<i32>} : memref<1x4x4x8x8xf32, #tpu.memory_space<vmem>>, vector<1x4x1x1x8xf32>,
    %c0_434 = arith.constant 0 : index
    %c0_435 = arith.constant 0 : index
    %c4_436 = arith.constant 4 : index
    %c0_437 = arith.constant 0 : index
    %c0_438 = arith.constant 0 : index
    %303 = vector.load %arg4[%c0_434, %c0_435, %c4_436, %c0_437, %c0_438] : memref<1x4x8x16x16xf32, #tpu.memory_space<vmem>>, vector<1x4x1x1x16xf32>
    %304 = vector.shape_cast %303 : vector<1x4x1x1x16xf32> to vector<4x16xf32>
    %c0_439 = arith.constant 0 : index
    %c0_440 = arith.constant 0 : index
    %c4_441 = arith.constant 4 : index
    %c1_442 = arith.constant 1 : index
    %c0_443 = arith.constant 0 : index
    %305 = vector.load %arg4[%c0_439, %c0_440, %c4_441, %c1_442, %c0_443] : memref<1x4x8x16x16xf32, #tpu.memory_space<vmem>>, vector<1x4x1x1x16xf32>
    %306 = vector.shape_cast %305 : vector<1x4x1x1x16xf32> to vector<4x16xf32>
    %307 = arith.maximumf %304, %306 : vector<4x16xf32>
    %c0_444 = arith.constant 0 : index
    %c0_445 = arith.constant 0 : index
    %c5_446 = arith.constant 5 : index
    %c0_447 = arith.constant 0 : index
    %c0_448 = arith.constant 0 : index
    %308 = vector.load %arg4[%c0_444, %c0_445, %c5_446, %c0_447, %c0_448] : memref<1x4x8x16x16xf32, #tpu.memory_space<vmem>>, vector<1x4x1x1x16xf32>
    %309 = vector.shape_cast %308 : vector<1x4x1x1x16xf32> to vector<4x16xf32>
    %c0_449 = arith.constant 0 : index
    %c0_450 = arith.constant 0 : index
    %c5_451 = arith.constant 5 : index
    %c1_452 = arith.constant 1 : index
    %c0_453 = arith.constant 0 : index
    %310 = vector.load %arg4[%c0_449, %c0_450, %c5_451, %c1_452, %c0_453] : memref<1x4x8x16x16xf32, #tpu.memory_space<vmem>>, vector<1x4x1x1x16xf32>
    %311 = vector.shape_cast %310 : vector<1x4x1x1x16xf32> to vector<4x16xf32>
    %312 = arith.maximumf %309, %311 : vector<4x16xf32>
    %313 = arith.maximumf %307, %312 : vector<4x16xf32>
    %cst_454 = arith.constant dense<0.000000e+00> : vector<4x8xf32>
    %314 = tpu.matmul %313, %6, %cst_454 {dimension_numbers = #tpu.dot_dimension_numbers<[1], [0], [0], [1], [0, 0, 1, 1], [], []>} : vector<4x16xf32>, vector<16x8xf32>, vector<4x8xf32> -> vector<4x8xf32>
    %cst_455 = arith.constant dense<0.000000e+00> : vector<4x8xf32>
    %315 = tpu.matmul %313, %13, %cst_455 {dimension_numbers = #tpu.dot_dimension_numbers<[1], [0], [0], [1], [0, 0, 1, 1], [], []>} : vector<4x16xf32>, vector<16x8xf32>, vector<4x8xf32> -> vector<4x8xf32>
    %316 = arith.maximumf %314, %315 : vector<4x8xf32>
    %cst_456 = arith.constant dense<0.000000e+00> : vector<4x8xf32>
    %317 = tpu.matmul %14, %316, %cst_456 {dimension_numbers = #tpu.dot_dimension_numbers<[1], [0], [0], [1], [0, 0, 1, 1], [], []>} : vector<4x4xf32>, vector<4x8xf32>, vector<4x8xf32> -> vector<4x8xf32>
    %c0_457 = arith.constant 0 : index
    %c0_458 = arith.constant 0 : index
    %c2_459 = arith.constant 2 : index
    %c0_460 = arith.constant 0 : index
    %c0_461 = arith.constant 0 : index
    %318 = vector.load %arg5[%c0_457, %c0_458, %c2_459, %c0_460, %c0_461] : memref<1x4x4x8x8xf32, #tpu.memory_space<vmem>>, vector<1x4x1x1x8xf32>
    %319 = vector.shape_cast %318 : vector<1x4x1x1x8xf32> to vector<4x8xf32>
    %320 = vector.shape_cast %317 : vector<4x8xf32> to vector<1x4x1x1x8xf32>
    tpu.vector_store %arg5[%c0_457, %c0_458, %c2_459, %c0_460, %c0_461], %320 {strides = array<i32>} : memref<1x4x4x8x8xf32, #tpu.memory_space<vmem>>, vector<1x4x1x1x8xf32>,
    %c0_462 = arith.constant 0 : index
    %c0_463 = arith.constant 0 : index
    %c4_464 = arith.constant 4 : index
    %c2_465 = arith.constant 2 : index
    %c0_466 = arith.constant 0 : index
    %321 = vector.load %arg4[%c0_462, %c0_463, %c4_464, %c2_465, %c0_466] : memref<1x4x8x16x16xf32, #tpu.memory_space<vmem>>, vector<1x4x1x1x16xf32>
    %322 = vector.shape_cast %321 : vector<1x4x1x1x16xf32> to vector<4x16xf32>
    %c0_467 = arith.constant 0 : index
    %c0_468 = arith.constant 0 : index
    %c4_469 = arith.constant 4 : index
    %c3_470 = arith.constant 3 : index
    %c0_471 = arith.constant 0 : index
    %323 = vector.load %arg4[%c0_467, %c0_468, %c4_469, %c3_470, %c0_471] : memref<1x4x8x16x16xf32, #tpu.memory_space<vmem>>, vector<1x4x1x1x16xf32>
    %324 = vector.shape_cast %323 : vector<1x4x1x1x16xf32> to vector<4x16xf32>
    %325 = arith.maximumf %322, %324 : vector<4x16xf32>
    %c0_472 = arith.constant 0 : index
    %c0_473 = arith.constant 0 : index
    %c5_474 = arith.constant 5 : index
    %c2_475 = arith.constant 2 : index
    %c0_476 = arith.constant 0 : index
    %326 = vector.load %arg4[%c0_472, %c0_473, %c5_474, %c2_475, %c0_476] : memref<1x4x8x16x16xf32, #tpu.memory_space<vmem>>, vector<1x4x1x1x16xf32>
    %327 = vector.shape_cast %326 : vector<1x4x1x1x16xf32> to vector<4x16xf32>
    %c0_477 = arith.constant 0 : index
    %c0_478 = arith.constant 0 : index
    %c5_479 = arith.constant 5 : index
    %c3_480 = arith.constant 3 : index
    %c0_481 = arith.constant 0 : index
    %328 = vector.load %arg4[%c0_477, %c0_478, %c5_479, %c3_480, %c0_481] : memref<1x4x8x16x16xf32, #tpu.memory_space<vmem>>, vector<1x4x1x1x16xf32>
    %329 = vector.shape_cast %328 : vector<1x4x1x1x16xf32> to vector<4x16xf32>
    %330 = arith.maximumf %327, %329 : vector<4x16xf32>
    %331 = arith.maximumf %325, %330 : vector<4x16xf32>
    %cst_482 = arith.constant dense<0.000000e+00> : vector<4x8xf32>
    %332 = tpu.matmul %331, %6, %cst_482 {dimension_numbers = #tpu.dot_dimension_numbers<[1], [0], [0], [1], [0, 0, 1, 1], [], []>} : vector<4x16xf32>, vector<16x8xf32>, vector<4x8xf32> -> vector<4x8xf32>
    %cst_483 = arith.constant dense<0.000000e+00> : vector<4x8xf32>
    %333 = tpu.matmul %331, %13, %cst_483 {dimension_numbers = #tpu.dot_dimension_numbers<[1], [0], [0], [1], [0, 0, 1, 1], [], []>} : vector<4x16xf32>, vector<16x8xf32>, vector<4x8xf32> -> vector<4x8xf32>
    %334 = arith.maximumf %332, %333 : vector<4x8xf32>
    %cst_484 = arith.constant dense<0.000000e+00> : vector<4x8xf32>
    %335 = tpu.matmul %14, %334, %cst_484 {dimension_numbers = #tpu.dot_dimension_numbers<[1], [0], [0], [1], [0, 0, 1, 1], [], []>} : vector<4x4xf32>, vector<4x8xf32>, vector<4x8xf32> -> vector<4x8xf32>
    %c0_485 = arith.constant 0 : index
    %c0_486 = arith.constant 0 : index
    %c2_487 = arith.constant 2 : index
    %c1_488 = arith.constant 1 : index
    %c0_489 = arith.constant 0 : index
    %336 = vector.load %arg5[%c0_485, %c0_486, %c2_487, %c1_488, %c0_489] : memref<1x4x4x8x8xf32, #tpu.memory_space<vmem>>, vector<1x4x1x1x8xf32>
    %337 = vector.shape_cast %336 : vector<1x4x1x1x8xf32> to vector<4x8xf32>
    %338 = vector.shape_cast %335 : vector<4x8xf32> to vector<1x4x1x1x8xf32>
    tpu.vector_store %arg5[%c0_485, %c0_486, %c2_487, %c1_488, %c0_489], %338 {strides = array<i32>} : memref<1x4x4x8x8xf32, #tpu.memory_space<vmem>>, vector<1x4x1x1x8xf32>,
    %c0_490 = arith.constant 0 : index
    %c0_491 = arith.constant 0 : index
    %c4_492 = arith.constant 4 : index
    %c4_493 = arith.constant 4 : index
    %c0_494 = arith.constant 0 : index
    %339 = vector.load %arg4[%c0_490, %c0_491, %c4_492, %c4_493, %c0_494] : memref<1x4x8x16x16xf32, #tpu.memory_space<vmem>>, vector<1x4x1x1x16xf32>
    %340 = vector.shape_cast %339 : vector<1x4x1x1x16xf32> to vector<4x16xf32>
    %c0_495 = arith.constant 0 : index
    %c0_496 = arith.constant 0 : index
    %c4_497 = arith.constant 4 : index
    %c5_498 = arith.constant 5 : index
    %c0_499 = arith.constant 0 : index
    %341 = vector.load %arg4[%c0_495, %c0_496, %c4_497, %c5_498, %c0_499] : memref<1x4x8x16x16xf32, #tpu.memory_space<vmem>>, vector<1x4x1x1x16xf32>
    %342 = vector.shape_cast %341 : vector<1x4x1x1x16xf32> to vector<4x16xf32>
    %343 = arith.maximumf %340, %342 : vector<4x16xf32>
    %c0_500 = arith.constant 0 : index
    %c0_501 = arith.constant 0 : index
    %c5_502 = arith.constant 5 : index
    %c4_503 = arith.constant 4 : index
    %c0_504 = arith.constant 0 : index
    %344 = vector.load %arg4[%c0_500, %c0_501, %c5_502, %c4_503, %c0_504] : memref<1x4x8x16x16xf32, #tpu.memory_space<vmem>>, vector<1x4x1x1x16xf32>
    %345 = vector.shape_cast %344 : vector<1x4x1x1x16xf32> to vector<4x16xf32>
    %c0_505 = arith.constant 0 : index
    %c0_506 = arith.constant 0 : index
    %c5_507 = arith.constant 5 : index
    %c5_508 = arith.constant 5 : index
    %c0_509 = arith.constant 0 : index
    %346 = vector.load %arg4[%c0_505, %c0_506, %c5_507, %c5_508, %c0_509] : memref<1x4x8x16x16xf32, #tpu.memory_space<vmem>>, vector<1x4x1x1x16xf32>
    %347 = vector.shape_cast %346 : vector<1x4x1x1x16xf32> to vector<4x16xf32>
    %348 = arith.maximumf %345, %347 : vector<4x16xf32>
    %349 = arith.maximumf %343, %348 : vector<4x16xf32>
    %cst_510 = arith.constant dense<0.000000e+00> : vector<4x8xf32>
    %350 = tpu.matmul %349, %6, %cst_510 {dimension_numbers = #tpu.dot_dimension_numbers<[1], [0], [0], [1], [0, 0, 1, 1], [], []>} : vector<4x16xf32>, vector<16x8xf32>, vector<4x8xf32> -> vector<4x8xf32>
    %cst_511 = arith.constant dense<0.000000e+00> : vector<4x8xf32>
    %351 = tpu.matmul %349, %13, %cst_511 {dimension_numbers = #tpu.dot_dimension_numbers<[1], [0], [0], [1], [0, 0, 1, 1], [], []>} : vector<4x16xf32>, vector<16x8xf32>, vector<4x8xf32> -> vector<4x8xf32>
    %352 = arith.maximumf %350, %351 : vector<4x8xf32>
    %cst_512 = arith.constant dense<0.000000e+00> : vector<4x8xf32>
    %353 = tpu.matmul %14, %352, %cst_512 {dimension_numbers = #tpu.dot_dimension_numbers<[1], [0], [0], [1], [0, 0, 1, 1], [], []>} : vector<4x4xf32>, vector<4x8xf32>, vector<4x8xf32> -> vector<4x8xf32>
    %c0_513 = arith.constant 0 : index
    %c0_514 = arith.constant 0 : index
    %c2_515 = arith.constant 2 : index
    %c2_516 = arith.constant 2 : index
    %c0_517 = arith.constant 0 : index
    %354 = vector.load %arg5[%c0_513, %c0_514, %c2_515, %c2_516, %c0_517] : memref<1x4x4x8x8xf32, #tpu.memory_space<vmem>>, vector<1x4x1x1x8xf32>
    %355 = vector.shape_cast %354 : vector<1x4x1x1x8xf32> to vector<4x8xf32>
    %356 = vector.shape_cast %353 : vector<4x8xf32> to vector<1x4x1x1x8xf32>
    tpu.vector_store %arg5[%c0_513, %c0_514, %c2_515, %c2_516, %c0_517], %356 {strides = array<i32>} : memref<1x4x4x8x8xf32, #tpu.memory_space<vmem>>, vector<1x4x1x1x8xf32>,
    %c0_518 = arith.constant 0 : index
    %c0_519 = arith.constant 0 : index
    %c4_520 = arith.constant 4 : index
    %c6_521 = arith.constant 6 : index
    %c0_522 = arith.constant 0 : index
    %357 = vector.load %arg4[%c0_518, %c0_519, %c4_520, %c6_521, %c0_522] : memref<1x4x8x16x16xf32, #tpu.memory_space<vmem>>, vector<1x4x1x1x16xf32>
    %358 = vector.shape_cast %357 : vector<1x4x1x1x16xf32> to vector<4x16xf32>
    %c0_523 = arith.constant 0 : index
    %c0_524 = arith.constant 0 : index
    %c4_525 = arith.constant 4 : index
    %c7_526 = arith.constant 7 : index
    %c0_527 = arith.constant 0 : index
    %359 = vector.load %arg4[%c0_523, %c0_524, %c4_525, %c7_526, %c0_527] : memref<1x4x8x16x16xf32, #tpu.memory_space<vmem>>, vector<1x4x1x1x16xf32>
    %360 = vector.shape_cast %359 : vector<1x4x1x1x16xf32> to vector<4x16xf32>
    %361 = arith.maximumf %358, %360 : vector<4x16xf32>
    %c0_528 = arith.constant 0 : index
    %c0_529 = arith.constant 0 : index
    %c5_530 = arith.constant 5 : index
    %c6_531 = arith.constant 6 : index
    %c0_532 = arith.constant 0 : index
    %362 = vector.load %arg4[%c0_528, %c0_529, %c5_530, %c6_531, %c0_532] : memref<1x4x8x16x16xf32, #tpu.memory_space<vmem>>, vector<1x4x1x1x16xf32>
    %363 = vector.shape_cast %362 : vector<1x4x1x1x16xf32> to vector<4x16xf32>
    %c0_533 = arith.constant 0 : index
    %c0_534 = arith.constant 0 : index
    %c5_535 = arith.constant 5 : index
    %c7_536 = arith.constant 7 : index
    %c0_537 = arith.constant 0 : index
    %364 = vector.load %arg4[%c0_533, %c0_534, %c5_535, %c7_536, %c0_537] : memref<1x4x8x16x16xf32, #tpu.memory_space<vmem>>, vector<1x4x1x1x16xf32>
    %365 = vector.shape_cast %364 : vector<1x4x1x1x16xf32> to vector<4x16xf32>
    %366 = arith.maximumf %363, %365 : vector<4x16xf32>
    %367 = arith.maximumf %361, %366 : vector<4x16xf32>
    %cst_538 = arith.constant dense<0.000000e+00> : vector<4x8xf32>
    %368 = tpu.matmul %367, %6, %cst_538 {dimension_numbers = #tpu.dot_dimension_numbers<[1], [0], [0], [1], [0, 0, 1, 1], [], []>} : vector<4x16xf32>, vector<16x8xf32>, vector<4x8xf32> -> vector<4x8xf32>
    %cst_539 = arith.constant dense<0.000000e+00> : vector<4x8xf32>
    %369 = tpu.matmul %367, %13, %cst_539 {dimension_numbers = #tpu.dot_dimension_numbers<[1], [0], [0], [1], [0, 0, 1, 1], [], []>} : vector<4x16xf32>, vector<16x8xf32>, vector<4x8xf32> -> vector<4x8xf32>
    %370 = arith.maximumf %368, %369 : vector<4x8xf32>
    %cst_540 = arith.constant dense<0.000000e+00> : vector<4x8xf32>
    %371 = tpu.matmul %14, %370, %cst_540 {dimension_numbers = #tpu.dot_dimension_numbers<[1], [0], [0], [1], [0, 0, 1, 1], [], []>} : vector<4x4xf32>, vector<4x8xf32>, vector<4x8xf32> -> vector<4x8xf32>
    %c0_541 = arith.constant 0 : index
    %c0_542 = arith.constant 0 : index
    %c2_543 = arith.constant 2 : index
    %c3_544 = arith.constant 3 : index
    %c0_545 = arith.constant 0 : index
    %372 = vector.load %arg5[%c0_541, %c0_542, %c2_543, %c3_544, %c0_545] : memref<1x4x4x8x8xf32, #tpu.memory_space<vmem>>, vector<1x4x1x1x8xf32>
    %373 = vector.shape_cast %372 : vector<1x4x1x1x8xf32> to vector<4x8xf32>
    %374 = vector.shape_cast %371 : vector<4x8xf32> to vector<1x4x1x1x8xf32>
    tpu.vector_store %arg5[%c0_541, %c0_542, %c2_543, %c3_544, %c0_545], %374 {strides = array<i32>} : memref<1x4x4x8x8xf32, #tpu.memory_space<vmem>>, vector<1x4x1x1x8xf32>,
    %c0_546 = arith.constant 0 : index
    %c0_547 = arith.constant 0 : index
    %c4_548 = arith.constant 4 : index
    %c8_549 = arith.constant 8 : index
    %c0_550 = arith.constant 0 : index
    %375 = vector.load %arg4[%c0_546, %c0_547, %c4_548, %c8_549, %c0_550] : memref<1x4x8x16x16xf32, #tpu.memory_space<vmem>>, vector<1x4x1x1x16xf32>
    %376 = vector.shape_cast %375 : vector<1x4x1x1x16xf32> to vector<4x16xf32>
    %c0_551 = arith.constant 0 : index
    %c0_552 = arith.constant 0 : index
    %c4_553 = arith.constant 4 : index
    %c9_554 = arith.constant 9 : index
    %c0_555 = arith.constant 0 : index
    %377 = vector.load %arg4[%c0_551, %c0_552, %c4_553, %c9_554, %c0_555] : memref<1x4x8x16x16xf32, #tpu.memory_space<vmem>>, vector<1x4x1x1x16xf32>
    %378 = vector.shape_cast %377 : vector<1x4x1x1x16xf32> to vector<4x16xf32>
    %379 = arith.maximumf %376, %378 : vector<4x16xf32>
    %c0_556 = arith.constant 0 : index
    %c0_557 = arith.constant 0 : index
    %c5_558 = arith.constant 5 : index
    %c8_559 = arith.constant 8 : index
    %c0_560 = arith.constant 0 : index
    %380 = vector.load %arg4[%c0_556, %c0_557, %c5_558, %c8_559, %c0_560] : memref<1x4x8x16x16xf32, #tpu.memory_space<vmem>>, vector<1x4x1x1x16xf32>
    %381 = vector.shape_cast %380 : vector<1x4x1x1x16xf32> to vector<4x16xf32>
    %c0_561 = arith.constant 0 : index
    %c0_562 = arith.constant 0 : index
    %c5_563 = arith.constant 5 : index
    %c9_564 = arith.constant 9 : index
    %c0_565 = arith.constant 0 : index
    %382 = vector.load %arg4[%c0_561, %c0_562, %c5_563, %c9_564, %c0_565] : memref<1x4x8x16x16xf32, #tpu.memory_space<vmem>>, vector<1x4x1x1x16xf32>
    %383 = vector.shape_cast %382 : vector<1x4x1x1x16xf32> to vector<4x16xf32>
    %384 = arith.maximumf %381, %383 : vector<4x16xf32>
    %385 = arith.maximumf %379, %384 : vector<4x16xf32>
    %cst_566 = arith.constant dense<0.000000e+00> : vector<4x8xf32>
    %386 = tpu.matmul %385, %6, %cst_566 {dimension_numbers = #tpu.dot_dimension_numbers<[1], [0], [0], [1], [0, 0, 1, 1], [], []>} : vector<4x16xf32>, vector<16x8xf32>, vector<4x8xf32> -> vector<4x8xf32>
    %cst_567 = arith.constant dense<0.000000e+00> : vector<4x8xf32>
    %387 = tpu.matmul %385, %13, %cst_567 {dimension_numbers = #tpu.dot_dimension_numbers<[1], [0], [0], [1], [0, 0, 1, 1], [], []>} : vector<4x16xf32>, vector<16x8xf32>, vector<4x8xf32> -> vector<4x8xf32>
    %388 = arith.maximumf %386, %387 : vector<4x8xf32>
    %cst_568 = arith.constant dense<0.000000e+00> : vector<4x8xf32>
    %389 = tpu.matmul %14, %388, %cst_568 {dimension_numbers = #tpu.dot_dimension_numbers<[1], [0], [0], [1], [0, 0, 1, 1], [], []>} : vector<4x4xf32>, vector<4x8xf32>, vector<4x8xf32> -> vector<4x8xf32>
    %c0_569 = arith.constant 0 : index
    %c0_570 = arith.constant 0 : index
    %c2_571 = arith.constant 2 : index
    %c4_572 = arith.constant 4 : index
    %c0_573 = arith.constant 0 : index
    %390 = vector.load %arg5[%c0_569, %c0_570, %c2_571, %c4_572, %c0_573] : memref<1x4x4x8x8xf32, #tpu.memory_space<vmem>>, vector<1x4x1x1x8xf32>
    %391 = vector.shape_cast %390 : vector<1x4x1x1x8xf32> to vector<4x8xf32>
    %392 = vector.shape_cast %389 : vector<4x8xf32> to vector<1x4x1x1x8xf32>
    tpu.vector_store %arg5[%c0_569, %c0_570, %c2_571, %c4_572, %c0_573], %392 {strides = array<i32>} : memref<1x4x4x8x8xf32, #tpu.memory_space<vmem>>, vector<1x4x1x1x8xf32>,
    %c0_574 = arith.constant 0 : index
    %c0_575 = arith.constant 0 : index
    %c4_576 = arith.constant 4 : index
    %c10_577 = arith.constant 10 : index
    %c0_578 = arith.constant 0 : index
    %393 = vector.load %arg4[%c0_574, %c0_575, %c4_576, %c10_577, %c0_578] : memref<1x4x8x16x16xf32, #tpu.memory_space<vmem>>, vector<1x4x1x1x16xf32>
    %394 = vector.shape_cast %393 : vector<1x4x1x1x16xf32> to vector<4x16xf32>
    %c0_579 = arith.constant 0 : index
    %c0_580 = arith.constant 0 : index
    %c4_581 = arith.constant 4 : index
    %c11_582 = arith.constant 11 : index
    %c0_583 = arith.constant 0 : index
    %395 = vector.load %arg4[%c0_579, %c0_580, %c4_581, %c11_582, %c0_583] : memref<1x4x8x16x16xf32, #tpu.memory_space<vmem>>, vector<1x4x1x1x16xf32>
    %396 = vector.shape_cast %395 : vector<1x4x1x1x16xf32> to vector<4x16xf32>
    %397 = arith.maximumf %394, %396 : vector<4x16xf32>
    %c0_584 = arith.constant 0 : index
    %c0_585 = arith.constant 0 : index
    %c5_586 = arith.constant 5 : index
    %c10_587 = arith.constant 10 : index
    %c0_588 = arith.constant 0 : index
    %398 = vector.load %arg4[%c0_584, %c0_585, %c5_586, %c10_587, %c0_588] : memref<1x4x8x16x16xf32, #tpu.memory_space<vmem>>, vector<1x4x1x1x16xf32>
    %399 = vector.shape_cast %398 : vector<1x4x1x1x16xf32> to vector<4x16xf32>
    %c0_589 = arith.constant 0 : index
    %c0_590 = arith.constant 0 : index
    %c5_591 = arith.constant 5 : index
    %c11_592 = arith.constant 11 : index
    %c0_593 = arith.constant 0 : index
    %400 = vector.load %arg4[%c0_589, %c0_590, %c5_591, %c11_592, %c0_593] : memref<1x4x8x16x16xf32, #tpu.memory_space<vmem>>, vector<1x4x1x1x16xf32>
    %401 = vector.shape_cast %400 : vector<1x4x1x1x16xf32> to vector<4x16xf32>
    %402 = arith.maximumf %399, %401 : vector<4x16xf32>
    %403 = arith.maximumf %397, %402 : vector<4x16xf32>
    %cst_594 = arith.constant dense<0.000000e+00> : vector<4x8xf32>
    %404 = tpu.matmul %403, %6, %cst_594 {dimension_numbers = #tpu.dot_dimension_numbers<[1], [0], [0], [1], [0, 0, 1, 1], [], []>} : vector<4x16xf32>, vector<16x8xf32>, vector<4x8xf32> -> vector<4x8xf32>
    %cst_595 = arith.constant dense<0.000000e+00> : vector<4x8xf32>
    %405 = tpu.matmul %403, %13, %cst_595 {dimension_numbers = #tpu.dot_dimension_numbers<[1], [0], [0], [1], [0, 0, 1, 1], [], []>} : vector<4x16xf32>, vector<16x8xf32>, vector<4x8xf32> -> vector<4x8xf32>
    %406 = arith.maximumf %404, %405 : vector<4x8xf32>
    %cst_596 = arith.constant dense<0.000000e+00> : vector<4x8xf32>
    %407 = tpu.matmul %14, %406, %cst_596 {dimension_numbers = #tpu.dot_dimension_numbers<[1], [0], [0], [1], [0, 0, 1, 1], [], []>} : vector<4x4xf32>, vector<4x8xf32>, vector<4x8xf32> -> vector<4x8xf32>
    %c0_597 = arith.constant 0 : index
    %c0_598 = arith.constant 0 : index
    %c2_599 = arith.constant 2 : index
    %c5_600 = arith.constant 5 : index
    %c0_601 = arith.constant 0 : index
    %408 = vector.load %arg5[%c0_597, %c0_598, %c2_599, %c5_600, %c0_601] : memref<1x4x4x8x8xf32, #tpu.memory_space<vmem>>, vector<1x4x1x1x8xf32>
    %409 = vector.shape_cast %408 : vector<1x4x1x1x8xf32> to vector<4x8xf32>
    %410 = vector.shape_cast %407 : vector<4x8xf32> to vector<1x4x1x1x8xf32>
    tpu.vector_store %arg5[%c0_597, %c0_598, %c2_599, %c5_600, %c0_601], %410 {strides = array<i32>} : memref<1x4x4x8x8xf32, #tpu.memory_space<vmem>>, vector<1x4x1x1x8xf32>,
    %c0_602 = arith.constant 0 : index
    %c0_603 = arith.constant 0 : index
    %c4_604 = arith.constant 4 : index
    %c12_605 = arith.constant 12 : index
    %c0_606 = arith.constant 0 : index
    %411 = vector.load %arg4[%c0_602, %c0_603, %c4_604, %c12_605, %c0_606] : memref<1x4x8x16x16xf32, #tpu.memory_space<vmem>>, vector<1x4x1x1x16xf32>
    %412 = vector.shape_cast %411 : vector<1x4x1x1x16xf32> to vector<4x16xf32>
    %c0_607 = arith.constant 0 : index
    %c0_608 = arith.constant 0 : index
    %c4_609 = arith.constant 4 : index
    %c13_610 = arith.constant 13 : index
    %c0_611 = arith.constant 0 : index
    %413 = vector.load %arg4[%c0_607, %c0_608, %c4_609, %c13_610, %c0_611] : memref<1x4x8x16x16xf32, #tpu.memory_space<vmem>>, vector<1x4x1x1x16xf32>
    %414 = vector.shape_cast %413 : vector<1x4x1x1x16xf32> to vector<4x16xf32>
    %415 = arith.maximumf %412, %414 : vector<4x16xf32>
    %c0_612 = arith.constant 0 : index
    %c0_613 = arith.constant 0 : index
    %c5_614 = arith.constant 5 : index
    %c12_615 = arith.constant 12 : index
    %c0_616 = arith.constant 0 : index
    %416 = vector.load %arg4[%c0_612, %c0_613, %c5_614, %c12_615, %c0_616] : memref<1x4x8x16x16xf32, #tpu.memory_space<vmem>>, vector<1x4x1x1x16xf32>
    %417 = vector.shape_cast %416 : vector<1x4x1x1x16xf32> to vector<4x16xf32>
    %c0_617 = arith.constant 0 : index
    %c0_618 = arith.constant 0 : index
    %c5_619 = arith.constant 5 : index
    %c13_620 = arith.constant 13 : index
    %c0_621 = arith.constant 0 : index
    %418 = vector.load %arg4[%c0_617, %c0_618, %c5_619, %c13_620, %c0_621] : memref<1x4x8x16x16xf32, #tpu.memory_space<vmem>>, vector<1x4x1x1x16xf32>
    %419 = vector.shape_cast %418 : vector<1x4x1x1x16xf32> to vector<4x16xf32>
    %420 = arith.maximumf %417, %419 : vector<4x16xf32>
    %421 = arith.maximumf %415, %420 : vector<4x16xf32>
    %cst_622 = arith.constant dense<0.000000e+00> : vector<4x8xf32>
    %422 = tpu.matmul %421, %6, %cst_622 {dimension_numbers = #tpu.dot_dimension_numbers<[1], [0], [0], [1], [0, 0, 1, 1], [], []>} : vector<4x16xf32>, vector<16x8xf32>, vector<4x8xf32> -> vector<4x8xf32>
    %cst_623 = arith.constant dense<0.000000e+00> : vector<4x8xf32>
    %423 = tpu.matmul %421, %13, %cst_623 {dimension_numbers = #tpu.dot_dimension_numbers<[1], [0], [0], [1], [0, 0, 1, 1], [], []>} : vector<4x16xf32>, vector<16x8xf32>, vector<4x8xf32> -> vector<4x8xf32>
    %424 = arith.maximumf %422, %423 : vector<4x8xf32>
    %cst_624 = arith.constant dense<0.000000e+00> : vector<4x8xf32>
    %425 = tpu.matmul %14, %424, %cst_624 {dimension_numbers = #tpu.dot_dimension_numbers<[1], [0], [0], [1], [0, 0, 1, 1], [], []>} : vector<4x4xf32>, vector<4x8xf32>, vector<4x8xf32> -> vector<4x8xf32>
    %c0_625 = arith.constant 0 : index
    %c0_626 = arith.constant 0 : index
    %c2_627 = arith.constant 2 : index
    %c6_628 = arith.constant 6 : index
    %c0_629 = arith.constant 0 : index
    %426 = vector.load %arg5[%c0_625, %c0_626, %c2_627, %c6_628, %c0_629] : memref<1x4x4x8x8xf32, #tpu.memory_space<vmem>>, vector<1x4x1x1x8xf32>
    %427 = vector.shape_cast %426 : vector<1x4x1x1x8xf32> to vector<4x8xf32>
    %428 = vector.shape_cast %425 : vector<4x8xf32> to vector<1x4x1x1x8xf32>
    tpu.vector_store %arg5[%c0_625, %c0_626, %c2_627, %c6_628, %c0_629], %428 {strides = array<i32>} : memref<1x4x4x8x8xf32, #tpu.memory_space<vmem>>, vector<1x4x1x1x8xf32>,
    %c0_630 = arith.constant 0 : index
    %c0_631 = arith.constant 0 : index
    %c4_632 = arith.constant 4 : index
    %c14_633 = arith.constant 14 : index
    %c0_634 = arith.constant 0 : index
    %429 = vector.load %arg4[%c0_630, %c0_631, %c4_632, %c14_633, %c0_634] : memref<1x4x8x16x16xf32, #tpu.memory_space<vmem>>, vector<1x4x1x1x16xf32>
    %430 = vector.shape_cast %429 : vector<1x4x1x1x16xf32> to vector<4x16xf32>
    %c0_635 = arith.constant 0 : index
    %c0_636 = arith.constant 0 : index
    %c4_637 = arith.constant 4 : index
    %c15_638 = arith.constant 15 : index
    %c0_639 = arith.constant 0 : index
    %431 = vector.load %arg4[%c0_635, %c0_636, %c4_637, %c15_638, %c0_639] : memref<1x4x8x16x16xf32, #tpu.memory_space<vmem>>, vector<1x4x1x1x16xf32>
    %432 = vector.shape_cast %431 : vector<1x4x1x1x16xf32> to vector<4x16xf32>
    %433 = arith.maximumf %430, %432 : vector<4x16xf32>
    %c0_640 = arith.constant 0 : index
    %c0_641 = arith.constant 0 : index
    %c5_642 = arith.constant 5 : index
    %c14_643 = arith.constant 14 : index
    %c0_644 = arith.constant 0 : index
    %434 = vector.load %arg4[%c0_640, %c0_641, %c5_642, %c14_643, %c0_644] : memref<1x4x8x16x16xf32, #tpu.memory_space<vmem>>, vector<1x4x1x1x16xf32>
    %435 = vector.shape_cast %434 : vector<1x4x1x1x16xf32> to vector<4x16xf32>
    %c0_645 = arith.constant 0 : index
    %c0_646 = arith.constant 0 : index
    %c5_647 = arith.constant 5 : index
    %c15_648 = arith.constant 15 : index
    %c0_649 = arith.constant 0 : index
    %436 = vector.load %arg4[%c0_645, %c0_646, %c5_647, %c15_648, %c0_649] : memref<1x4x8x16x16xf32, #tpu.memory_space<vmem>>, vector<1x4x1x1x16xf32>
    %437 = vector.shape_cast %436 : vector<1x4x1x1x16xf32> to vector<4x16xf32>
    %438 = arith.maximumf %435, %437 : vector<4x16xf32>
    %439 = arith.maximumf %433, %438 : vector<4x16xf32>
    %cst_650 = arith.constant dense<0.000000e+00> : vector<4x8xf32>
    %440 = tpu.matmul %439, %6, %cst_650 {dimension_numbers = #tpu.dot_dimension_numbers<[1], [0], [0], [1], [0, 0, 1, 1], [], []>} : vector<4x16xf32>, vector<16x8xf32>, vector<4x8xf32> -> vector<4x8xf32>
    %cst_651 = arith.constant dense<0.000000e+00> : vector<4x8xf32>
    %441 = tpu.matmul %439, %13, %cst_651 {dimension_numbers = #tpu.dot_dimension_numbers<[1], [0], [0], [1], [0, 0, 1, 1], [], []>} : vector<4x16xf32>, vector<16x8xf32>, vector<4x8xf32> -> vector<4x8xf32>
    %442 = arith.maximumf %440, %441 : vector<4x8xf32>
    %cst_652 = arith.constant dense<0.000000e+00> : vector<4x8xf32>
    %443 = tpu.matmul %14, %442, %cst_652 {dimension_numbers = #tpu.dot_dimension_numbers<[1], [0], [0], [1], [0, 0, 1, 1], [], []>} : vector<4x4xf32>, vector<4x8xf32>, vector<4x8xf32> -> vector<4x8xf32>
    %c0_653 = arith.constant 0 : index
    %c0_654 = arith.constant 0 : index
    %c2_655 = arith.constant 2 : index
    %c7_656 = arith.constant 7 : index
    %c0_657 = arith.constant 0 : index
    %444 = vector.load %arg5[%c0_653, %c0_654, %c2_655, %c7_656, %c0_657] : memref<1x4x4x8x8xf32, #tpu.memory_space<vmem>>, vector<1x4x1x1x8xf32>
    %445 = vector.shape_cast %444 : vector<1x4x1x1x8xf32> to vector<4x8xf32>
    %446 = vector.shape_cast %443 : vector<4x8xf32> to vector<1x4x1x1x8xf32>
    tpu.vector_store %arg5[%c0_653, %c0_654, %c2_655, %c7_656, %c0_657], %446 {strides = array<i32>} : memref<1x4x4x8x8xf32, #tpu.memory_space<vmem>>, vector<1x4x1x1x8xf32>,
    %c0_658 = arith.constant 0 : index
    %c0_659 = arith.constant 0 : index
    %c6_660 = arith.constant 6 : index
    %c0_661 = arith.constant 0 : index
    %c0_662 = arith.constant 0 : index
    %447 = vector.load %arg4[%c0_658, %c0_659, %c6_660, %c0_661, %c0_662] : memref<1x4x8x16x16xf32, #tpu.memory_space<vmem>>, vector<1x4x1x1x16xf32>
    %448 = vector.shape_cast %447 : vector<1x4x1x1x16xf32> to vector<4x16xf32>
    %c0_663 = arith.constant 0 : index
    %c0_664 = arith.constant 0 : index
    %c6_665 = arith.constant 6 : index
    %c1_666 = arith.constant 1 : index
    %c0_667 = arith.constant 0 : index
    %449 = vector.load %arg4[%c0_663, %c0_664, %c6_665, %c1_666, %c0_667] : memref<1x4x8x16x16xf32, #tpu.memory_space<vmem>>, vector<1x4x1x1x16xf32>
    %450 = vector.shape_cast %449 : vector<1x4x1x1x16xf32> to vector<4x16xf32>
    %451 = arith.maximumf %448, %450 : vector<4x16xf32>
    %c0_668 = arith.constant 0 : index
    %c0_669 = arith.constant 0 : index
    %c7_670 = arith.constant 7 : index
    %c0_671 = arith.constant 0 : index
    %c0_672 = arith.constant 0 : index
    %452 = vector.load %arg4[%c0_668, %c0_669, %c7_670, %c0_671, %c0_672] : memref<1x4x8x16x16xf32, #tpu.memory_space<vmem>>, vector<1x4x1x1x16xf32>
    %453 = vector.shape_cast %452 : vector<1x4x1x1x16xf32> to vector<4x16xf32>
    %c0_673 = arith.constant 0 : index
    %c0_674 = arith.constant 0 : index
    %c7_675 = arith.constant 7 : index
    %c1_676 = arith.constant 1 : index
    %c0_677 = arith.constant 0 : index
    %454 = vector.load %arg4[%c0_673, %c0_674, %c7_675, %c1_676, %c0_677] : memref<1x4x8x16x16xf32, #tpu.memory_space<vmem>>, vector<1x4x1x1x16xf32>
    %455 = vector.shape_cast %454 : vector<1x4x1x1x16xf32> to vector<4x16xf32>
    %456 = arith.maximumf %453, %455 : vector<4x16xf32>
    %457 = arith.maximumf %451, %456 : vector<4x16xf32>
    %cst_678 = arith.constant dense<0.000000e+00> : vector<4x8xf32>
    %458 = tpu.matmul %457, %6, %cst_678 {dimension_numbers = #tpu.dot_dimension_numbers<[1], [0], [0], [1], [0, 0, 1, 1], [], []>} : vector<4x16xf32>, vector<16x8xf32>, vector<4x8xf32> -> vector<4x8xf32>
    %cst_679 = arith.constant dense<0.000000e+00> : vector<4x8xf32>
    %459 = tpu.matmul %457, %13, %cst_679 {dimension_numbers = #tpu.dot_dimension_numbers<[1], [0], [0], [1], [0, 0, 1, 1], [], []>} : vector<4x16xf32>, vector<16x8xf32>, vector<4x8xf32> -> vector<4x8xf32>
    %460 = arith.maximumf %458, %459 : vector<4x8xf32>
    %cst_680 = arith.constant dense<0.000000e+00> : vector<4x8xf32>
    %461 = tpu.matmul %14, %460, %cst_680 {dimension_numbers = #tpu.dot_dimension_numbers<[1], [0], [0], [1], [0, 0, 1, 1], [], []>} : vector<4x4xf32>, vector<4x8xf32>, vector<4x8xf32> -> vector<4x8xf32>
    %c0_681 = arith.constant 0 : index
    %c0_682 = arith.constant 0 : index
    %c3_683 = arith.constant 3 : index
    %c0_684 = arith.constant 0 : index
    %c0_685 = arith.constant 0 : index
    %462 = vector.load %arg5[%c0_681, %c0_682, %c3_683, %c0_684, %c0_685] : memref<1x4x4x8x8xf32, #tpu.memory_space<vmem>>, vector<1x4x1x1x8xf32>
    %463 = vector.shape_cast %462 : vector<1x4x1x1x8xf32> to vector<4x8xf32>
    %464 = vector.shape_cast %461 : vector<4x8xf32> to vector<1x4x1x1x8xf32>
    tpu.vector_store %arg5[%c0_681, %c0_682, %c3_683, %c0_684, %c0_685], %464 {strides = array<i32>} : memref<1x4x4x8x8xf32, #tpu.memory_space<vmem>>, vector<1x4x1x1x8xf32>,
    %c0_686 = arith.constant 0 : index
    %c0_687 = arith.constant 0 : index
    %c6_688 = arith.constant 6 : index
    %c2_689 = arith.constant 2 : index
    %c0_690 = arith.constant 0 : index
    %465 = vector.load %arg4[%c0_686, %c0_687, %c6_688, %c2_689, %c0_690] : memref<1x4x8x16x16xf32, #tpu.memory_space<vmem>>, vector<1x4x1x1x16xf32>
    %466 = vector.shape_cast %465 : vector<1x4x1x1x16xf32> to vector<4x16xf32>
    %c0_691 = arith.constant 0 : index
    %c0_692 = arith.constant 0 : index
    %c6_693 = arith.constant 6 : index
    %c3_694 = arith.constant 3 : index
    %c0_695 = arith.constant 0 : index
    %467 = vector.load %arg4[%c0_691, %c0_692, %c6_693, %c3_694, %c0_695] : memref<1x4x8x16x16xf32, #tpu.memory_space<vmem>>, vector<1x4x1x1x16xf32>
    %468 = vector.shape_cast %467 : vector<1x4x1x1x16xf32> to vector<4x16xf32>
    %469 = arith.maximumf %466, %468 : vector<4x16xf32>
    %c0_696 = arith.constant 0 : index
    %c0_697 = arith.constant 0 : index
    %c7_698 = arith.constant 7 : index
    %c2_699 = arith.constant 2 : index
    %c0_700 = arith.constant 0 : index
    %470 = vector.load %arg4[%c0_696, %c0_697, %c7_698, %c2_699, %c0_700] : memref<1x4x8x16x16xf32, #tpu.memory_space<vmem>>, vector<1x4x1x1x16xf32>
    %471 = vector.shape_cast %470 : vector<1x4x1x1x16xf32> to vector<4x16xf32>
    %c0_701 = arith.constant 0 : index
    %c0_702 = arith.constant 0 : index
    %c7_703 = arith.constant 7 : index
    %c3_704 = arith.constant 3 : index
    %c0_705 = arith.constant 0 : index
    %472 = vector.load %arg4[%c0_701, %c0_702, %c7_703, %c3_704, %c0_705] : memref<1x4x8x16x16xf32, #tpu.memory_space<vmem>>, vector<1x4x1x1x16xf32>
    %473 = vector.shape_cast %472 : vector<1x4x1x1x16xf32> to vector<4x16xf32>
    %474 = arith.maximumf %471, %473 : vector<4x16xf32>
    %475 = arith.maximumf %469, %474 : vector<4x16xf32>
    %cst_706 = arith.constant dense<0.000000e+00> : vector<4x8xf32>
    %476 = tpu.matmul %475, %6, %cst_706 {dimension_numbers = #tpu.dot_dimension_numbers<[1], [0], [0], [1], [0, 0, 1, 1], [], []>} : vector<4x16xf32>, vector<16x8xf32>, vector<4x8xf32> -> vector<4x8xf32>
    %cst_707 = arith.constant dense<0.000000e+00> : vector<4x8xf32>
    %477 = tpu.matmul %475, %13, %cst_707 {dimension_numbers = #tpu.dot_dimension_numbers<[1], [0], [0], [1], [0, 0, 1, 1], [], []>} : vector<4x16xf32>, vector<16x8xf32>, vector<4x8xf32> -> vector<4x8xf32>
    %478 = arith.maximumf %476, %477 : vector<4x8xf32>
    %cst_708 = arith.constant dense<0.000000e+00> : vector<4x8xf32>
    %479 = tpu.matmul %14, %478, %cst_708 {dimension_numbers = #tpu.dot_dimension_numbers<[1], [0], [0], [1], [0, 0, 1, 1], [], []>} : vector<4x4xf32>, vector<4x8xf32>, vector<4x8xf32> -> vector<4x8xf32>
    %c0_709 = arith.constant 0 : index
    %c0_710 = arith.constant 0 : index
    %c3_711 = arith.constant 3 : index
    %c1_712 = arith.constant 1 : index
    %c0_713 = arith.constant 0 : index
    %480 = vector.load %arg5[%c0_709, %c0_710, %c3_711, %c1_712, %c0_713] : memref<1x4x4x8x8xf32, #tpu.memory_space<vmem>>, vector<1x4x1x1x8xf32>
    %481 = vector.shape_cast %480 : vector<1x4x1x1x8xf32> to vector<4x8xf32>
    %482 = vector.shape_cast %479 : vector<4x8xf32> to vector<1x4x1x1x8xf32>
    tpu.vector_store %arg5[%c0_709, %c0_710, %c3_711, %c1_712, %c0_713], %482 {strides = array<i32>} : memref<1x4x4x8x8xf32, #tpu.memory_space<vmem>>, vector<1x4x1x1x8xf32>,
    %c0_714 = arith.constant 0 : index
    %c0_715 = arith.constant 0 : index
    %c6_716 = arith.constant 6 : index
    %c4_717 = arith.constant 4 : index
    %c0_718 = arith.constant 0 : index
    %483 = vector.load %arg4[%c0_714, %c0_715, %c6_716, %c4_717, %c0_718] : memref<1x4x8x16x16xf32, #tpu.memory_space<vmem>>, vector<1x4x1x1x16xf32>
    %484 = vector.shape_cast %483 : vector<1x4x1x1x16xf32> to vector<4x16xf32>
    %c0_719 = arith.constant 0 : index
    %c0_720 = arith.constant 0 : index
    %c6_721 = arith.constant 6 : index
    %c5_722 = arith.constant 5 : index
    %c0_723 = arith.constant 0 : index
    %485 = vector.load %arg4[%c0_719, %c0_720, %c6_721, %c5_722, %c0_723] : memref<1x4x8x16x16xf32, #tpu.memory_space<vmem>>, vector<1x4x1x1x16xf32>
    %486 = vector.shape_cast %485 : vector<1x4x1x1x16xf32> to vector<4x16xf32>
    %487 = arith.maximumf %484, %486 : vector<4x16xf32>
    %c0_724 = arith.constant 0 : index
    %c0_725 = arith.constant 0 : index
    %c7_726 = arith.constant 7 : index
    %c4_727 = arith.constant 4 : index
    %c0_728 = arith.constant 0 : index
    %488 = vector.load %arg4[%c0_724, %c0_725, %c7_726, %c4_727, %c0_728] : memref<1x4x8x16x16xf32, #tpu.memory_space<vmem>>, vector<1x4x1x1x16xf32>
    %489 = vector.shape_cast %488 : vector<1x4x1x1x16xf32> to vector<4x16xf32>
    %c0_729 = arith.constant 0 : index
    %c0_730 = arith.constant 0 : index
    %c7_731 = arith.constant 7 : index
    %c5_732 = arith.constant 5 : index
    %c0_733 = arith.constant 0 : index
    %490 = vector.load %arg4[%c0_729, %c0_730, %c7_731, %c5_732, %c0_733] : memref<1x4x8x16x16xf32, #tpu.memory_space<vmem>>, vector<1x4x1x1x16xf32>
    %491 = vector.shape_cast %490 : vector<1x4x1x1x16xf32> to vector<4x16xf32>
    %492 = arith.maximumf %489, %491 : vector<4x16xf32>
    %493 = arith.maximumf %487, %492 : vector<4x16xf32>
    %cst_734 = arith.constant dense<0.000000e+00> : vector<4x8xf32>
    %494 = tpu.matmul %493, %6, %cst_734 {dimension_numbers = #tpu.dot_dimension_numbers<[1], [0], [0], [1], [0, 0, 1, 1], [], []>} : vector<4x16xf32>, vector<16x8xf32>, vector<4x8xf32> -> vector<4x8xf32>
    %cst_735 = arith.constant dense<0.000000e+00> : vector<4x8xf32>
    %495 = tpu.matmul %493, %13, %cst_735 {dimension_numbers = #tpu.dot_dimension_numbers<[1], [0], [0], [1], [0, 0, 1, 1], [], []>} : vector<4x16xf32>, vector<16x8xf32>, vector<4x8xf32> -> vector<4x8xf32>
    %496 = arith.maximumf %494, %495 : vector<4x8xf32>
    %cst_736 = arith.constant dense<0.000000e+00> : vector<4x8xf32>
    %497 = tpu.matmul %14, %496, %cst_736 {dimension_numbers = #tpu.dot_dimension_numbers<[1], [0], [0], [1], [0, 0, 1, 1], [], []>} : vector<4x4xf32>, vector<4x8xf32>, vector<4x8xf32> -> vector<4x8xf32>
    %c0_737 = arith.constant 0 : index
    %c0_738 = arith.constant 0 : index
    %c3_739 = arith.constant 3 : index
    %c2_740 = arith.constant 2 : index
    %c0_741 = arith.constant 0 : index
    %498 = vector.load %arg5[%c0_737, %c0_738, %c3_739, %c2_740, %c0_741] : memref<1x4x4x8x8xf32, #tpu.memory_space<vmem>>, vector<1x4x1x1x8xf32>
    %499 = vector.shape_cast %498 : vector<1x4x1x1x8xf32> to vector<4x8xf32>
    %500 = vector.shape_cast %497 : vector<4x8xf32> to vector<1x4x1x1x8xf32>
    tpu.vector_store %arg5[%c0_737, %c0_738, %c3_739, %c2_740, %c0_741], %500 {strides = array<i32>} : memref<1x4x4x8x8xf32, #tpu.memory_space<vmem>>, vector<1x4x1x1x8xf32>,
    %c0_742 = arith.constant 0 : index
    %c0_743 = arith.constant 0 : index
    %c6_744 = arith.constant 6 : index
    %c6_745 = arith.constant 6 : index
    %c0_746 = arith.constant 0 : index
    %501 = vector.load %arg4[%c0_742, %c0_743, %c6_744, %c6_745, %c0_746] : memref<1x4x8x16x16xf32, #tpu.memory_space<vmem>>, vector<1x4x1x1x16xf32>
    %502 = vector.shape_cast %501 : vector<1x4x1x1x16xf32> to vector<4x16xf32>
    %c0_747 = arith.constant 0 : index
    %c0_748 = arith.constant 0 : index
    %c6_749 = arith.constant 6 : index
    %c7_750 = arith.constant 7 : index
    %c0_751 = arith.constant 0 : index
    %503 = vector.load %arg4[%c0_747, %c0_748, %c6_749, %c7_750, %c0_751] : memref<1x4x8x16x16xf32, #tpu.memory_space<vmem>>, vector<1x4x1x1x16xf32>
    %504 = vector.shape_cast %503 : vector<1x4x1x1x16xf32> to vector<4x16xf32>
    %505 = arith.maximumf %502, %504 : vector<4x16xf32>
    %c0_752 = arith.constant 0 : index
    %c0_753 = arith.constant 0 : index
    %c7_754 = arith.constant 7 : index
    %c6_755 = arith.constant 6 : index
    %c0_756 = arith.constant 0 : index
    %506 = vector.load %arg4[%c0_752, %c0_753, %c7_754, %c6_755, %c0_756] : memref<1x4x8x16x16xf32, #tpu.memory_space<vmem>>, vector<1x4x1x1x16xf32>
    %507 = vector.shape_cast %506 : vector<1x4x1x1x16xf32> to vector<4x16xf32>
    %c0_757 = arith.constant 0 : index
    %c0_758 = arith.constant 0 : index
    %c7_759 = arith.constant 7 : index
    %c7_760 = arith.constant 7 : index
    %c0_761 = arith.constant 0 : index
    %508 = vector.load %arg4[%c0_757, %c0_758, %c7_759, %c7_760, %c0_761] : memref<1x4x8x16x16xf32, #tpu.memory_space<vmem>>, vector<1x4x1x1x16xf32>
    %509 = vector.shape_cast %508 : vector<1x4x1x1x16xf32> to vector<4x16xf32>
    %510 = arith.maximumf %507, %509 : vector<4x16xf32>
    %511 = arith.maximumf %505, %510 : vector<4x16xf32>
    %cst_762 = arith.constant dense<0.000000e+00> : vector<4x8xf32>
    %512 = tpu.matmul %511, %6, %cst_762 {dimension_numbers = #tpu.dot_dimension_numbers<[1], [0], [0], [1], [0, 0, 1, 1], [], []>} : vector<4x16xf32>, vector<16x8xf32>, vector<4x8xf32> -> vector<4x8xf32>
    %cst_763 = arith.constant dense<0.000000e+00> : vector<4x8xf32>
    %513 = tpu.matmul %511, %13, %cst_763 {dimension_numbers = #tpu.dot_dimension_numbers<[1], [0], [0], [1], [0, 0, 1, 1], [], []>} : vector<4x16xf32>, vector<16x8xf32>, vector<4x8xf32> -> vector<4x8xf32>
    %514 = arith.maximumf %512, %513 : vector<4x8xf32>
    %cst_764 = arith.constant dense<0.000000e+00> : vector<4x8xf32>
    %515 = tpu.matmul %14, %514, %cst_764 {dimension_numbers = #tpu.dot_dimension_numbers<[1], [0], [0], [1], [0, 0, 1, 1], [], []>} : vector<4x4xf32>, vector<4x8xf32>, vector<4x8xf32> -> vector<4x8xf32>
    %c0_765 = arith.constant 0 : index
    %c0_766 = arith.constant 0 : index
    %c3_767 = arith.constant 3 : index
    %c3_768 = arith.constant 3 : index
    %c0_769 = arith.constant 0 : index
    %516 = vector.load %arg5[%c0_765, %c0_766, %c3_767, %c3_768, %c0_769] : memref<1x4x4x8x8xf32, #tpu.memory_space<vmem>>, vector<1x4x1x1x8xf32>
    %517 = vector.shape_cast %516 : vector<1x4x1x1x8xf32> to vector<4x8xf32>
    %518 = vector.shape_cast %515 : vector<4x8xf32> to vector<1x4x1x1x8xf32>
    tpu.vector_store %arg5[%c0_765, %c0_766, %c3_767, %c3_768, %c0_769], %518 {strides = array<i32>} : memref<1x4x4x8x8xf32, #tpu.memory_space<vmem>>, vector<1x4x1x1x8xf32>,
    %c0_770 = arith.constant 0 : index
    %c0_771 = arith.constant 0 : index
    %c6_772 = arith.constant 6 : index
    %c8_773 = arith.constant 8 : index
    %c0_774 = arith.constant 0 : index
    %519 = vector.load %arg4[%c0_770, %c0_771, %c6_772, %c8_773, %c0_774] : memref<1x4x8x16x16xf32, #tpu.memory_space<vmem>>, vector<1x4x1x1x16xf32>
    %520 = vector.shape_cast %519 : vector<1x4x1x1x16xf32> to vector<4x16xf32>
    %c0_775 = arith.constant 0 : index
    %c0_776 = arith.constant 0 : index
    %c6_777 = arith.constant 6 : index
    %c9_778 = arith.constant 9 : index
    %c0_779 = arith.constant 0 : index
    %521 = vector.load %arg4[%c0_775, %c0_776, %c6_777, %c9_778, %c0_779] : memref<1x4x8x16x16xf32, #tpu.memory_space<vmem>>, vector<1x4x1x1x16xf32>
    %522 = vector.shape_cast %521 : vector<1x4x1x1x16xf32> to vector<4x16xf32>
    %523 = arith.maximumf %520, %522 : vector<4x16xf32>
    %c0_780 = arith.constant 0 : index
    %c0_781 = arith.constant 0 : index
    %c7_782 = arith.constant 7 : index
    %c8_783 = arith.constant 8 : index
    %c0_784 = arith.constant 0 : index
    %524 = vector.load %arg4[%c0_780, %c0_781, %c7_782, %c8_783, %c0_784] : memref<1x4x8x16x16xf32, #tpu.memory_space<vmem>>, vector<1x4x1x1x16xf32>
    %525 = vector.shape_cast %524 : vector<1x4x1x1x16xf32> to vector<4x16xf32>
    %c0_785 = arith.constant 0 : index
    %c0_786 = arith.constant 0 : index
    %c7_787 = arith.constant 7 : index
    %c9_788 = arith.constant 9 : index
    %c0_789 = arith.constant 0 : index
    %526 = vector.load %arg4[%c0_785, %c0_786, %c7_787, %c9_788, %c0_789] : memref<1x4x8x16x16xf32, #tpu.memory_space<vmem>>, vector<1x4x1x1x16xf32>
    %527 = vector.shape_cast %526 : vector<1x4x1x1x16xf32> to vector<4x16xf32>
    %528 = arith.maximumf %525, %527 : vector<4x16xf32>
    %529 = arith.maximumf %523, %528 : vector<4x16xf32>
    %cst_790 = arith.constant dense<0.000000e+00> : vector<4x8xf32>
    %530 = tpu.matmul %529, %6, %cst_790 {dimension_numbers = #tpu.dot_dimension_numbers<[1], [0], [0], [1], [0, 0, 1, 1], [], []>} : vector<4x16xf32>, vector<16x8xf32>, vector<4x8xf32> -> vector<4x8xf32>
    %cst_791 = arith.constant dense<0.000000e+00> : vector<4x8xf32>
    %531 = tpu.matmul %529, %13, %cst_791 {dimension_numbers = #tpu.dot_dimension_numbers<[1], [0], [0], [1], [0, 0, 1, 1], [], []>} : vector<4x16xf32>, vector<16x8xf32>, vector<4x8xf32> -> vector<4x8xf32>
    %532 = arith.maximumf %530, %531 : vector<4x8xf32>
    %cst_792 = arith.constant dense<0.000000e+00> : vector<4x8xf32>
    %533 = tpu.matmul %14, %532, %cst_792 {dimension_numbers = #tpu.dot_dimension_numbers<[1], [0], [0], [1], [0, 0, 1, 1], [], []>} : vector<4x4xf32>, vector<4x8xf32>, vector<4x8xf32> -> vector<4x8xf32>
    %c0_793 = arith.constant 0 : index
    %c0_794 = arith.constant 0 : index
    %c3_795 = arith.constant 3 : index
    %c4_796 = arith.constant 4 : index
    %c0_797 = arith.constant 0 : index
    %534 = vector.load %arg5[%c0_793, %c0_794, %c3_795, %c4_796, %c0_797] : memref<1x4x4x8x8xf32, #tpu.memory_space<vmem>>, vector<1x4x1x1x8xf32>
    %535 = vector.shape_cast %534 : vector<1x4x1x1x8xf32> to vector<4x8xf32>
    %536 = vector.shape_cast %533 : vector<4x8xf32> to vector<1x4x1x1x8xf32>
    tpu.vector_store %arg5[%c0_793, %c0_794, %c3_795, %c4_796, %c0_797], %536 {strides = array<i32>} : memref<1x4x4x8x8xf32, #tpu.memory_space<vmem>>, vector<1x4x1x1x8xf32>,
    %c0_798 = arith.constant 0 : index
    %c0_799 = arith.constant 0 : index
    %c6_800 = arith.constant 6 : index
    %c10_801 = arith.constant 10 : index
    %c0_802 = arith.constant 0 : index
    %537 = vector.load %arg4[%c0_798, %c0_799, %c6_800, %c10_801, %c0_802] : memref<1x4x8x16x16xf32, #tpu.memory_space<vmem>>, vector<1x4x1x1x16xf32>
    %538 = vector.shape_cast %537 : vector<1x4x1x1x16xf32> to vector<4x16xf32>
    %c0_803 = arith.constant 0 : index
    %c0_804 = arith.constant 0 : index
    %c6_805 = arith.constant 6 : index
    %c11_806 = arith.constant 11 : index
    %c0_807 = arith.constant 0 : index
    %539 = vector.load %arg4[%c0_803, %c0_804, %c6_805, %c11_806, %c0_807] : memref<1x4x8x16x16xf32, #tpu.memory_space<vmem>>, vector<1x4x1x1x16xf32>
    %540 = vector.shape_cast %539 : vector<1x4x1x1x16xf32> to vector<4x16xf32>
    %541 = arith.maximumf %538, %540 : vector<4x16xf32>
    %c0_808 = arith.constant 0 : index
    %c0_809 = arith.constant 0 : index
    %c7_810 = arith.constant 7 : index
    %c10_811 = arith.constant 10 : index
    %c0_812 = arith.constant 0 : index
    %542 = vector.load %arg4[%c0_808, %c0_809, %c7_810, %c10_811, %c0_812] : memref<1x4x8x16x16xf32, #tpu.memory_space<vmem>>, vector<1x4x1x1x16xf32>
    %543 = vector.shape_cast %542 : vector<1x4x1x1x16xf32> to vector<4x16xf32>
    %c0_813 = arith.constant 0 : index
    %c0_814 = arith.constant 0 : index
    %c7_815 = arith.constant 7 : index
    %c11_816 = arith.constant 11 : index
    %c0_817 = arith.constant 0 : index
    %544 = vector.load %arg4[%c0_813, %c0_814, %c7_815, %c11_816, %c0_817] : memref<1x4x8x16x16xf32, #tpu.memory_space<vmem>>, vector<1x4x1x1x16xf32>
    %545 = vector.shape_cast %544 : vector<1x4x1x1x16xf32> to vector<4x16xf32>
    %546 = arith.maximumf %543, %545 : vector<4x16xf32>
    %547 = arith.maximumf %541, %546 : vector<4x16xf32>
    %cst_818 = arith.constant dense<0.000000e+00> : vector<4x8xf32>
    %548 = tpu.matmul %547, %6, %cst_818 {dimension_numbers = #tpu.dot_dimension_numbers<[1], [0], [0], [1], [0, 0, 1, 1], [], []>} : vector<4x16xf32>, vector<16x8xf32>, vector<4x8xf32> -> vector<4x8xf32>
    %cst_819 = arith.constant dense<0.000000e+00> : vector<4x8xf32>
    %549 = tpu.matmul %547, %13, %cst_819 {dimension_numbers = #tpu.dot_dimension_numbers<[1], [0], [0], [1], [0, 0, 1, 1], [], []>} : vector<4x16xf32>, vector<16x8xf32>, vector<4x8xf32> -> vector<4x8xf32>
    %550 = arith.maximumf %548, %549 : vector<4x8xf32>
    %cst_820 = arith.constant dense<0.000000e+00> : vector<4x8xf32>
    %551 = tpu.matmul %14, %550, %cst_820 {dimension_numbers = #tpu.dot_dimension_numbers<[1], [0], [0], [1], [0, 0, 1, 1], [], []>} : vector<4x4xf32>, vector<4x8xf32>, vector<4x8xf32> -> vector<4x8xf32>
    %c0_821 = arith.constant 0 : index
    %c0_822 = arith.constant 0 : index
    %c3_823 = arith.constant 3 : index
    %c5_824 = arith.constant 5 : index
    %c0_825 = arith.constant 0 : index
    %552 = vector.load %arg5[%c0_821, %c0_822, %c3_823, %c5_824, %c0_825] : memref<1x4x4x8x8xf32, #tpu.memory_space<vmem>>, vector<1x4x1x1x8xf32>
    %553 = vector.shape_cast %552 : vector<1x4x1x1x8xf32> to vector<4x8xf32>
    %554 = vector.shape_cast %551 : vector<4x8xf32> to vector<1x4x1x1x8xf32>
    tpu.vector_store %arg5[%c0_821, %c0_822, %c3_823, %c5_824, %c0_825], %554 {strides = array<i32>} : memref<1x4x4x8x8xf32, #tpu.memory_space<vmem>>, vector<1x4x1x1x8xf32>,
    %c0_826 = arith.constant 0 : index
    %c0_827 = arith.constant 0 : index
    %c6_828 = arith.constant 6 : index
    %c12_829 = arith.constant 12 : index
    %c0_830 = arith.constant 0 : index
    %555 = vector.load %arg4[%c0_826, %c0_827, %c6_828, %c12_829, %c0_830] : memref<1x4x8x16x16xf32, #tpu.memory_space<vmem>>, vector<1x4x1x1x16xf32>
    %556 = vector.shape_cast %555 : vector<1x4x1x1x16xf32> to vector<4x16xf32>
    %c0_831 = arith.constant 0 : index
    %c0_832 = arith.constant 0 : index
    %c6_833 = arith.constant 6 : index
    %c13_834 = arith.constant 13 : index
    %c0_835 = arith.constant 0 : index
    %557 = vector.load %arg4[%c0_831, %c0_832, %c6_833, %c13_834, %c0_835] : memref<1x4x8x16x16xf32, #tpu.memory_space<vmem>>, vector<1x4x1x1x16xf32>
    %558 = vector.shape_cast %557 : vector<1x4x1x1x16xf32> to vector<4x16xf32>
    %559 = arith.maximumf %556, %558 : vector<4x16xf32>
    %c0_836 = arith.constant 0 : index
    %c0_837 = arith.constant 0 : index
    %c7_838 = arith.constant 7 : index
    %c12_839 = arith.constant 12 : index
    %c0_840 = arith.constant 0 : index
    %560 = vector.load %arg4[%c0_836, %c0_837, %c7_838, %c12_839, %c0_840] : memref<1x4x8x16x16xf32, #tpu.memory_space<vmem>>, vector<1x4x1x1x16xf32>
    %561 = vector.shape_cast %560 : vector<1x4x1x1x16xf32> to vector<4x16xf32>
    %c0_841 = arith.constant 0 : index
    %c0_842 = arith.constant 0 : index
    %c7_843 = arith.constant 7 : index
    %c13_844 = arith.constant 13 : index
    %c0_845 = arith.constant 0 : index
    %562 = vector.load %arg4[%c0_841, %c0_842, %c7_843, %c13_844, %c0_845] : memref<1x4x8x16x16xf32, #tpu.memory_space<vmem>>, vector<1x4x1x1x16xf32>
    %563 = vector.shape_cast %562 : vector<1x4x1x1x16xf32> to vector<4x16xf32>
    %564 = arith.maximumf %561, %563 : vector<4x16xf32>
    %565 = arith.maximumf %559, %564 : vector<4x16xf32>
    %cst_846 = arith.constant dense<0.000000e+00> : vector<4x8xf32>
    %566 = tpu.matmul %565, %6, %cst_846 {dimension_numbers = #tpu.dot_dimension_numbers<[1], [0], [0], [1], [0, 0, 1, 1], [], []>} : vector<4x16xf32>, vector<16x8xf32>, vector<4x8xf32> -> vector<4x8xf32>
    %cst_847 = arith.constant dense<0.000000e+00> : vector<4x8xf32>
    %567 = tpu.matmul %565, %13, %cst_847 {dimension_numbers = #tpu.dot_dimension_numbers<[1], [0], [0], [1], [0, 0, 1, 1], [], []>} : vector<4x16xf32>, vector<16x8xf32>, vector<4x8xf32> -> vector<4x8xf32>
    %568 = arith.maximumf %566, %567 : vector<4x8xf32>
    %cst_848 = arith.constant dense<0.000000e+00> : vector<4x8xf32>
    %569 = tpu.matmul %14, %568, %cst_848 {dimension_numbers = #tpu.dot_dimension_numbers<[1], [0], [0], [1], [0, 0, 1, 1], [], []>} : vector<4x4xf32>, vector<4x8xf32>, vector<4x8xf32> -> vector<4x8xf32>
    %c0_849 = arith.constant 0 : index
    %c0_850 = arith.constant 0 : index
    %c3_851 = arith.constant 3 : index
    %c6_852 = arith.constant 6 : index
    %c0_853 = arith.constant 0 : index
    %570 = vector.load %arg5[%c0_849, %c0_850, %c3_851, %c6_852, %c0_853] : memref<1x4x4x8x8xf32, #tpu.memory_space<vmem>>, vector<1x4x1x1x8xf32>
    %571 = vector.shape_cast %570 : vector<1x4x1x1x8xf32> to vector<4x8xf32>
    %572 = vector.shape_cast %569 : vector<4x8xf32> to vector<1x4x1x1x8xf32>
    tpu.vector_store %arg5[%c0_849, %c0_850, %c3_851, %c6_852, %c0_853], %572 {strides = array<i32>} : memref<1x4x4x8x8xf32, #tpu.memory_space<vmem>>, vector<1x4x1x1x8xf32>,
    %c0_854 = arith.constant 0 : index
    %c0_855 = arith.constant 0 : index
    %c6_856 = arith.constant 6 : index
    %c14_857 = arith.constant 14 : index
    %c0_858 = arith.constant 0 : index
    %573 = vector.load %arg4[%c0_854, %c0_855, %c6_856, %c14_857, %c0_858] : memref<1x4x8x16x16xf32, #tpu.memory_space<vmem>>, vector<1x4x1x1x16xf32>
    %574 = vector.shape_cast %573 : vector<1x4x1x1x16xf32> to vector<4x16xf32>
    %c0_859 = arith.constant 0 : index
    %c0_860 = arith.constant 0 : index
    %c6_861 = arith.constant 6 : index
    %c15_862 = arith.constant 15 : index
    %c0_863 = arith.constant 0 : index
    %575 = vector.load %arg4[%c0_859, %c0_860, %c6_861, %c15_862, %c0_863] : memref<1x4x8x16x16xf32, #tpu.memory_space<vmem>>, vector<1x4x1x1x16xf32>
    %576 = vector.shape_cast %575 : vector<1x4x1x1x16xf32> to vector<4x16xf32>
    %577 = arith.maximumf %574, %576 : vector<4x16xf32>
    %c0_864 = arith.constant 0 : index
    %c0_865 = arith.constant 0 : index
    %c7_866 = arith.constant 7 : index
    %c14_867 = arith.constant 14 : index
    %c0_868 = arith.constant 0 : index
    %578 = vector.load %arg4[%c0_864, %c0_865, %c7_866, %c14_867, %c0_868] : memref<1x4x8x16x16xf32, #tpu.memory_space<vmem>>, vector<1x4x1x1x16xf32>
    %579 = vector.shape_cast %578 : vector<1x4x1x1x16xf32> to vector<4x16xf32>
    %c0_869 = arith.constant 0 : index
    %c0_870 = arith.constant 0 : index
    %c7_871 = arith.constant 7 : index
    %c15_872 = arith.constant 15 : index
    %c0_873 = arith.constant 0 : index
    %580 = vector.load %arg4[%c0_869, %c0_870, %c7_871, %c15_872, %c0_873] : memref<1x4x8x16x16xf32, #tpu.memory_space<vmem>>, vector<1x4x1x1x16xf32>
    %581 = vector.shape_cast %580 : vector<1x4x1x1x16xf32> to vector<4x16xf32>
    %582 = arith.maximumf %579, %581 : vector<4x16xf32>
    %583 = arith.maximumf %577, %582 : vector<4x16xf32>
    %cst_874 = arith.constant dense<0.000000e+00> : vector<4x8xf32>
    %584 = tpu.matmul %583, %6, %cst_874 {dimension_numbers = #tpu.dot_dimension_numbers<[1], [0], [0], [1], [0, 0, 1, 1], [], []>} : vector<4x16xf32>, vector<16x8xf32>, vector<4x8xf32> -> vector<4x8xf32>
    %cst_875 = arith.constant dense<0.000000e+00> : vector<4x8xf32>
    %585 = tpu.matmul %583, %13, %cst_875 {dimension_numbers = #tpu.dot_dimension_numbers<[1], [0], [0], [1], [0, 0, 1, 1], [], []>} : vector<4x16xf32>, vector<16x8xf32>, vector<4x8xf32> -> vector<4x8xf32>
    %586 = arith.maximumf %584, %585 : vector<4x8xf32>
    %cst_876 = arith.constant dense<0.000000e+00> : vector<4x8xf32>
    %587 = tpu.matmul %14, %586, %cst_876 {dimension_numbers = #tpu.dot_dimension_numbers<[1], [0], [0], [1], [0, 0, 1, 1], [], []>} : vector<4x4xf32>, vector<4x8xf32>, vector<4x8xf32> -> vector<4x8xf32>
    %c0_877 = arith.constant 0 : index
    %c0_878 = arith.constant 0 : index
    %c3_879 = arith.constant 3 : index
    %c7_880 = arith.constant 7 : index
    %c0_881 = arith.constant 0 : index
    %588 = vector.load %arg5[%c0_877, %c0_878, %c3_879, %c7_880, %c0_881] : memref<1x4x4x8x8xf32, #tpu.memory_space<vmem>>, vector<1x4x1x1x8xf32>
    %589 = vector.shape_cast %588 : vector<1x4x1x1x8xf32> to vector<4x8xf32>
    %590 = vector.shape_cast %587 : vector<4x8xf32> to vector<1x4x1x1x8xf32>
    tpu.vector_store %arg5[%c0_877, %c0_878, %c3_879, %c7_880, %c0_881], %590 {strides = array<i32>} : memref<1x4x4x8x8xf32, #tpu.memory_space<vmem>>, vector<1x4x1x1x8xf32>,
    return
  }
  func.func @transform_0(%arg0: i32, %arg1: i32, %arg2: i32) -> (i32, i32) {
    %c0_i32 = arith.constant 0 : i32
    %c0_i32_0 = arith.constant 0 : i32
    %c0_i32_1 = arith.constant 0 : i32
    return %c0_i32, %c0_i32_0 : i32, i32
  }
  func.func @transform_1(%arg0: i32, %arg1: i32, %arg2: i32) -> (i32, i32, i32, i32, i32) {
    %c0_i32 = arith.constant 0 : i32
    %c0_i32_0 = arith.constant 0 : i32
    %c0_i32_1 = arith.constant 0 : i32
    return %arg0, %c0_i32, %arg1, %arg2, %c0_i32_0 : i32, i32, i32, i32, i32
  }
  func.func @transform_2(%arg0: i32, %arg1: i32, %arg2: i32) -> (i32, i32, i32, i32, i32) {
    %c0_i32 = arith.constant 0 : i32
    %c0_i32_0 = arith.constant 0 : i32
    %c0_i32_1 = arith.constant 0 : i32
    return %arg0, %c0_i32, %arg1, %arg2, %c0_i32_0 : i32, i32, i32, i32, i32
  }
}

</mosaic_0001>

<llo_original>
// kernel: tpu_custom_call.1
$region0: #{tpu_custom_call.1}
  #allocation0 [shape = 'u32[]', space=smem, size = 0x4, offset = 0x4, fixed_abs, tag = 'smem constant byte address 0x4 - core index']
  #allocation1 [shape = 'u32[72,128]{1,0:T(1,128)}', space=vmem, size = 0x9000, scoped, tag = 'internal scratch']
  %s0 = inlined_call_operand.hbm [shape: f32[4,4], index: 0, kind: input, shape index: {}]
  %s1 = inlined_call_operand.hbm [shape: f32[2,4,8,16,16], index: 1, kind: input, shape index: {}]
  %s2 = inlined_call_operand.hbm [shape: f32[2,4,4,8,8], index: 2, kind: output, shape index: {}]
  %s3 = sld [smem:[#allocation0]]
  $region49: #{tpu_custom_call.1} parent=0
    _
  %s5 = ssub.s32 1, %s3
  %s6 = scalar_select 0, %s5, %s3
  $region1: #{tpu_custom_call.1} parent=0
    #allocation2 [shape = 'u8[2048]{0}', space=vmem, size = 0x800, scoped, tag = 'input window, operand 0, single buffered']
    #allocation3 [shape = 's32[2]{0}', space=sflag, size = 0x8, scoped, tag = 'scoped memory for tpu_custom_call.1']
    #allocation4 [shape = 's32[2]{0}', space=sflag, size = 0x8, scoped, tag = 'scoped memory for tpu_custom_call.1']
    #allocation5 [shape = 'u8[524288]{0}', space=vmem, size = 0x80000, scoped, tag = 'input window, operand 1']
    #allocation6 [shape = 's32[2]{0}', space=sflag, size = 0x8, scoped, tag = 'scoped memory for tpu_custom_call.1']
    #allocation7 [shape = 'u8[131072]{0}', space=vmem, size = 0x20000, scoped, tag = 'output window, operand 0']
    %7 = vsyncpa [#allocation3], 0
    %8 = vsyncpa [#allocation6], 0
    %s9 = scalar_lea.sflag [#allocation6], 1
    %10 = vsyncpa %s9, 0
    %11 = vsyncpa [#allocation4], 0
    %s12 = scalar_lea.sflag [#allocation4], 1
    %13 = vsyncpa %s12, 0
    loop: start=0, step=1, limit=4
    $region2: #{tpu_custom_call.1} parent=1 // loop_pre_header
      _
    $region3: #{tpu_custom_call.1} parent=1 // loop_header
      %s15 = sphi 0, %s19
      %p16 = scmp.ge.s32.totalorder %s15, 4
      %s22 = sphi 0, %s41
      %s23 = sphi 0, %s37
      %s24 = sphi 0, %s33
      %s25 = sphi 0, %s22
      %s26 = sphi 0, %s23
      %s27 = sphi 0, %s24
      %s28 = sphi 0, %s25
      %s29 = sphi 0, %s26
      %s30 = sphi 0, %s27
      %s42 = sphi 0, %s42
      %s44 = sphi 0, %s42
      %s45 = sphi 0, %s44
      %s59 = sphi 0, %s45
      %s69 = sphi 0, %s71
      %s72 = sphi 0, %s69
      %s73 = sphi 0, %s72
      %s89 = sphi 0, %s73
      %s99 = sphi 0, %s101
      %s102 = sphi 0, %s99
      %s103 = sphi 0, %s102
      %s119 = sphi 0, %s103
    $region4: #{tpu_custom_call.1} parent=1 // loop_header_branch
      %18 = sbr.rel (%p16) target = $region8
    $region5: #{tpu_custom_call.1} parent=1 // loop_body
      %s20 = ssub.s32 %s15, 1
      %s21 = ssub.s32 %s15, 2
      %s31 = sadd.s32 1, %s24
      %p32 = scmp.ge.s32.totalorder %s31, 1
      %s33 = scalar_select %p32, 0, %s31
      %s34 = sadd.s32 1, %s23
      %s35 = scalar_select %p32, %s34, %s23
      %p36 = scmp.ge.s32.totalorder %s35, 1
      %s37 = scalar_select %p36, 0, %s35
      %s38 = sadd.s32 1, %s22
      %s39 = scalar_select %p36, %s38, %s22
      %p40 = scmp.ge.s32.totalorder %s39, 2
      %s41 = scalar_select %p40, 0, %s39
      %s43 = sadd.s32 %s42, 1
      %p46 = scmp.eq.s32.totalorder %s15, 1
      %p47 = scmp.ne.s32.totalorder %s42, %s44
      %p48 = scmp.eq.s32.totalorder %s15, 0
      %p49 = por %p47, %p48
      %p50 = scmp.ne.s32.totalorder %s42, %s44
      %p51 = scmp.eq.s32.totalorder %s20, 1
      %p52 = por %p50, %p51
      %p53 = scmp.ne.s32.totalorder %s44, %s45
      %p54 = scmp.eq.s32.totalorder %s20, 0
      %p55 = por %p53, %p54
      %p56 = scmp.ne.s32.totalorder %s44, %s45
      %p57 = scmp.eq.s32.totalorder %s21, 1
      %p58 = por %p56, %p57
      %p60 = scmp.ne.s32.totalorder %s45, %s59
      %p61 = scmp.eq.s32.totalorder %s21, 0
      %p62 = por %p60, %p61
      %s63 = ssub.s32 %s22, %s41
      %s64 = ssub.s32 %s23, %s37
      %s65 = sor.u32 %s63, %s64
      %s66 = ssub.s32 %s24, %s33
      %s67 = sor.u32 %s65, %s66
      %p68 = scmp.eq.s32.totalorder %s67, 0
      %s70 = sadd.s32 %s69, 1
      %s71 = scalar_select %p68, %s69, %s70
      %p74 = pneg %p68
      %p75 = scmp.eq.s32.totalorder %s15, 1
      %p76 = por %p74, %p75
      %p77 = scmp.ne.s32.totalorder %s69, %s72
      %p78 = scmp.eq.s32.totalorder %s15, 0
      %p79 = por %p77, %p78
      %p80 = scmp.ne.s32.totalorder %s69, %s72
      %p81 = scmp.eq.s32.totalorder %s20, 1
      %p82 = por %p80, %p81
      %p83 = scmp.ne.s32.totalorder %s72, %s73
      %p84 = scmp.eq.s32.totalorder %s20, 0
      %p85 = por %p83, %p84
      %p86 = scmp.ne.s32.totalorder %s72, %s73
      %p87 = scmp.eq.s32.totalorder %s21, 1
      %p88 = por %p86, %p87
      %p90 = scmp.ne.s32.totalorder %s73, %s89
      %p91 = scmp.eq.s32.totalorder %s21, 0
      %p92 = por %p90, %p91
      %s93 = ssub.s32 %s22, %s41
      %s94 = ssub.s32 %s23, %s37
      %s95 = sor.u32 %s93, %s94
      %s96 = ssub.s32 %s24, %s33
      %s97 = sor.u32 %s95, %s96
      %p98 = scmp.eq.s32.totalorder %s97, 0
      %s100 = sadd.s32 %s99, 1
      %s101 = scalar_select %p98, %s99, %s100
      %p104 = pneg %p98
      %p105 = scmp.eq.s32.totalorder %s15, 1
      %p106 = por %p104, %p105
      %p107 = scmp.ne.s32.totalorder %s99, %s102
      %p108 = scmp.eq.s32.totalorder %s15, 0
      %p109 = por %p107, %p108
      %p110 = scmp.ne.s32.totalorder %s99, %s102
      %p111 = scmp.eq.s32.totalorder %s20, 1
      %p112 = por %p110, %p111
      %p113 = scmp.ne.s32.totalorder %s102, %s103
      %p114 = scmp.eq.s32.totalorder %s20, 0
      %p115 = por %p113, %p114
      %p116 = scmp.ne.s32.totalorder %s102, %s103
      %p117 = scmp.eq.s32.totalorder %s21, 1
      %p118 = por %p116, %p117
      %p120 = scmp.ne.s32.totalorder %s103, %s119
      %p121 = scmp.eq.s32.totalorder %s21, 0
      %p122 = por %p120, %p121
      %p123 = scmp.le.s32.totalorder 1, %s15
      %p124 = scmp.lt.s32.totalorder %s15, 3
      %p125 = pnand %p123, %p124
      %p126 = pneg %p125
      // Predicated region
      $region9: #{tpu_custom_call.1} parent=5 // pred_check
        _
      $region10: #{tpu_custom_call.1} parent=5 // pred_check_branch
        %128 = sbr.rel (%p125) target = $region12
      $region11: #{tpu_custom_call.1} parent=5 // pred_region
        %s129 = ssub.s32 %s15, 1
        // Predicated region
        $region13: #{tpu_custom_call.1} parent=11 // pred_check
          %p130 = pneg %p55
        $region14: #{tpu_custom_call.1} parent=11 // pred_check_branch
          %132 = sbr.rel (%p130) target = $region16
        $region15: #{tpu_custom_call.1} parent=11 // pred_region
          %134 = vsyncadd [#allocation3], 0
          %s136 = sshll.u32 %s0, 4
          %s137 = int_to_ptr.hbm [resolvable:$true] %s136
          %s138 = sshll.u32 [#allocation2], 4
          %s139 = int_to_ptr.vmem [resolvable:$true] %s138
          %141 = dma.hbm_to_vmem [thread:$0]  %s137, 64, %s139, [#allocation3]
        $region16: #{tpu_custom_call.1} parent=11 // pred_fallthru
          _
      $region12: #{tpu_custom_call.1} parent=5 // pred_fallthru
        _
      %p142 = scmp.lt.s32.totalorder %s15, 2
      // Predicated region
      $region17: #{tpu_custom_call.1} parent=5 // pred_check
        %p143 = pneg %p142
      $region18: #{tpu_custom_call.1} parent=5 // pred_check_branch
        %145 = sbr.rel (%p143) target = $region20
      $region19: #{tpu_custom_call.1} parent=5 // pred_region
        // Predicated region
        $region21: #{tpu_custom_call.1} parent=19 // pred_check
          %p146 = pneg %p79
        $region22: #{tpu_custom_call.1} parent=19 // pred_check_branch
          %148 = sbr.rel (%p146) target = $region24
        $region23: #{tpu_custom_call.1} parent=19 // pred_region
          %s149 = sand.u32 %s69, 1
          %s150 = scalar_lea.sflag [#allocation6], %s149
          %s151 = sand.u32 %s69, 1
          %s152 = smul.addr %s151, 512
          %s153 = scalar_lea.vmem [#allocation5], %s152
          %s154 = smul.u32 8, %s23
          %s155 = smul.u32 2, %s24
          %157 = vsyncadd %s150, 0
          %s158 = smul.addr %s154, 2
          %s159 = sadd.s32 %s155, %s158
          %s160 = smul.addr %s22, 64
          %s161 = sadd.s32 %s159, %s160
          %s162 = smul.addr %s161, 8
          %s163 = scalar_lea.hbm %s1, %s162
          %s164 = sshll.u32 %s163, 4
          %s165 = int_to_ptr.hbm [resolvable:$true] %s164
          %s166 = sshll.u32 %s153, 4
          %s167 = int_to_ptr.vmem [resolvable:$true] %s166
          %172 = dma.hbm_to_vmem [thread:$0]  %s165, 8192, %s167, %s150, 128, 128, 8
        $region24: #{tpu_custom_call.1} parent=19 // pred_fallthru
          _
      $region20: #{tpu_custom_call.1} parent=5 // pred_fallthru
        _
      %p173 = scmp.le.s32.totalorder 1, %s15
      %p174 = scmp.lt.s32.totalorder %s15, 3
      %p175 = pnand %p173, %p174
      %p176 = pneg %p175
      // Predicated region
      $region25: #{tpu_custom_call.1} parent=5 // pred_check
        _
      $region26: #{tpu_custom_call.1} parent=5 // pred_check_branch
        %178 = sbr.rel (%p175) target = $region28
      $region27: #{tpu_custom_call.1} parent=5 // pred_region
        %s179 = ssub.s32 %s15, 1
        // Predicated region
        $region29: #{tpu_custom_call.1} parent=27 // pred_check
          %p180 = pneg %p55
        $region30: #{tpu_custom_call.1} parent=27 // pred_check_branch
          %182 = sbr.rel (%p180) target = $region32
        $region31: #{tpu_custom_call.1} parent=27 // pred_region
          %184 = dma.done [#allocation3], 64
        $region32: #{tpu_custom_call.1} parent=27 // pred_fallthru
          _
        %s185 = sand.u32 %s72, 1
        %s186 = scalar_lea.sflag [#allocation6], %s185
        %s187 = sand.u32 %s72, 1
        %s188 = smul.addr %s187, 512
        %s189 = scalar_lea.vmem [#allocation5], %s188
        // Predicated region
        $region33: #{tpu_custom_call.1} parent=27 // pred_check
          %p190 = pneg %p85
        $region34: #{tpu_custom_call.1} parent=27 // pred_check_branch
          %192 = sbr.rel (%p190) target = $region36
        $region35: #{tpu_custom_call.1} parent=27 // pred_region
          %194 = dma.done %s186, 8192
        $region36: #{tpu_custom_call.1} parent=27 // pred_fallthru
          _
        %p195 = pneg %p55
        %p196 = pneg %p52
        %s197 = sand.u32 %s72, 1
        %s198 = scalar_lea.sflag [#allocation6], %s197
        %s199 = sand.u32 %s72, 1
        %s200 = smul.addr %s199, 512
        %s201 = scalar_lea.vmem [#allocation5], %s200
        %p202 = pneg %p85
        %p203 = pneg %p82
        %p204 = pneg %p115
        %p205 = pneg %p112
        %s206 = sand.u32 %s102, 1
        %s207 = scalar_lea.sflag [#allocation4], %s206
        %s208 = sand.u32 %s102, 1
        %s209 = smul.addr %s208, 128
        %s210 = scalar_lea.vmem [#allocation7], %s209
        %s211 = smul.u32 8, %s26
        %s212 = smul.u32 2, %s27
        %s213 = smul.u32 4, %s26
        %v214 = vlaneseq
        %v215 = vshrl.u32 %v214, 7
        %v216 = vadd.s32 %v215, 8
        %v217 = vlaneseq
        %v218 = vand.u32 %v217, 127
        %v219 = vmul.u32 %v218, 2
        %vm220 = vcmp.eq.s32.totalorder %v215, %v219
        %vm221 = vcmp.eq.s32.totalorder %v216, %v219
        %v222 = vsel %vm220, 1, 0
        %v223 = vsel %vm221, 1, 0
        %v224 = vcvt.s32.f32 %v222
        %v225 = vcvt.s32.f32 %v223
        %v226 = vadd.s32 %v219, 1
        %vm227 = vcmp.eq.s32.totalorder %v215, %v226
        %vm228 = vcmp.eq.s32.totalorder %v216, %v226
        %v229 = vsel %vm227, 1, 0
        %v230 = vsel %vm228, 1, 0
        %v231 = vcvt.s32.f32 %v229
        %v232 = vcvt.s32.f32 %v230
        %v233 = vld [vmem:[#allocation2] sm:$0xf]
        %v234 = vld [vmem:[%s189] sm:$0x1]
        %v235 = vld [vmem:[%s189 + $0x80] sm:$0x1]
        %v236 = vld [vmem:[%s189 + $0x100] sm:$0x1]
        %v237 = vld [vmem:[%s189 + $0x180] sm:$0x1]
        %v238 = vld [vmem:[%s189 + $0x1] sm:$0x1]
        %v239 = vld [vmem:[%s189 + $0x81] sm:$0x1]
        %v240 = vld [vmem:[%s189 + $0x101] sm:$0x1]
        %v241 = vld [vmem:[%s189 + $0x181] sm:$0x1]
        %v242 = vmax.f32 %v234, %v238
        %v243 = vmax.f32 %v235, %v239
        %v244 = vmax.f32 %v236, %v240
        %v245 = vmax.f32 %v237, %v241
        %s246 = scalar_lea.vmem %s189, 16 [#allocation5]
        %v247 = vld [vmem:[%s246] sm:$0x1]
        %v248 = vld [vmem:[%s246 + $0x80] sm:$0x1]
        %v249 = vld [vmem:[%s246 + $0x100] sm:$0x1]
        %v250 = vld [vmem:[%s246 + $0x180] sm:$0x1]
        %v251 = vld [vmem:[%s246 + $0x1] sm:$0x1]
        %v252 = vld [vmem:[%s246 + $0x81] sm:$0x1]
        %v253 = vld [vmem:[%s246 + $0x101] sm:$0x1]
        %v254 = vld [vmem:[%s246 + $0x181] sm:$0x1]
        %v255 = vmax.f32 %v247, %v251
        %v256 = vmax.f32 %v248, %v252
        %v257 = vmax.f32 %v249, %v253
        %v258 = vmax.f32 %v250, %v254
        %v259 = vmax.f32 %v242, %v255
        %v260 = vmax.f32 %v243, %v256
        %v261 = vmax.f32 %v244, %v257
        %v262 = vmax.f32 %v245, %v258
        %v267 = vrot.slane %v260, 7
        %vm268 = vcmask 1041409
        %v269 = vsel %vm268, %v267, %v259
        %v270 = vrot.slane %v261, 6
        %vm271 = vcmask 1042434
        %v272 = vsel %vm271, %v270, %v269
        %v273 = vrot.slane %v262, 5
        %vm274 = vcmask 1043459
        %v275 = vsel %vm274, %v273, %v272
        %vm276 = vcmask 130048
        %v277 = vsel %vm276, %v275, 0
        %279 = vmatpush.msra.mxu0 0.0
        %280 = vmatpush.msra.mxu0 0.0
        %281 = vmatpush.msra.mxu0 0.0
        %282 = vmatpush.msra.mxu0 0.0
        %283 = vmatpush.msra.mxu0 0.0
        %284 = vmatpush.msra.mxu0 0.0
        %285 = vmatpush.msra.mxu0 0.0
        %286 = vmatpush.msra.mxu0 0.0
        %287 = vmatpush.msra.mxu0 0.0
        %288 = vmatpush.msra.mxu0 0.0
        %289 = vmatpush.msra.mxu0 0.0
        %290 = vmatpush.msra.mxu0 0.0
        %291 = vmatpush.msra.mxu0 0.0
        %292 = vmatpush.msra.mxu0 0.0
        %293 = vmatpush.msra.mxu0 %v225
        %294 = vmatpush.msra.mxu0 %v224
        %295 = vmatmul.f32.gmra.mxu0 %v277
        %v296 = vpop.f32.mrf.mxu0
        %v297 = vadd.f32 0.0, %v296
        %298 = vdwg.mxu0
        %299 = vmatpush.msra.mxu0 0.0
        %300 = vmatpush.msra.mxu0 0.0
        %301 = vmatpush.msra.mxu0 0.0
        %302 = vmatpush.msra.mxu0 0.0
        %303 = vmatpush.msra.mxu0 0.0
        %304 = vmatpush.msra.mxu0 0.0
        %305 = vmatpush.msra.mxu0 0.0
        %306 = vmatpush.msra.mxu0 0.0
        %307 = vmatpush.msra.mxu0 0.0
        %308 = vmatpush.msra.mxu0 0.0
        %309 = vmatpush.msra.mxu0 0.0
        %310 = vmatpush.msra.mxu0 0.0
        %311 = vmatpush.msra.mxu0 0.0
        %312 = vmatpush.msra.mxu0 0.0
        %313 = vmatpush.msra.mxu0 %v232
        %314 = vmatpush.msra.mxu0 %v231
        %315 = vmatmul.f32.gmra.mxu0 %v277
        %v316 = vpop.f32.mrf.mxu0
        %v317 = vadd.f32 0.0, %v316
        %318 = vdwg.mxu0
        %v319 = vmax.f32 %v297, %v317
        %vm320 = vcmask 31744
        %v322 = vsel %vm320, %v233, 0
        %vm324 = vcmask 1043456
        %v326 = vsel %vm324, %v319, 0
        %328 = vmatpush.msra.mxu0 0.0
        %329 = vmatpush.msra.mxu0 0.0
        %330 = vmatpush.msra.mxu0 0.0
        %331 = vmatpush.msra.mxu0 0.0
        %332 = vmatpush.msra.mxu0 0.0
        %333 = vmatpush.msra.mxu0 0.0
        %334 = vmatpush.msra.mxu0 0.0
        %335 = vmatpush.msra.mxu0 0.0
        %336 = vmatpush.msra.mxu0 0.0
        %337 = vmatpush.msra.mxu0 0.0
        %338 = vmatpush.msra.mxu0 0.0
        %339 = vmatpush.msra.mxu0 0.0
        %340 = vmatpush.msra.mxu0 0.0
        %341 = vmatpush.msra.mxu0 0.0
        %342 = vmatpush.msra.mxu0 0.0
        %343 = vmatpush.msra.mxu0 %v326
        %344 = vmatmul.f32.gmra.mxu0 %v322
        %v345 = vpop.f32.mrf.mxu0
        %v346 = vadd.f32 0.0, %v345
        %347 = vdwg.mxu0
        %v349 = vrot.slane %v346, 1
        %v350 = vrot.slane %v346, 2
        %v351 = vrot.slane %v346, 3
        %vm355 = vcmask 57344
        %356 = vst.msk [vmem:[%s210] sm:$0x1] %vm355, %v346
        %357 = vst.msk [vmem:[%s210 + $0x20] sm:$0x1] %vm355, %v349
        %358 = vst.msk [vmem:[%s210 + $0x40] sm:$0x1] %vm355, %v350
        %359 = vst.msk [vmem:[%s210 + $0x60] sm:$0x1] %vm355, %v351
        %v360 = vld [vmem:[%s189 + $0x2] sm:$0x1]
        %v361 = vld [vmem:[%s189 + $0x82] sm:$0x1]
        %v362 = vld [vmem:[%s189 + $0x102] sm:$0x1]
        %v363 = vld [vmem:[%s189 + $0x182] sm:$0x1]
        %v364 = vld [vmem:[%s189 + $0x3] sm:$0x1]
        %v365 = vld [vmem:[%s189 + $0x83] sm:$0x1]
        %v366 = vld [vmem:[%s189 + $0x103] sm:$0x1]
        %v367 = vld [vmem:[%s189 + $0x183] sm:$0x1]
        %v368 = vmax.f32 %v360, %v364
        %v369 = vmax.f32 %v361, %v365
        %v370 = vmax.f32 %v362, %v366
        %v371 = vmax.f32 %v363, %v367
        %v372 = vld [vmem:[%s246 + $0x2] sm:$0x1]
        %v373 = vld [vmem:[%s246 + $0x82] sm:$0x1]
        %v374 = vld [vmem:[%s246 + $0x102] sm:$0x1]
        %v375 = vld [vmem:[%s246 + $0x182] sm:$0x1]
        %v376 = vld [vmem:[%s246 + $0x3] sm:$0x1]
        %v377 = vld [vmem:[%s246 + $0x83] sm:$0x1]
        %v378 = vld [vmem:[%s246 + $0x103] sm:$0x1]
        %v379 = vld [vmem:[%s246 + $0x183] sm:$0x1]
        %v380 = vmax.f32 %v372, %v376
        %v381 = vmax.f32 %v373, %v377
        %v382 = vmax.f32 %v374, %v378
        %v383 = vmax.f32 %v375, %v379
        %v384 = vmax.f32 %v368, %v380
        %v385 = vmax.f32 %v369, %v381
        %v386 = vmax.f32 %v370, %v382
        %v387 = vmax.f32 %v371, %v383
        %v392 = vrot.slane %v385, 7
        %v393 = vsel %vm268, %v392, %v384
        %v394 = vrot.slane %v386, 6
        %v395 = vsel %vm271, %v394, %v393
        %v396 = vrot.slane %v387, 5
        %v397 = vsel %vm274, %v396, %v395
        %v398 = vsel %vm276, %v397, 0
        %400 = vmatpush.msra.mxu0 0.0
        %401 = vmatpush.msra.mxu0 0.0
        %402 = vmatpush.msra.mxu0 0.0
        %403 = vmatpush.msra.mxu0 0.0
        %404 = vmatpush.msra.mxu0 0.0
        %405 = vmatpush.msra.mxu0 0.0
        %406 = vmatpush.msra.mxu0 0.0
        %407 = vmatpush.msra.mxu0 0.0
        %408 = vmatpush.msra.mxu0 0.0
        %409 = vmatpush.msra.mxu0 0.0
        %410 = vmatpush.msra.mxu0 0.0
        %411 = vmatpush.msra.mxu0 0.0
        %412 = vmatpush.msra.mxu0 0.0
        %413 = vmatpush.msra.mxu0 0.0
        %414 = vmatpush.msra.mxu0 %v225
        %415 = vmatpush.msra.mxu0 %v224
        %416 = vmatmul.f32.gmra.mxu0 %v398
        %v417 = vpop.f32.mrf.mxu0
        %v418 = vadd.f32 0.0, %v417
        %419 = vdwg.mxu0
        %420 = vmatpush.msra.mxu0 0.0
        %421 = vmatpush.msra.mxu0 0.0
        %422 = vmatpush.msra.mxu0 0.0
        %423 = vmatpush.msra.mxu0 0.0
        %424 = vmatpush.msra.mxu0 0.0
        %425 = vmatpush.msra.mxu0 0.0
        %426 = vmatpush.msra.mxu0 0.0
        %427 = vmatpush.msra.mxu0 0.0
        %428 = vmatpush.msra.mxu0 0.0
        %429 = vmatpush.msra.mxu0 0.0
        %430 = vmatpush.msra.mxu0 0.0
        %431 = vmatpush.msra.mxu0 0.0
        %432 = vmatpush.msra.mxu0 0.0
        %433 = vmatpush.msra.mxu0 0.0
        %434 = vmatpush.msra.mxu0 %v232
        %435 = vmatpush.msra.mxu0 %v231
        %436 = vmatmul.f32.gmra.mxu0 %v398
        %v437 = vpop.f32.mrf.mxu0
        %v438 = vadd.f32 0.0, %v437
        %439 = vdwg.mxu0
        %v440 = vmax.f32 %v418, %v438
        %v442 = vsel %vm324, %v440, 0
        %444 = vmatpush.msra.mxu0 0.0
        %445 = vmatpush.msra.mxu0 0.0
        %446 = vmatpush.msra.mxu0 0.0
        %447 = vmatpush.msra.mxu0 0.0
        %448 = vmatpush.msra.mxu0 0.0
        %449 = vmatpush.msra.mxu0 0.0
        %450 = vmatpush.msra.mxu0 0.0
        %451 = vmatpush.msra.mxu0 0.0
        %452 = vmatpush.msra.mxu0 0.0
        %453 = vmatpush.msra.mxu0 0.0
        %454 = vmatpush.msra.mxu0 0.0
        %455 = vmatpush.msra.mxu0 0.0
        %456 = vmatpush.msra.mxu0 0.0
        %457 = vmatpush.msra.mxu0 0.0
        %458 = vmatpush.msra.mxu0 0.0
        %459 = vmatpush.msra.mxu0 %v442
        %460 = vmatmul.f32.gmra.mxu0 %v322
        %v461 = vpop.f32.mrf.mxu0
        %v462 = vadd.f32 0.0, %v461
        %463 = vdwg.mxu0
        %v465 = vrot.slane %v462, 1
        %v466 = vrot.slane %v462, 2
        %v467 = vrot.slane %v462, 3
        %471 = vst.msk [vmem:[%s210 + $0x1] sm:$0x1] %vm355, %v462
        %472 = vst.msk [vmem:[%s210 + $0x21] sm:$0x1] %vm355, %v465
        %473 = vst.msk [vmem:[%s210 + $0x41] sm:$0x1] %vm355, %v466
        %474 = vst.msk [vmem:[%s210 + $0x61] sm:$0x1] %vm355, %v467
        %v475 = vld [vmem:[%s189 + $0x4] sm:$0x1]
        %v476 = vld [vmem:[%s189 + $0x84] sm:$0x1]
        %v477 = vld [vmem:[%s189 + $0x104] sm:$0x1]
        %v478 = vld [vmem:[%s189 + $0x184] sm:$0x1]
        %v479 = vld [vmem:[%s189 + $0x5] sm:$0x1]
        %v480 = vld [vmem:[%s189 + $0x85] sm:$0x1]
        %v481 = vld [vmem:[%s189 + $0x105] sm:$0x1]
        %v482 = vld [vmem:[%s189 + $0x185] sm:$0x1]
        %v483 = vmax.f32 %v475, %v479
        %v484 = vmax.f32 %v476, %v480
        %v485 = vmax.f32 %v477, %v481
        %v486 = vmax.f32 %v478, %v482
        %v487 = vld [vmem:[%s246 + $0x4] sm:$0x1]
        %v488 = vld [vmem:[%s246 + $0x84] sm:$0x1]
        %v489 = vld [vmem:[%s246 + $0x104] sm:$0x1]
        %v490 = vld [vmem:[%s246 + $0x184] sm:$0x1]
        %v491 = vld [vmem:[%s246 + $0x5] sm:$0x1]
        %v492 = vld [vmem:[%s246 + $0x85] sm:$0x1]
        %v493 = vld [vmem:[%s246 + $0x105] sm:$0x1]
        %v494 = vld [vmem:[%s246 + $0x185] sm:$0x1]
        %v495 = vmax.f32 %v487, %v491
        %v496 = vmax.f32 %v488, %v492
        %v497 = vmax.f32 %v489, %v493
        %v498 = vmax.f32 %v490, %v494
        %v499 = vmax.f32 %v483, %v495
        %v500 = vmax.f32 %v484, %v496
        %v501 = vmax.f32 %v485, %v497
        %v502 = vmax.f32 %v486, %v498
        %v507 = vrot.slane %v500, 7
        %v508 = vsel %vm268, %v507, %v499
        %v509 = vrot.slane %v501, 6
        %v510 = vsel %vm271, %v509, %v508
        %v511 = vrot.slane %v502, 5
        %v512 = vsel %vm274, %v511, %v510
        %v513 = vsel %vm276, %v512, 0
        %515 = vmatpush.msra.mxu0 0.0
        %516 = vmatpush.msra.mxu0 0.0
        %517 = vmatpush.msra.mxu0 0.0
        %518 = vmatpush.msra.mxu0 0.0
        %519 = vmatpush.msra.mxu0 0.0
        %520 = vmatpush.msra.mxu0 0.0
        %521 = vmatpush.msra.mxu0 0.0
        %522 = vmatpush.msra.mxu0 0.0
        %523 = vmatpush.msra.mxu0 0.0
        %524 = vmatpush.msra.mxu0 0.0
        %525 = vmatpush.msra.mxu0 0.0
        %526 = vmatpush.msra.mxu0 0.0
        %527 = vmatpush.msra.mxu0 0.0
        %528 = vmatpush.msra.mxu0 0.0
        %529 = vmatpush.msra.mxu0 %v225
        %530 = vmatpush.msra.mxu0 %v224
        %531 = vmatmul.f32.gmra.mxu0 %v513
        %v532 = vpop.f32.mrf.mxu0
        %v533 = vadd.f32 0.0, %v532
        %534 = vdwg.mxu0
        %535 = vmatpush.msra.mxu0 0.0
        %536 = vmatpush.msra.mxu0 0.0
        %537 = vmatpush.msra.mxu0 0.0
        %538 = vmatpush.msra.mxu0 0.0
        %539 = vmatpush.msra.mxu0 0.0
        %540 = vmatpush.msra.mxu0 0.0
        %541 = vmatpush.msra.mxu0 0.0
        %542 = vmatpush.msra.mxu0 0.0
        %543 = vmatpush.msra.mxu0 0.0
        %544 = vmatpush.msra.mxu0 0.0
        %545 = vmatpush.msra.mxu0 0.0
        %546 = vmatpush.msra.mxu0 0.0
        %547 = vmatpush.msra.mxu0 0.0
        %548 = vmatpush.msra.mxu0 0.0
        %549 = vmatpush.msra.mxu0 %v232
        %550 = vmatpush.msra.mxu0 %v231
        %551 = vmatmul.f32.gmra.mxu0 %v513
        %v552 = vpop.f32.mrf.mxu0
        %v553 = vadd.f32 0.0, %v552
        %554 = vdwg.mxu0
        %v555 = vmax.f32 %v533, %v553
        %v557 = vsel %vm324, %v555, 0
        %559 = vmatpush.msra.mxu0 0.0
        %560 = vmatpush.msra.mxu0 0.0
        %561 = vmatpush.msra.mxu0 0.0
        %562 = vmatpush.msra.mxu0 0.0
        %563 = vmatpush.msra.mxu0 0.0
        %564 = vmatpush.msra.mxu0 0.0
        %565 = vmatpush.msra.mxu0 0.0
        %566 = vmatpush.msra.mxu0 0.0
        %567 = vmatpush.msra.mxu0 0.0
        %568 = vmatpush.msra.mxu0 0.0
        %569 = vmatpush.msra.mxu0 0.0
        %570 = vmatpush.msra.mxu0 0.0
        %571 = vmatpush.msra.mxu0 0.0
        %572 = vmatpush.msra.mxu0 0.0
        %573 = vmatpush.msra.mxu0 0.0
        %574 = vmatpush.msra.mxu0 %v557
        %575 = vmatmul.f32.gmra.mxu0 %v322
        %v576 = vpop.f32.mrf.mxu0
        %v577 = vadd.f32 0.0, %v576
        %578 = vdwg.mxu0
        %v580 = vrot.slane %v577, 1
        %v581 = vrot.slane %v577, 2
        %v582 = vrot.slane %v577, 3
        %586 = vst.msk [vmem:[%s210 + $0x2] sm:$0x1] %vm355, %v577
        %587 = vst.msk [vmem:[%s210 + $0x22] sm:$0x1] %vm355, %v580
        %588 = vst.msk [vmem:[%s210 + $0x42] sm:$0x1] %vm355, %v581
        %589 = vst.msk [vmem:[%s210 + $0x62] sm:$0x1] %vm355, %v582
        %v590 = vld [vmem:[%s189 + $0x6] sm:$0x1]
        %v591 = vld [vmem:[%s189 + $0x86] sm:$0x1]
        %v592 = vld [vmem:[%s189 + $0x106] sm:$0x1]
        %v593 = vld [vmem:[%s189 + $0x186] sm:$0x1]
        %v594 = vld [vmem:[%s189 + $0x7] sm:$0x1]
        %v595 = vld [vmem:[%s189 + $0x87] sm:$0x1]
        %v596 = vld [vmem:[%s189 + $0x107] sm:$0x1]
        %v597 = vld [vmem:[%s189 + $0x187] sm:$0x1]
        %v598 = vmax.f32 %v590, %v594
        %v599 = vmax.f32 %v591, %v595
        %v600 = vmax.f32 %v592, %v596
        %v601 = vmax.f32 %v593, %v597
        %v602 = vld [vmem:[%s246 + $0x6] sm:$0x1]
        %v603 = vld [vmem:[%s246 + $0x86] sm:$0x1]
        %v604 = vld [vmem:[%s246 + $0x106] sm:$0x1]
        %v605 = vld [vmem:[%s246 + $0x186] sm:$0x1]
        %v606 = vld [vmem:[%s246 + $0x7] sm:$0x1]
        %v607 = vld [vmem:[%s246 + $0x87] sm:$0x1]
        %v608 = vld [vmem:[%s246 + $0x107] sm:$0x1]
        %v609 = vld [vmem:[%s246 + $0x187] sm:$0x1]
        %v610 = vmax.f32 %v602, %v606
        %v611 = vmax.f32 %v603, %v607
        %v612 = vmax.f32 %v604, %v608
        %v613 = vmax.f32 %v605, %v609
        %v614 = vmax.f32 %v598, %v610
        %v615 = vmax.f32 %v599, %v611
        %v616 = vmax.f32 %v600, %v612
        %v617 = vmax.f32 %v601, %v613
        %v622 = vrot.slane %v615, 7
        %v623 = vsel %vm268, %v622, %v614
        %v624 = vrot.slane %v616, 6
        %v625 = vsel %vm271, %v624, %v623
        %v626 = vrot.slane %v617, 5
        %v627 = vsel %vm274, %v626, %v625
        %v628 = vsel %vm276, %v627, 0
        %630 = vmatpush.msra.mxu0 0.0
        %631 = vmatpush.msra.mxu0 0.0
        %632 = vmatpush.msra.mxu0 0.0
        %633 = vmatpush.msra.mxu0 0.0
        %634 = vmatpush.msra.mxu0 0.0
        %635 = vmatpush.msra.mxu0 0.0
        %636 = vmatpush.msra.mxu0 0.0
        %637 = vmatpush.msra.mxu0 0.0
        %638 = vmatpush.msra.mxu0 0.0
        %639 = vmatpush.msra.mxu0 0.0
        %640 = vmatpush.msra.mxu0 0.0
        %641 = vmatpush.msra.mxu0 0.0
        %642 = vmatpush.msra.mxu0 0.0
        %643 = vmatpush.msra.mxu0 0.0
        %644 = vmatpush.msra.mxu0 %v225
        %645 = vmatpush.msra.mxu0 %v224
        %646 = vmatmul.f32.gmra.mxu0 %v628
        %v647 = vpop.f32.mrf.mxu0
        %v648 = vadd.f32 0.0, %v647
        %649 = vdwg.mxu0
        %650 = vmatpush.msra.mxu0 0.0
        %651 = vmatpush.msra.mxu0 0.0
        %652 = vmatpush.msra.mxu0 0.0
        %653 = vmatpush.msra.mxu0 0.0
        %654 = vmatpush.msra.mxu0 0.0
        %655 = vmatpush.msra.mxu0 0.0
        %656 = vmatpush.msra.mxu0 0.0
        %657 = vmatpush.msra.mxu0 0.0
        %658 = vmatpush.msra.mxu0 0.0
        %659 = vmatpush.msra.mxu0 0.0
        %660 = vmatpush.msra.mxu0 0.0
        %661 = vmatpush.msra.mxu0 0.0
        %662 = vmatpush.msra.mxu0 0.0
        %663 = vmatpush.msra.mxu0 0.0
        %664 = vmatpush.msra.mxu0 %v232
        %665 = vmatpush.msra.mxu0 %v231
        %666 = vmatmul.f32.gmra.mxu0 %v628
        %v667 = vpop.f32.mrf.mxu0
        %v668 = vadd.f32 0.0, %v667
        %669 = vdwg.mxu0
        %v670 = vmax.f32 %v648, %v668
        %v672 = vsel %vm324, %v670, 0
        %674 = vmatpush.msra.mxu0 0.0
        %675 = vmatpush.msra.mxu0 0.0
        %676 = vmatpush.msra.mxu0 0.0
        %677 = vmatpush.msra.mxu0 0.0
        %678 = vmatpush.msra.mxu0 0.0
        %679 = vmatpush.msra.mxu0 0.0
        %680 = vmatpush.msra.mxu0 0.0
        %681 = vmatpush.msra.mxu0 0.0
        %682 = vmatpush.msra.mxu0 0.0
        %683 = vmatpush.msra.mxu0 0.0
        %684 = vmatpush.msra.mxu0 0.0
        %685 = vmatpush.msra.mxu0 0.0
        %686 = vmatpush.msra.mxu0 0.0
        %687 = vmatpush.msra.mxu0 0.0
        %688 = vmatpush.msra.mxu0 0.0
        %689 = vmatpush.msra.mxu0 %v672
        %690 = vmatmul.f32.gmra.mxu0 %v322
        %v691 = vpop.f32.mrf.mxu0
        %v692 = vadd.f32 0.0, %v691
        %693 = vdwg.mxu0
        %v695 = vrot.slane %v692, 1
        %v696 = vrot.slane %v692, 2
        %v697 = vrot.slane %v692, 3
        %701 = vst.msk [vmem:[%s210 + $0x3] sm:$0x1] %vm355, %v692
        %702 = vst.msk [vmem:[%s210 + $0x23] sm:$0x1] %vm355, %v695
        %703 = vst.msk [vmem:[%s210 + $0x43] sm:$0x1] %vm355, %v696
        %704 = vst.msk [vmem:[%s210 + $0x63] sm:$0x1] %vm355, %v697
        %v705 = vld [vmem:[%s189 + $0x8] sm:$0x1]
        %v706 = vld [vmem:[%s189 + $0x88] sm:$0x1]
        %v707 = vld [vmem:[%s189 + $0x108] sm:$0x1]
        %v708 = vld [vmem:[%s189 + $0x188] sm:$0x1]
        %v709 = vld [vmem:[%s189 + $0x9] sm:$0x1]
        %v710 = vld [vmem:[%s189 + $0x89] sm:$0x1]
        %v711 = vld [vmem:[%s189 + $0x109] sm:$0x1]
        %v712 = vld [vmem:[%s189 + $0x189] sm:$0x1]
        %v713 = vmax.f32 %v705, %v709
        %v714 = vmax.f32 %v706, %v710
        %v715 = vmax.f32 %v707, %v711
        %v716 = vmax.f32 %v708, %v712
        %v717 = vld [vmem:[%s246 + $0x8] sm:$0x1]
        %v718 = vld [vmem:[%s246 + $0x88] sm:$0x1]
        %v719 = vld [vmem:[%s246 + $0x108] sm:$0x1]
        %v720 = vld [vmem:[%s246 + $0x188] sm:$0x1]
        %v721 = vld [vmem:[%s246 + $0x9] sm:$0x1]
        %v722 = vld [vmem:[%s246 + $0x89] sm:$0x1]
        %v723 = vld [vmem:[%s246 + $0x109] sm:$0x1]
        %v724 = vld [vmem:[%s246 + $0x189] sm:$0x1]
        %v725 = vmax.f32 %v717, %v721
        %v726 = vmax.f32 %v718, %v722
        %v727 = vmax.f32 %v719, %v723
        %v728 = vmax.f32 %v720, %v724
        %v729 = vmax.f32 %v713, %v725
        %v730 = vmax.f32 %v714, %v726
        %v731 = vmax.f32 %v715, %v727
        %v732 = vmax.f32 %v716, %v728
        %v737 = vrot.slane %v730, 7
        %v738 = vsel %vm268, %v737, %v729
        %v739 = vrot.slane %v731, 6
        %v740 = vsel %vm271, %v739, %v738
        %v741 = vrot.slane %v732, 5
        %v742 = vsel %vm274, %v741, %v740
        %v743 = vsel %vm276, %v742, 0
        %745 = vmatpush.msra.mxu0 0.0
        %746 = vmatpush.msra.mxu0 0.0
        %747 = vmatpush.msra.mxu0 0.0
        %748 = vmatpush.msra.mxu0 0.0
        %749 = vmatpush.msra.mxu0 0.0
        %750 = vmatpush.msra.mxu0 0.0
        %751 = vmatpush.msra.mxu0 0.0
        %752 = vmatpush.msra.mxu0 0.0
        %753 = vmatpush.msra.mxu0 0.0
        %754 = vmatpush.msra.mxu0 0.0
        %755 = vmatpush.msra.mxu0 0.0
        %756 = vmatpush.msra.mxu0 0.0
        %757 = vmatpush.msra.mxu0 0.0
        %758 = vmatpush.msra.mxu0 0.0
        %759 = vmatpush.msra.mxu0 %v225
        %760 = vmatpush.msra.mxu0 %v224
        %761 = vmatmul.f32.gmra.mxu0 %v743
        %v762 = vpop.f32.mrf.mxu0
        %v763 = vadd.f32 0.0, %v762
        %764 = vdwg.mxu0
        %765 = vmatpush.msra.mxu0 0.0
        %766 = vmatpush.msra.mxu0 0.0
        %767 = vmatpush.msra.mxu0 0.0
        %768 = vmatpush.msra.mxu0 0.0
        %769 = vmatpush.msra.mxu0 0.0
        %770 = vmatpush.msra.mxu0 0.0
        %771 = vmatpush.msra.mxu0 0.0
        %772 = vmatpush.msra.mxu0 0.0
        %773 = vmatpush.msra.mxu0 0.0
        %774 = vmatpush.msra.mxu0 0.0
        %775 = vmatpush.msra.mxu0 0.0
        %776 = vmatpush.msra.mxu0 0.0
        %777 = vmatpush.msra.mxu0 0.0
        %778 = vmatpush.msra.mxu0 0.0
        %779 = vmatpush.msra.mxu0 %v232
        %780 = vmatpush.msra.mxu0 %v231
        %781 = vmatmul.f32.gmra.mxu0 %v743
        %v782 = vpop.f32.mrf.mxu0
        %v783 = vadd.f32 0.0, %v782
        %784 = vdwg.mxu0
        %v785 = vmax.f32 %v763, %v783
        %v787 = vsel %vm324, %v785, 0
        %789 = vmatpush.msra.mxu0 0.0
        %790 = vmatpush.msra.mxu0 0.0
        %791 = vmatpush.msra.mxu0 0.0
        %792 = vmatpush.msra.mxu0 0.0
        %793 = vmatpush.msra.mxu0 0.0
        %794 = vmatpush.msra.mxu0 0.0
        %795 = vmatpush.msra.mxu0 0.0
        %796 = vmatpush.msra.mxu0 0.0
        %797 = vmatpush.msra.mxu0 0.0
        %798 = vmatpush.msra.mxu0 0.0
        %799 = vmatpush.msra.mxu0 0.0
        %800 = vmatpush.msra.mxu0 0.0
        %801 = vmatpush.msra.mxu0 0.0
        %802 = vmatpush.msra.mxu0 0.0
        %803 = vmatpush.msra.mxu0 0.0
        %804 = vmatpush.msra.mxu0 %v787
        %805 = vmatmul.f32.gmra.mxu0 %v322
        %v806 = vpop.f32.mrf.mxu0
        %v807 = vadd.f32 0.0, %v806
        %808 = vdwg.mxu0
        %v810 = vrot.slane %v807, 1
        %v811 = vrot.slane %v807, 2
        %v812 = vrot.slane %v807, 3
        %816 = vst.msk [vmem:[%s210 + $0x4] sm:$0x1] %vm355, %v807
        %817 = vst.msk [vmem:[%s210 + $0x24] sm:$0x1] %vm355, %v810
        %818 = vst.msk [vmem:[%s210 + $0x44] sm:$0x1] %vm355, %v811
        %819 = vst.msk [vmem:[%s210 + $0x64] sm:$0x1] %vm355, %v812
        %v820 = vld [vmem:[%s189 + $0xa] sm:$0x1]
        %v821 = vld [vmem:[%s189 + $0x8a] sm:$0x1]
        %v822 = vld [vmem:[%s189 + $0x10a] sm:$0x1]
        %v823 = vld [vmem:[%s189 + $0x18a] sm:$0x1]
        %v824 = vld [vmem:[%s189 + $0xb] sm:$0x1]
        %v825 = vld [vmem:[%s189 + $0x8b] sm:$0x1]
        %v826 = vld [vmem:[%s189 + $0x10b] sm:$0x1]
        %v827 = vld [vmem:[%s189 + $0x18b] sm:$0x1]
        %v828 = vmax.f32 %v820, %v824
        %v829 = vmax.f32 %v821, %v825
        %v830 = vmax.f32 %v822, %v826
        %v831 = vmax.f32 %v823, %v827
        %v832 = vld [vmem:[%s246 + $0xa] sm:$0x1]
        %v833 = vld [vmem:[%s246 + $0x8a] sm:$0x1]
        %v834 = vld [vmem:[%s246 + $0x10a] sm:$0x1]
        %v835 = vld [vmem:[%s246 + $0x18a] sm:$0x1]
        %v836 = vld [vmem:[%s246 + $0xb] sm:$0x1]
        %v837 = vld [vmem:[%s246 + $0x8b] sm:$0x1]
        %v838 = vld [vmem:[%s246 + $0x10b] sm:$0x1]
        %v839 = vld [vmem:[%s246 + $0x18b] sm:$0x1]
        %v840 = vmax.f32 %v832, %v836
        %v841 = vmax.f32 %v833, %v837
        %v842 = vmax.f32 %v834, %v838
        %v843 = vmax.f32 %v835, %v839
        %v844 = vmax.f32 %v828, %v840
        %v845 = vmax.f32 %v829, %v841
        %v846 = vmax.f32 %v830, %v842
        %v847 = vmax.f32 %v831, %v843
        %v852 = vrot.slane %v845, 7
        %v853 = vsel %vm268, %v852, %v844
        %v854 = vrot.slane %v846, 6
        %v855 = vsel %vm271, %v854, %v853
        %v856 = vrot.slane %v847, 5
        %v857 = vsel %vm274, %v856, %v855
        %v858 = vsel %vm276, %v857, 0
        %860 = vmatpush.msra.mxu0 0.0
        %861 = vmatpush.msra.mxu0 0.0
        %862 = vmatpush.msra.mxu0 0.0
        %863 = vmatpush.msra.mxu0 0.0
        %864 = vmatpush.msra.mxu0 0.0
        %865 = vmatpush.msra.mxu0 0.0
        %866 = vmatpush.msra.mxu0 0.0
        %867 = vmatpush.msra.mxu0 0.0
        %868 = vmatpush.msra.mxu0 0.0
        %869 = vmatpush.msra.mxu0 0.0
        %870 = vmatpush.msra.mxu0 0.0
        %871 = vmatpush.msra.mxu0 0.0
        %872 = vmatpush.msra.mxu0 0.0
        %873 = vmatpush.msra.mxu0 0.0
        %874 = vmatpush.msra.mxu0 %v225
        %875 = vmatpush.msra.mxu0 %v224
        %876 = vmatmul.f32.gmra.mxu0 %v858
        %v877 = vpop.f32.mrf.mxu0
        %v878 = vadd.f32 0.0, %v877
        %879 = vdwg.mxu0
        %880 = vmatpush.msra.mxu0 0.0
        %881 = vmatpush.msra.mxu0 0.0
        %882 = vmatpush.msra.mxu0 0.0
        %883 = vmatpush.msra.mxu0 0.0
        %884 = vmatpush.msra.mxu0 0.0
        %885 = vmatpush.msra.mxu0 0.0
        %886 = vmatpush.msra.mxu0 0.0
        %887 = vmatpush.msra.mxu0 0.0
        %888 = vmatpush.msra.mxu0 0.0
        %889 = vmatpush.msra.mxu0 0.0
        %890 = vmatpush.msra.mxu0 0.0
        %891 = vmatpush.msra.mxu0 0.0
        %892 = vmatpush.msra.mxu0 0.0
        %893 = vmatpush.msra.mxu0 0.0
        %894 = vmatpush.msra.mxu0 %v232
        %895 = vmatpush.msra.mxu0 %v231
        %896 = vmatmul.f32.gmra.mxu0 %v858
        %v897 = vpop.f32.mrf.mxu0
        %v898 = vadd.f32 0.0, %v897
        %899 = vdwg.mxu0
        %v900 = vmax.f32 %v878, %v898
        %v902 = vsel %vm324, %v900, 0
        %904 = vmatpush.msra.mxu0 0.0
        %905 = vmatpush.msra.mxu0 0.0
        %906 = vmatpush.msra.mxu0 0.0
        %907 = vmatpush.msra.mxu0 0.0
        %908 = vmatpush.msra.mxu0 0.0
        %909 = vmatpush.msra.mxu0 0.0
        %910 = vmatpush.msra.mxu0 0.0
        %911 = vmatpush.msra.mxu0 0.0
        %912 = vmatpush.msra.mxu0 0.0
        %913 = vmatpush.msra.mxu0 0.0
        %914 = vmatpush.msra.mxu0 0.0
        %915 = vmatpush.msra.mxu0 0.0
        %916 = vmatpush.msra.mxu0 0.0
        %917 = vmatpush.msra.mxu0 0.0
        %918 = vmatpush.msra.mxu0 0.0
        %919 = vmatpush.msra.mxu0 %v902
        %920 = vmatmul.f32.gmra.mxu0 %v322
        %v921 = vpop.f32.mrf.mxu0
        %v922 = vadd.f32 0.0, %v921
        %923 = vdwg.mxu0
        %v925 = vrot.slane %v922, 1
        %v926 = vrot.slane %v922, 2
        %v927 = vrot.slane %v922, 3
        %931 = vst.msk [vmem:[%s210 + $0x5] sm:$0x1] %vm355, %v922
        %932 = vst.msk [vmem:[%s210 + $0x25] sm:$0x1] %vm355, %v925
        %933 = vst.msk [vmem:[%s210 + $0x45] sm:$0x1] %vm355, %v926
        %934 = vst.msk [vmem:[%s210 + $0x65] sm:$0x1] %vm355, %v927
        %v935 = vld [vmem:[%s189 + $0xc] sm:$0x1]
        %v936 = vld [vmem:[%s189 + $0x8c] sm:$0x1]
        %v937 = vld [vmem:[%s189 + $0x10c] sm:$0x1]
        %v938 = vld [vmem:[%s189 + $0x18c] sm:$0x1]
        %v939 = vld [vmem:[%s189 + $0xd] sm:$0x1]
        %v940 = vld [vmem:[%s189 + $0x8d] sm:$0x1]
        %v941 = vld [vmem:[%s189 + $0x10d] sm:$0x1]
        %v942 = vld [vmem:[%s189 + $0x18d] sm:$0x1]
        %v943 = vmax.f32 %v935, %v939
        %v944 = vmax.f32 %v936, %v940
        %v945 = vmax.f32 %v937, %v941
        %v946 = vmax.f32 %v938, %v942
        %v947 = vld [vmem:[%s246 + $0xc] sm:$0x1]
        %v948 = vld [vmem:[%s246 + $0x8c] sm:$0x1]
        %v949 = vld [vmem:[%s246 + $0x10c] sm:$0x1]
        %v950 = vld [vmem:[%s246 + $0x18c] sm:$0x1]
        %v951 = vld [vmem:[%s246 + $0xd] sm:$0x1]
        %v952 = vld [vmem:[%s246 + $0x8d] sm:$0x1]
        %v953 = vld [vmem:[%s246 + $0x10d] sm:$0x1]
        %v954 = vld [vmem:[%s246 + $0x18d] sm:$0x1]
        %v955 = vmax.f32 %v947, %v951
        %v956 = vmax.f32 %v948, %v952
        %v957 = vmax.f32 %v949, %v953
        %v958 = vmax.f32 %v950, %v954
        %v959 = vmax.f32 %v943, %v955
        %v960 = vmax.f32 %v944, %v956
        %v961 = vmax.f32 %v945, %v957
        %v962 = vmax.f32 %v946, %v958
        %v967 = vrot.slane %v960, 7
        %v968 = vsel %vm268, %v967, %v959
        %v969 = vrot.slane %v961, 6
        %v970 = vsel %vm271, %v969, %v968
        %v971 = vrot.slane %v962, 5
        %v972 = vsel %vm274, %v971, %v970
        %v973 = vsel %vm276, %v972, 0
        %975 = vmatpush.msra.mxu0 0.0
        %976 = vmatpush.msra.mxu0 0.0
        %977 = vmatpush.msra.mxu0 0.0
        %978 = vmatpush.msra.mxu0 0.0
        %979 = vmatpush.msra.mxu0 0.0
        %980 = vmatpush.msra.mxu0 0.0
        %981 = vmatpush.msra.mxu0 0.0
        %982 = vmatpush.msra.mxu0 0.0
        %983 = vmatpush.msra.mxu0 0.0
        %984 = vmatpush.msra.mxu0 0.0
        %985 = vmatpush.msra.mxu0 0.0
        %986 = vmatpush.msra.mxu0 0.0
        %987 = vmatpush.msra.mxu0 0.0
        %988 = vmatpush.msra.mxu0 0.0
        %989 = vmatpush.msra.mxu0 %v225
        %990 = vmatpush.msra.mxu0 %v224
        %991 = vmatmul.f32.gmra.mxu0 %v973
        %v992 = vpop.f32.mrf.mxu0
        %v993 = vadd.f32 0.0, %v992
        %994 = vdwg.mxu0
        %995 = vmatpush.msra.mxu0 0.0
        %996 = vmatpush.msra.mxu0 0.0
        %997 = vmatpush.msra.mxu0 0.0
        %998 = vmatpush.msra.mxu0 0.0
        %999 = vmatpush.msra.mxu0 0.0
        %1000 = vmatpush.msra.mxu0 0.0
        %1001 = vmatpush.msra.mxu0 0.0
        %1002 = vmatpush.msra.mxu0 0.0
        %1003 = vmatpush.msra.mxu0 0.0
        %1004 = vmatpush.msra.mxu0 0.0
        %1005 = vmatpush.msra.mxu0 0.0
        %1006 = vmatpush.msra.mxu0 0.0
        %1007 = vmatpush.msra.mxu0 0.0
        %1008 = vmatpush.msra.mxu0 0.0
        %1009 = vmatpush.msra.mxu0 %v232
        %1010 = vmatpush.msra.mxu0 %v231
        %1011 = vmatmul.f32.gmra.mxu0 %v973
        %v1012 = vpop.f32.mrf.mxu0
        %v1013 = vadd.f32 0.0, %v1012
        %1014 = vdwg.mxu0
        %v1015 = vmax.f32 %v993, %v1013
        %v1017 = vsel %vm324, %v1015, 0
        %1019 = vmatpush.msra.mxu0 0.0
        %1020 = vmatpush.msra.mxu0 0.0
        %1021 = vmatpush.msra.mxu0 0.0
        %1022 = vmatpush.msra.mxu0 0.0
        %1023 = vmatpush.msra.mxu0 0.0
        %1024 = vmatpush.msra.mxu0 0.0
        %1025 = vmatpush.msra.mxu0 0.0
        %1026 = vmatpush.msra.mxu0 0.0
        %1027 = vmatpush.msra.mxu0 0.0
        %1028 = vmatpush.msra.mxu0 0.0
        %1029 = vmatpush.msra.mxu0 0.0
        %1030 = vmatpush.msra.mxu0 0.0
        %1031 = vmatpush.msra.mxu0 0.0
        %1032 = vmatpush.msra.mxu0 0.0
        %1033 = vmatpush.msra.mxu0 0.0
        %1034 = vmatpush.msra.mxu0 %v1017
        %1035 = vmatmul.f32.gmra.mxu0 %v322
        %v1036 = vpop.f32.mrf.mxu0
        %v1037 = vadd.f32 0.0, %v1036
        %1038 = vdwg.mxu0
        %v1040 = vrot.slane %v1037, 1
        %v1041 = vrot.slane %v1037, 2
        %v1042 = vrot.slane %v1037, 3
        %1046 = vst.msk [vmem:[%s210 + $0x6] sm:$0x1] %vm355, %v1037
        %1047 = vst.msk [vmem:[%s210 + $0x26] sm:$0x1] %vm355, %v1040
        %1048 = vst.msk [vmem:[%s210 + $0x46] sm:$0x1] %vm355, %v1041
        %1049 = vst.msk [vmem:[%s210 + $0x66] sm:$0x1] %vm355, %v1042
        %v1050 = vld [vmem:[%s189 + $0xe] sm:$0x1]
        %v1051 = vld [vmem:[%s189 + $0x8e] sm:$0x1]
        %v1052 = vld [vmem:[%s189 + $0x10e] sm:$0x1]
        %v1053 = vld [vmem:[%s189 + $0x18e] sm:$0x1]
        %v1054 = vld [vmem:[%s189 + $0xf] sm:$0x1]
        %v1055 = vld [vmem:[%s189 + $0x8f] sm:$0x1]
        %v1056 = vld [vmem:[%s189 + $0x10f] sm:$0x1]
        %v1057 = vld [vmem:[%s189 + $0x18f] sm:$0x1]
        %v1058 = vmax.f32 %v1050, %v1054
        %v1059 = vmax.f32 %v1051, %v1055
        %v1060 = vmax.f32 %v1052, %v1056
        %v1061 = vmax.f32 %v1053, %v1057
        %v1062 = vld [vmem:[%s246 + $0xe] sm:$0x1]
        %v1063 = vld [vmem:[%s246 + $0x8e] sm:$0x1]
        %v1064 = vld [vmem:[%s246 + $0x10e] sm:$0x1]
        %v1065 = vld [vmem:[%s246 + $0x18e] sm:$0x1]
        %v1066 = vld [vmem:[%s246 + $0xf] sm:$0x1]
        %v1067 = vld [vmem:[%s246 + $0x8f] sm:$0x1]
        %v1068 = vld [vmem:[%s246 + $0x10f] sm:$0x1]
        %v1069 = vld [vmem:[%s246 + $0x18f] sm:$0x1]
        %v1070 = vmax.f32 %v1062, %v1066
        %v1071 = vmax.f32 %v1063, %v1067
        %v1072 = vmax.f32 %v1064, %v1068
        %v1073 = vmax.f32 %v1065, %v1069
        %v1074 = vmax.f32 %v1058, %v1070
        %v1075 = vmax.f32 %v1059, %v1071
        %v1076 = vmax.f32 %v1060, %v1072
        %v1077 = vmax.f32 %v1061, %v1073
        %v1082 = vrot.slane %v1075, 7
        %v1083 = vsel %vm268, %v1082, %v1074
        %v1084 = vrot.slane %v1076, 6
        %v1085 = vsel %vm271, %v1084, %v1083
        %v1086 = vrot.slane %v1077, 5
        %v1087 = vsel %vm274, %v1086, %v1085
        %v1088 = vsel %vm276, %v1087, 0
        %1090 = vmatpush.msra.mxu0 0.0
        %1091 = vmatpush.msra.mxu0 0.0
        %1092 = vmatpush.msra.mxu0 0.0
        %1093 = vmatpush.msra.mxu0 0.0
        %1094 = vmatpush.msra.mxu0 0.0
        %1095 = vmatpush.msra.mxu0 0.0
        %1096 = vmatpush.msra.mxu0 0.0
        %1097 = vmatpush.msra.mxu0 0.0
        %1098 = vmatpush.msra.mxu0 0.0
        %1099 = vmatpush.msra.mxu0 0.0
        %1100 = vmatpush.msra.mxu0 0.0
        %1101 = vmatpush.msra.mxu0 0.0
        %1102 = vmatpush.msra.mxu0 0.0
        %1103 = vmatpush.msra.mxu0 0.0
        %1104 = vmatpush.msra.mxu0 %v225
        %1105 = vmatpush.msra.mxu0 %v224
        %1106 = vmatmul.f32.gmra.mxu0 %v1088
        %v1107 = vpop.f32.mrf.mxu0
        %v1108 = vadd.f32 0.0, %v1107
        %1109 = vdwg.mxu0
        %1110 = vmatpush.msra.mxu0 0.0
        %1111 = vmatpush.msra.mxu0 0.0
        %1112 = vmatpush.msra.mxu0 0.0
        %1113 = vmatpush.msra.mxu0 0.0
        %1114 = vmatpush.msra.mxu0 0.0
        %1115 = vmatpush.msra.mxu0 0.0
        %1116 = vmatpush.msra.mxu0 0.0
        %1117 = vmatpush.msra.mxu0 0.0
        %1118 = vmatpush.msra.mxu0 0.0
        %1119 = vmatpush.msra.mxu0 0.0
        %1120 = vmatpush.msra.mxu0 0.0
        %1121 = vmatpush.msra.mxu0 0.0
        %1122 = vmatpush.msra.mxu0 0.0
        %1123 = vmatpush.msra.mxu0 0.0
        %1124 = vmatpush.msra.mxu0 %v232
        %1125 = vmatpush.msra.mxu0 %v231
        %1126 = vmatmul.f32.gmra.mxu0 %v1088
        %v1127 = vpop.f32.mrf.mxu0
        %v1128 = vadd.f32 0.0, %v1127
        %1129 = vdwg.mxu0
        %v1130 = vmax.f32 %v1108, %v1128
        %v1132 = vsel %vm324, %v1130, 0
        %1134 = vmatpush.msra.mxu0 0.0
        %1135 = vmatpush.msra.mxu0 0.0
        %1136 = vmatpush.msra.mxu0 0.0
        %1137 = vmatpush.msra.mxu0 0.0
        %1138 = vmatpush.msra.mxu0 0.0
        %1139 = vmatpush.msra.mxu0 0.0
        %1140 = vmatpush.msra.mxu0 0.0
        %1141 = vmatpush.msra.mxu0 0.0
        %1142 = vmatpush.msra.mxu0 0.0
        %1143 = vmatpush.msra.mxu0 0.0
        %1144 = vmatpush.msra.mxu0 0.0
        %1145 = vmatpush.msra.mxu0 0.0
        %1146 = vmatpush.msra.mxu0 0.0
        %1147 = vmatpush.msra.mxu0 0.0
        %1148 = vmatpush.msra.mxu0 0.0
        %1149 = vmatpush.msra.mxu0 %v1132
        %1150 = vmatmul.f32.gmra.mxu0 %v322
        %v1151 = vpop.f32.mrf.mxu0
        %v1152 = vadd.f32 0.0, %v1151
        %1153 = vdwg.mxu0
        %v1155 = vrot.slane %v1152, 1
        %v1156 = vrot.slane %v1152, 2
        %v1157 = vrot.slane %v1152, 3
        %1161 = vst.msk [vmem:[%s210 + $0x7] sm:$0x1] %vm355, %v1152
        %1162 = vst.msk [vmem:[%s210 + $0x27] sm:$0x1] %vm355, %v1155
        %1163 = vst.msk [vmem:[%s210 + $0x47] sm:$0x1] %vm355, %v1156
        %1164 = vst.msk [vmem:[%s210 + $0x67] sm:$0x1] %vm355, %v1157
        %s1165 = scalar_lea.vmem %s189, 32 [#allocation5]
        %v1166 = vld [vmem:[%s1165] sm:$0x1]
        %v1167 = vld [vmem:[%s1165 + $0x80] sm:$0x1]
        %v1168 = vld [vmem:[%s1165 + $0x100] sm:$0x1]
        %v1169 = vld [vmem:[%s1165 + $0x180] sm:$0x1]
        %v1170 = vld [vmem:[%s1165 + $0x1] sm:$0x1]
        %v1171 = vld [vmem:[%s1165 + $0x81] sm:$0x1]
        %v1172 = vld [vmem:[%s1165 + $0x101] sm:$0x1]
        %v1173 = vld [vmem:[%s1165 + $0x181] sm:$0x1]
        %v1174 = vmax.f32 %v1166, %v1170
        %v1175 = vmax.f32 %v1167, %v1171
        %v1176 = vmax.f32 %v1168, %v1172
        %v1177 = vmax.f32 %v1169, %v1173
        %s1178 = scalar_lea.vmem %s189, 48 [#allocation5]
        %v1179 = vld [vmem:[%s1178] sm:$0x1]
        %v1180 = vld [vmem:[%s1178 + $0x80] sm:$0x1]
        %v1181 = vld [vmem:[%s1178 + $0x100] sm:$0x1]
        %v1182 = vld [vmem:[%s1178 + $0x180] sm:$0x1]
        %v1183 = vld [vmem:[%s1178 + $0x1] sm:$0x1]
        %v1184 = vld [vmem:[%s1178 + $0x81] sm:$0x1]
        %v1185 = vld [vmem:[%s1178 + $0x101] sm:$0x1]
        %v1186 = vld [vmem:[%s1178 + $0x181] sm:$0x1]
        %v1187 = vmax.f32 %v1179, %v1183
        %v1188 = vmax.f32 %v1180, %v1184
        %v1189 = vmax.f32 %v1181, %v1185
        %v1190 = vmax.f32 %v1182, %v1186
        %v1191 = vmax.f32 %v1174, %v1187
        %v1192 = vmax.f32 %v1175, %v1188
        %v1193 = vmax.f32 %v1176, %v1189
        %v1194 = vmax.f32 %v1177, %v1190
        %v1199 = vrot.slane %v1192, 7
        %v1200 = vsel %vm268, %v1199, %v1191
        %v1201 = vrot.slane %v1193, 6
        %v1202 = vsel %vm271, %v1201, %v1200
        %v1203 = vrot.slane %v1194, 5
        %v1204 = vsel %vm274, %v1203, %v1202
        %v1205 = vsel %vm276, %v1204, 0
        %1207 = vmatpush.msra.mxu0 0.0
        %1208 = vmatpush.msra.mxu0 0.0
        %1209 = vmatpush.msra.mxu0 0.0
        %1210 = vmatpush.msra.mxu0 0.0
        %1211 = vmatpush.msra.mxu0 0.0
        %1212 = vmatpush.msra.mxu0 0.0
        %1213 = vmatpush.msra.mxu0 0.0
        %1214 = vmatpush.msra.mxu0 0.0
        %1215 = vmatpush.msra.mxu0 0.0
        %1216 = vmatpush.msra.mxu0 0.0
        %1217 = vmatpush.msra.mxu0 0.0
        %1218 = vmatpush.msra.mxu0 0.0
        %1219 = vmatpush.msra.mxu0 0.0
        %1220 = vmatpush.msra.mxu0 0.0
        %1221 = vmatpush.msra.mxu0 %v225
        %1222 = vmatpush.msra.mxu0 %v224
        %1223 = vmatmul.f32.gmra.mxu0 %v1205
        %v1224 = vpop.f32.mrf.mxu0
        %v1225 = vadd.f32 0.0, %v1224
        %1226 = vdwg.mxu0
        %1227 = vmatpush.msra.mxu0 0.0
        %1228 = vmatpush.msra.mxu0 0.0
        %1229 = vmatpush.msra.mxu0 0.0
        %1230 = vmatpush.msra.mxu0 0.0
        %1231 = vmatpush.msra.mxu0 0.0
        %1232 = vmatpush.msra.mxu0 0.0
        %1233 = vmatpush.msra.mxu0 0.0
        %1234 = vmatpush.msra.mxu0 0.0
        %1235 = vmatpush.msra.mxu0 0.0
        %1236 = vmatpush.msra.mxu0 0.0
        %1237 = vmatpush.msra.mxu0 0.0
        %1238 = vmatpush.msra.mxu0 0.0
        %1239 = vmatpush.msra.mxu0 0.0
        %1240 = vmatpush.msra.mxu0 0.0
        %1241 = vmatpush.msra.mxu0 %v232
        %1242 = vmatpush.msra.mxu0 %v231
        %1243 = vmatmul.f32.gmra.mxu0 %v1205
        %v1244 = vpop.f32.mrf.mxu0
        %v1245 = vadd.f32 0.0, %v1244
        %1246 = vdwg.mxu0
        %v1247 = vmax.f32 %v1225, %v1245
        %v1249 = vsel %vm324, %v1247, 0
        %1251 = vmatpush.msra.mxu0 0.0
        %1252 = vmatpush.msra.mxu0 0.0
        %1253 = vmatpush.msra.mxu0 0.0
        %1254 = vmatpush.msra.mxu0 0.0
        %1255 = vmatpush.msra.mxu0 0.0
        %1256 = vmatpush.msra.mxu0 0.0
        %1257 = vmatpush.msra.mxu0 0.0
        %1258 = vmatpush.msra.mxu0 0.0
        %1259 = vmatpush.msra.mxu0 0.0
        %1260 = vmatpush.msra.mxu0 0.0
        %1261 = vmatpush.msra.mxu0 0.0
        %1262 = vmatpush.msra.mxu0 0.0
        %1263 = vmatpush.msra.mxu0 0.0
        %1264 = vmatpush.msra.mxu0 0.0
        %1265 = vmatpush.msra.mxu0 0.0
        %1266 = vmatpush.msra.mxu0 %v1249
        %1267 = vmatmul.f32.gmra.mxu0 %v322
        %v1268 = vpop.f32.mrf.mxu0
        %v1269 = vadd.f32 0.0, %v1268
        %1270 = vdwg.mxu0
        %v1272 = vrot.slane %v1269, 1
        %v1273 = vrot.slane %v1269, 2
        %v1274 = vrot.slane %v1269, 3
        %s1278 = scalar_lea.vmem %s210, 8 [#allocation7]
        %1279 = vst.msk [vmem:[%s1278] sm:$0x1] %vm355, %v1269
        %1280 = vst.msk [vmem:[%s1278 + $0x20] sm:$0x1] %vm355, %v1272
        %1281 = vst.msk [vmem:[%s1278 + $0x40] sm:$0x1] %vm355, %v1273
        %1282 = vst.msk [vmem:[%s1278 + $0x60] sm:$0x1] %vm355, %v1274
        %v1283 = vld [vmem:[%s1165 + $0x2] sm:$0x1]
        %v1284 = vld [vmem:[%s1165 + $0x82] sm:$0x1]
        %v1285 = vld [vmem:[%s1165 + $0x102] sm:$0x1]
        %v1286 = vld [vmem:[%s1165 + $0x182] sm:$0x1]
        %v1287 = vld [vmem:[%s1165 + $0x3] sm:$0x1]
        %v1288 = vld [vmem:[%s1165 + $0x83] sm:$0x1]
        %v1289 = vld [vmem:[%s1165 + $0x103] sm:$0x1]
        %v1290 = vld [vmem:[%s1165 + $0x183] sm:$0x1]
        %v1291 = vmax.f32 %v1283, %v1287
        %v1292 = vmax.f32 %v1284, %v1288
        %v1293 = vmax.f32 %v1285, %v1289
        %v1294 = vmax.f32 %v1286, %v1290
        %v1295 = vld [vmem:[%s1178 + $0x2] sm:$0x1]
        %v1296 = vld [vmem:[%s1178 + $0x82] sm:$0x1]
        %v1297 = vld [vmem:[%s1178 + $0x102] sm:$0x1]
        %v1298 = vld [vmem:[%s1178 + $0x182] sm:$0x1]
        %v1299 = vld [vmem:[%s1178 + $0x3] sm:$0x1]
        %v1300 = vld [vmem:[%s1178 + $0x83] sm:$0x1]
        %v1301 = vld [vmem:[%s1178 + $0x103] sm:$0x1]
        %v1302 = vld [vmem:[%s1178 + $0x183] sm:$0x1]
        %v1303 = vmax.f32 %v1295, %v1299
        %v1304 = vmax.f32 %v1296, %v1300
        %v1305 = vmax.f32 %v1297, %v1301
        %v1306 = vmax.f32 %v1298, %v1302
        %v1307 = vmax.f32 %v1291, %v1303
        %v1308 = vmax.f32 %v1292, %v1304
        %v1309 = vmax.f32 %v1293, %v1305
        %v1310 = vmax.f32 %v1294, %v1306
        %v1315 = vrot.slane %v1308, 7
        %v1316 = vsel %vm268, %v1315, %v1307
        %v1317 = vrot.slane %v1309, 6
        %v1318 = vsel %vm271, %v1317, %v1316
        %v1319 = vrot.slane %v1310, 5
        %v1320 = vsel %vm274, %v1319, %v1318
        %v1321 = vsel %vm276, %v1320, 0
        %1323 = vmatpush.msra.mxu0 0.0
        %1324 = vmatpush.msra.mxu0 0.0
        %1325 = vmatpush.msra.mxu0 0.0
        %1326 = vmatpush.msra.mxu0 0.0
        %1327 = vmatpush.msra.mxu0 0.0
        %1328 = vmatpush.msra.mxu0 0.0
        %1329 = vmatpush.msra.mxu0 0.0
        %1330 = vmatpush.msra.mxu0 0.0
        %1331 = vmatpush.msra.mxu0 0.0
        %1332 = vmatpush.msra.mxu0 0.0
        %1333 = vmatpush.msra.mxu0 0.0
        %1334 = vmatpush.msra.mxu0 0.0
        %1335 = vmatpush.msra.mxu0 0.0
        %1336 = vmatpush.msra.mxu0 0.0
        %1337 = vmatpush.msra.mxu0 %v225
        %1338 = vmatpush.msra.mxu0 %v224
        %1339 = vmatmul.f32.gmra.mxu0 %v1321
        %v1340 = vpop.f32.mrf.mxu0
        %v1341 = vadd.f32 0.0, %v1340
        %1342 = vdwg.mxu0
        %1343 = vmatpush.msra.mxu0 0.0
        %1344 = vmatpush.msra.mxu0 0.0
        %1345 = vmatpush.msra.mxu0 0.0
        %1346 = vmatpush.msra.mxu0 0.0
        %1347 = vmatpush.msra.mxu0 0.0
        %1348 = vmatpush.msra.mxu0 0.0
        %1349 = vmatpush.msra.mxu0 0.0
        %1350 = vmatpush.msra.mxu0 0.0
        %1351 = vmatpush.msra.mxu0 0.0
        %1352 = vmatpush.msra.mxu0 0.0
        %1353 = vmatpush.msra.mxu0 0.0
        %1354 = vmatpush.msra.mxu0 0.0
        %1355 = vmatpush.msra.mxu0 0.0
        %1356 = vmatpush.msra.mxu0 0.0
        %1357 = vmatpush.msra.mxu0 %v232
        %1358 = vmatpush.msra.mxu0 %v231
        %1359 = vmatmul.f32.gmra.mxu0 %v1321
        %v1360 = vpop.f32.mrf.mxu0
        %v1361 = vadd.f32 0.0, %v1360
        %1362 = vdwg.mxu0
        %v1363 = vmax.f32 %v1341, %v1361
        %v1365 = vsel %vm324, %v1363, 0
        %1367 = vmatpush.msra.mxu0 0.0
        %1368 = vmatpush.msra.mxu0 0.0
        %1369 = vmatpush.msra.mxu0 0.0
        %1370 = vmatpush.msra.mxu0 0.0
        %1371 = vmatpush.msra.mxu0 0.0
        %1372 = vmatpush.msra.mxu0 0.0
        %1373 = vmatpush.msra.mxu0 0.0
        %1374 = vmatpush.msra.mxu0 0.0
        %1375 = vmatpush.msra.mxu0 0.0
        %1376 = vmatpush.msra.mxu0 0.0
        %1377 = vmatpush.msra.mxu0 0.0
        %1378 = vmatpush.msra.mxu0 0.0
        %1379 = vmatpush.msra.mxu0 0.0
        %1380 = vmatpush.msra.mxu0 0.0
        %1381 = vmatpush.msra.mxu0 0.0
        %1382 = vmatpush.msra.mxu0 %v1365
        %1383 = vmatmul.f32.gmra.mxu0 %v322
        %v1384 = vpop.f32.mrf.mxu0
        %v1385 = vadd.f32 0.0, %v1384
        %1386 = vdwg.mxu0
        %v1388 = vrot.slane %v1385, 1
        %v1389 = vrot.slane %v1385, 2
        %v1390 = vrot.slane %v1385, 3
        %1394 = vst.msk [vmem:[%s1278 + $0x1] sm:$0x1] %vm355, %v1385
        %1395 = vst.msk [vmem:[%s1278 + $0x21] sm:$0x1] %vm355, %v1388
        %1396 = vst.msk [vmem:[%s1278 + $0x41] sm:$0x1] %vm355, %v1389
        %1397 = vst.msk [vmem:[%s1278 + $0x61] sm:$0x1] %vm355, %v1390
        %v1398 = vld [vmem:[%s1165 + $0x4] sm:$0x1]
        %v1399 = vld [vmem:[%s1165 + $0x84] sm:$0x1]
        %v1400 = vld [vmem:[%s1165 + $0x104] sm:$0x1]
        %v1401 = vld [vmem:[%s1165 + $0x184] sm:$0x1]
        %v1402 = vld [vmem:[%s1165 + $0x5] sm:$0x1]
        %v1403 = vld [vmem:[%s1165 + $0x85] sm:$0x1]
        %v1404 = vld [vmem:[%s1165 + $0x105] sm:$0x1]
        %v1405 = vld [vmem:[%s1165 + $0x185] sm:$0x1]
        %v1406 = vmax.f32 %v1398, %v1402
        %v1407 = vmax.f32 %v1399, %v1403
        %v1408 = vmax.f32 %v1400, %v1404
        %v1409 = vmax.f32 %v1401, %v1405
        %v1410 = vld [vmem:[%s1178 + $0x4] sm:$0x1]
        %v1411 = vld [vmem:[%s1178 + $0x84] sm:$0x1]
        %v1412 = vld [vmem:[%s1178 + $0x104] sm:$0x1]
        %v1413 = vld [vmem:[%s1178 + $0x184] sm:$0x1]
        %v1414 = vld [vmem:[%s1178 + $0x5] sm:$0x1]
        %v1415 = vld [vmem:[%s1178 + $0x85] sm:$0x1]
        %v1416 = vld [vmem:[%s1178 + $0x105] sm:$0x1]
        %v1417 = vld [vmem:[%s1178 + $0x185] sm:$0x1]
        %v1418 = vmax.f32 %v1410, %v1414
        %v1419 = vmax.f32 %v1411, %v1415
        %v1420 = vmax.f32 %v1412, %v1416
        %v1421 = vmax.f32 %v1413, %v1417
        %v1422 = vmax.f32 %v1406, %v1418
        %v1423 = vmax.f32 %v1407, %v1419
        %v1424 = vmax.f32 %v1408, %v1420
        %v1425 = vmax.f32 %v1409, %v1421
        %v1430 = vrot.slane %v1423, 7
        %v1431 = vsel %vm268, %v1430, %v1422
        %v1432 = vrot.slane %v1424, 6
        %v1433 = vsel %vm271, %v1432, %v1431
        %v1434 = vrot.slane %v1425, 5
        %v1435 = vsel %vm274, %v1434, %v1433
        %v1436 = vsel %vm276, %v1435, 0
        %1438 = vmatpush.msra.mxu0 0.0
        %1439 = vmatpush.msra.mxu0 0.0
        %1440 = vmatpush.msra.mxu0 0.0
        %1441 = vmatpush.msra.mxu0 0.0
        %1442 = vmatpush.msra.mxu0 0.0
        %1443 = vmatpush.msra.mxu0 0.0
        %1444 = vmatpush.msra.mxu0 0.0
        %1445 = vmatpush.msra.mxu0 0.0
        %1446 = vmatpush.msra.mxu0 0.0
        %1447 = vmatpush.msra.mxu0 0.0
        %1448 = vmatpush.msra.mxu0 0.0
        %1449 = vmatpush.msra.mxu0 0.0
        %1450 = vmatpush.msra.mxu0 0.0
        %1451 = vmatpush.msra.mxu0 0.0
        %1452 = vmatpush.msra.mxu0 %v225
        %1453 = vmatpush.msra.mxu0 %v224
        %1454 = vmatmul.f32.gmra.mxu0 %v1436
        %v1455 = vpop.f32.mrf.mxu0
        %v1456 = vadd.f32 0.0, %v1455
        %1457 = vdwg.mxu0
        %1458 = vmatpush.msra.mxu0 0.0
        %1459 = vmatpush.msra.mxu0 0.0
        %1460 = vmatpush.msra.mxu0 0.0
        %1461 = vmatpush.msra.mxu0 0.0
        %1462 = vmatpush.msra.mxu0 0.0
        %1463 = vmatpush.msra.mxu0 0.0
        %1464 = vmatpush.msra.mxu0 0.0
        %1465 = vmatpush.msra.mxu0 0.0
        %1466 = vmatpush.msra.mxu0 0.0
        %1467 = vmatpush.msra.mxu0 0.0
        %1468 = vmatpush.msra.mxu0 0.0
        %1469 = vmatpush.msra.mxu0 0.0
        %1470 = vmatpush.msra.mxu0 0.0
        %1471 = vmatpush.msra.mxu0 0.0
        %1472 = vmatpush.msra.mxu0 %v232
        %1473 = vmatpush.msra.mxu0 %v231
        %1474 = vmatmul.f32.gmra.mxu0 %v1436
        %v1475 = vpop.f32.mrf.mxu0
        %v1476 = vadd.f32 0.0, %v1475
        %1477 = vdwg.mxu0
        %v1478 = vmax.f32 %v1456, %v1476
        %v1480 = vsel %vm324, %v1478, 0
        %1482 = vmatpush.msra.mxu0 0.0
        %1483 = vmatpush.msra.mxu0 0.0
        %1484 = vmatpush.msra.mxu0 0.0
        %1485 = vmatpush.msra.mxu0 0.0
        %1486 = vmatpush.msra.mxu0 0.0
        %1487 = vmatpush.msra.mxu0 0.0
        %1488 = vmatpush.msra.mxu0 0.0
        %1489 = vmatpush.msra.mxu0 0.0
        %1490 = vmatpush.msra.mxu0 0.0
        %1491 = vmatpush.msra.mxu0 0.0
        %1492 = vmatpush.msra.mxu0 0.0
        %1493 = vmatpush.msra.mxu0 0.0
        %1494 = vmatpush.msra.mxu0 0.0
        %1495 = vmatpush.msra.mxu0 0.0
        %1496 = vmatpush.msra.mxu0 0.0
        %1497 = vmatpush.msra.mxu0 %v1480
        %1498 = vmatmul.f32.gmra.mxu0 %v322
        %v1499 = vpop.f32.mrf.mxu0
        %v1500 = vadd.f32 0.0, %v1499
        %1501 = vdwg.mxu0
        %v1503 = vrot.slane %v1500, 1
        %v1504 = vrot.slane %v1500, 2
        %v1505 = vrot.slane %v1500, 3
        %1509 = vst.msk [vmem:[%s1278 + $0x2] sm:$0x1] %vm355, %v1500
        %1510 = vst.msk [vmem:[%s1278 + $0x22] sm:$0x1] %vm355, %v1503
        %1511 = vst.msk [vmem:[%s1278 + $0x42] sm:$0x1] %vm355, %v1504
        %1512 = vst.msk [vmem:[%s1278 + $0x62] sm:$0x1] %vm355, %v1505
        %v1513 = vld [vmem:[%s1165 + $0x6] sm:$0x1]
        %v1514 = vld [vmem:[%s1165 + $0x86] sm:$0x1]
        %v1515 = vld [vmem:[%s1165 + $0x106] sm:$0x1]
        %v1516 = vld [vmem:[%s1165 + $0x186] sm:$0x1]
        %v1517 = vld [vmem:[%s1165 + $0x7] sm:$0x1]
        %v1518 = vld [vmem:[%s1165 + $0x87] sm:$0x1]
        %v1519 = vld [vmem:[%s1165 + $0x107] sm:$0x1]
        %v1520 = vld [vmem:[%s1165 + $0x187] sm:$0x1]
        %v1521 = vmax.f32 %v1513, %v1517
        %v1522 = vmax.f32 %v1514, %v1518
        %v1523 = vmax.f32 %v1515, %v1519
        %v1524 = vmax.f32 %v1516, %v1520
        %v1525 = vld [vmem:[%s1178 + $0x6] sm:$0x1]
        %v1526 = vld [vmem:[%s1178 + $0x86] sm:$0x1]
        %v1527 = vld [vmem:[%s1178 + $0x106] sm:$0x1]
        %v1528 = vld [vmem:[%s1178 + $0x186] sm:$0x1]
        %v1529 = vld [vmem:[%s1178 + $0x7] sm:$0x1]
        %v1530 = vld [vmem:[%s1178 + $0x87] sm:$0x1]
        %v1531 = vld [vmem:[%s1178 + $0x107] sm:$0x1]
        %v1532 = vld [vmem:[%s1178 + $0x187] sm:$0x1]
        %v1533 = vmax.f32 %v1525, %v1529
        %v1534 = vmax.f32 %v1526, %v1530
        %v1535 = vmax.f32 %v1527, %v1531
        %v1536 = vmax.f32 %v1528, %v1532
        %v1537 = vmax.f32 %v1521, %v1533
        %v1538 = vmax.f32 %v1522, %v1534
        %v1539 = vmax.f32 %v1523, %v1535
        %v1540 = vmax.f32 %v1524, %v1536
        %v1545 = vrot.slane %v1538, 7
        %v1546 = vsel %vm268, %v1545, %v1537
        %v1547 = vrot.slane %v1539, 6
        %v1548 = vsel %vm271, %v1547, %v1546
        %v1549 = vrot.slane %v1540, 5
        %v1550 = vsel %vm274, %v1549, %v1548
        %v1551 = vsel %vm276, %v1550, 0
        %1553 = vmatpush.msra.mxu0 0.0
        %1554 = vmatpush.msra.mxu0 0.0
        %1555 = vmatpush.msra.mxu0 0.0
        %1556 = vmatpush.msra.mxu0 0.0
        %1557 = vmatpush.msra.mxu0 0.0
        %1558 = vmatpush.msra.mxu0 0.0
        %1559 = vmatpush.msra.mxu0 0.0
        %1560 = vmatpush.msra.mxu0 0.0
        %1561 = vmatpush.msra.mxu0 0.0
        %1562 = vmatpush.msra.mxu0 0.0
        %1563 = vmatpush.msra.mxu0 0.0
        %1564 = vmatpush.msra.mxu0 0.0
        %1565 = vmatpush.msra.mxu0 0.0
        %1566 = vmatpush.msra.mxu0 0.0
        %1567 = vmatpush.msra.mxu0 %v225
        %1568 = vmatpush.msra.mxu0 %v224
        %1569 = vmatmul.f32.gmra.mxu0 %v1551
        %v1570 = vpop.f32.mrf.mxu0
        %v1571 = vadd.f32 0.0, %v1570
        %1572 = vdwg.mxu0
        %1573 = vmatpush.msra.mxu0 0.0
        %1574 = vmatpush.msra.mxu0 0.0
        %1575 = vmatpush.msra.mxu0 0.0
        %1576 = vmatpush.msra.mxu0 0.0
        %1577 = vmatpush.msra.mxu0 0.0
        %1578 = vmatpush.msra.mxu0 0.0
        %1579 = vmatpush.msra.mxu0 0.0
        %1580 = vmatpush.msra.mxu0 0.0
        %1581 = vmatpush.msra.mxu0 0.0
        %1582 = vmatpush.msra.mxu0 0.0
        %1583 = vmatpush.msra.mxu0 0.0
        %1584 = vmatpush.msra.mxu0 0.0
        %1585 = vmatpush.msra.mxu0 0.0
        %1586 = vmatpush.msra.mxu0 0.0
        %1587 = vmatpush.msra.mxu0 %v232
        %1588 = vmatpush.msra.mxu0 %v231
        %1589 = vmatmul.f32.gmra.mxu0 %v1551
        %v1590 = vpop.f32.mrf.mxu0
        %v1591 = vadd.f32 0.0, %v1590
        %1592 = vdwg.mxu0
        %v1593 = vmax.f32 %v1571, %v1591
        %v1595 = vsel %vm324, %v1593, 0
        %1597 = vmatpush.msra.mxu0 0.0
        %1598 = vmatpush.msra.mxu0 0.0
        %1599 = vmatpush.msra.mxu0 0.0
        %1600 = vmatpush.msra.mxu0 0.0
        %1601 = vmatpush.msra.mxu0 0.0
        %1602 = vmatpush.msra.mxu0 0.0
        %1603 = vmatpush.msra.mxu0 0.0
        %1604 = vmatpush.msra.mxu0 0.0
        %1605 = vmatpush.msra.mxu0 0.0
        %1606 = vmatpush.msra.mxu0 0.0
        %1607 = vmatpush.msra.mxu0 0.0
        %1608 = vmatpush.msra.mxu0 0.0
        %1609 = vmatpush.msra.mxu0 0.0
        %1610 = vmatpush.msra.mxu0 0.0
        %1611 = vmatpush.msra.mxu0 0.0
        %1612 = vmatpush.msra.mxu0 %v1595
        %1613 = vmatmul.f32.gmra.mxu0 %v322
        %v1614 = vpop.f32.mrf.mxu0
        %v1615 = vadd.f32 0.0, %v1614
        %1616 = vdwg.mxu0
        %v1618 = vrot.slane %v1615, 1
        %v1619 = vrot.slane %v1615, 2
        %v1620 = vrot.slane %v1615, 3
        %1624 = vst.msk [vmem:[%s1278 + $0x3] sm:$0x1] %vm355, %v1615
        %1625 = vst.msk [vmem:[%s1278 + $0x23] sm:$0x1] %vm355, %v1618
        %1626 = vst.msk [vmem:[%s1278 + $0x43] sm:$0x1] %vm355, %v1619
        %1627 = vst.msk [vmem:[%s1278 + $0x63] sm:$0x1] %vm355, %v1620
        %v1628 = vld [vmem:[%s1165 + $0x8] sm:$0x1]
        %v1629 = vld [vmem:[%s1165 + $0x88] sm:$0x1]
        %v1630 = vld [vmem:[%s1165 + $0x108] sm:$0x1]
        %v1631 = vld [vmem:[%s1165 + $0x188] sm:$0x1]
        %v1632 = vld [vmem:[%s1165 + $0x9] sm:$0x1]
        %v1633 = vld [vmem:[%s1165 + $0x89] sm:$0x1]
        %v1634 = vld [vmem:[%s1165 + $0x109] sm:$0x1]
        %v1635 = vld [vmem:[%s1165 + $0x189] sm:$0x1]
        %v1636 = vmax.f32 %v1628, %v1632
        %v1637 = vmax.f32 %v1629, %v1633
        %v1638 = vmax.f32 %v1630, %v1634
        %v1639 = vmax.f32 %v1631, %v1635
        %v1640 = vld [vmem:[%s1178 + $0x8] sm:$0x1]
        %v1641 = vld [vmem:[%s1178 + $0x88] sm:$0x1]
        %v1642 = vld [vmem:[%s1178 + $0x108] sm:$0x1]
        %v1643 = vld [vmem:[%s1178 + $0x188] sm:$0x1]
        %v1644 = vld [vmem:[%s1178 + $0x9] sm:$0x1]
        %v1645 = vld [vmem:[%s1178 + $0x89] sm:$0x1]
        %v1646 = vld [vmem:[%s1178 + $0x109] sm:$0x1]
        %v1647 = vld [vmem:[%s1178 + $0x189] sm:$0x1]
        %v1648 = vmax.f32 %v1640, %v1644
        %v1649 = vmax.f32 %v1641, %v1645
        %v1650 = vmax.f32 %v1642, %v1646
        %v1651 = vmax.f32 %v1643, %v1647
        %v1652 = vmax.f32 %v1636, %v1648
        %v1653 = vmax.f32 %v1637, %v1649
        %v1654 = vmax.f32 %v1638, %v1650
        %v1655 = vmax.f32 %v1639, %v1651
        %v1660 = vrot.slane %v1653, 7
        %v1661 = vsel %vm268, %v1660, %v1652
        %v1662 = vrot.slane %v1654, 6
        %v1663 = vsel %vm271, %v1662, %v1661
        %v1664 = vrot.slane %v1655, 5
        %v1665 = vsel %vm274, %v1664, %v1663
        %v1666 = vsel %vm276, %v1665, 0
        %1668 = vmatpush.msra.mxu0 0.0
        %1669 = vmatpush.msra.mxu0 0.0
        %1670 = vmatpush.msra.mxu0 0.0
        %1671 = vmatpush.msra.mxu0 0.0
        %1672 = vmatpush.msra.mxu0 0.0
        %1673 = vmatpush.msra.mxu0 0.0
        %1674 = vmatpush.msra.mxu0 0.0
        %1675 = vmatpush.msra.mxu0 0.0
        %1676 = vmatpush.msra.mxu0 0.0
        %1677 = vmatpush.msra.mxu0 0.0
        %1678 = vmatpush.msra.mxu0 0.0
        %1679 = vmatpush.msra.mxu0 0.0
        %1680 = vmatpush.msra.mxu0 0.0
        %1681 = vmatpush.msra.mxu0 0.0
        %1682 = vmatpush.msra.mxu0 %v225
        %1683 = vmatpush.msra.mxu0 %v224
        %1684 = vmatmul.f32.gmra.mxu0 %v1666
        %v1685 = vpop.f32.mrf.mxu0
        %v1686 = vadd.f32 0.0, %v1685
        %1687 = vdwg.mxu0
        %1688 = vmatpush.msra.mxu0 0.0
        %1689 = vmatpush.msra.mxu0 0.0
        %1690 = vmatpush.msra.mxu0 0.0
        %1691 = vmatpush.msra.mxu0 0.0
        %1692 = vmatpush.msra.mxu0 0.0
        %1693 = vmatpush.msra.mxu0 0.0
        %1694 = vmatpush.msra.mxu0 0.0
        %1695 = vmatpush.msra.mxu0 0.0
        %1696 = vmatpush.msra.mxu0 0.0
        %1697 = vmatpush.msra.mxu0 0.0
        %1698 = vmatpush.msra.mxu0 0.0
        %1699 = vmatpush.msra.mxu0 0.0
        %1700 = vmatpush.msra.mxu0 0.0
        %1701 = vmatpush.msra.mxu0 0.0
        %1702 = vmatpush.msra.mxu0 %v232
        %1703 = vmatpush.msra.mxu0 %v231
        %1704 = vmatmul.f32.gmra.mxu0 %v1666
        %v1705 = vpop.f32.mrf.mxu0
        %v1706 = vadd.f32 0.0, %v1705
        %1707 = vdwg.mxu0
        %v1708 = vmax.f32 %v1686, %v1706
        %v1710 = vsel %vm324, %v1708, 0
        %1712 = vmatpush.msra.mxu0 0.0
        %1713 = vmatpush.msra.mxu0 0.0
        %1714 = vmatpush.msra.mxu0 0.0
        %1715 = vmatpush.msra.mxu0 0.0
        %1716 = vmatpush.msra.mxu0 0.0
        %1717 = vmatpush.msra.mxu0 0.0
        %1718 = vmatpush.msra.mxu0 0.0
        %1719 = vmatpush.msra.mxu0 0.0
        %1720 = vmatpush.msra.mxu0 0.0
        %1721 = vmatpush.msra.mxu0 0.0
        %1722 = vmatpush.msra.mxu0 0.0
        %1723 = vmatpush.msra.mxu0 0.0
        %1724 = vmatpush.msra.mxu0 0.0
        %1725 = vmatpush.msra.mxu0 0.0
        %1726 = vmatpush.msra.mxu0 0.0
        %1727 = vmatpush.msra.mxu0 %v1710
        %1728 = vmatmul.f32.gmra.mxu0 %v322
        %v1729 = vpop.f32.mrf.mxu0
        %v1730 = vadd.f32 0.0, %v1729
        %1731 = vdwg.mxu0
        %v1733 = vrot.slane %v1730, 1
        %v1734 = vrot.slane %v1730, 2
        %v1735 = vrot.slane %v1730, 3
        %1739 = vst.msk [vmem:[%s1278 + $0x4] sm:$0x1] %vm355, %v1730
        %1740 = vst.msk [vmem:[%s1278 + $0x24] sm:$0x1] %vm355, %v1733
        %1741 = vst.msk [vmem:[%s1278 + $0x44] sm:$0x1] %vm355, %v1734
        %1742 = vst.msk [vmem:[%s1278 + $0x64] sm:$0x1] %vm355, %v1735
        %v1743 = vld [vmem:[%s1165 + $0xa] sm:$0x1]
        %v1744 = vld [vmem:[%s1165 + $0x8a] sm:$0x1]
        %v1745 = vld [vmem:[%s1165 + $0x10a] sm:$0x1]
        %v1746 = vld [vmem:[%s1165 + $0x18a] sm:$0x1]
        %v1747 = vld [vmem:[%s1165 + $0xb] sm:$0x1]
        %v1748 = vld [vmem:[%s1165 + $0x8b] sm:$0x1]
        %v1749 = vld [vmem:[%s1165 + $0x10b] sm:$0x1]
        %v1750 = vld [vmem:[%s1165 + $0x18b] sm:$0x1]
        %v1751 = vmax.f32 %v1743, %v1747
        %v1752 = vmax.f32 %v1744, %v1748
        %v1753 = vmax.f32 %v1745, %v1749
        %v1754 = vmax.f32 %v1746, %v1750
        %v1755 = vld [vmem:[%s1178 + $0xa] sm:$0x1]
        %v1756 = vld [vmem:[%s1178 + $0x8a] sm:$0x1]
        %v1757 = vld [vmem:[%s1178 + $0x10a] sm:$0x1]
        %v1758 = vld [vmem:[%s1178 + $0x18a] sm:$0x1]
        %v1759 = vld [vmem:[%s1178 + $0xb] sm:$0x1]
        %v1760 = vld [vmem:[%s1178 + $0x8b] sm:$0x1]
        %v1761 = vld [vmem:[%s1178 + $0x10b] sm:$0x1]
        %v1762 = vld [vmem:[%s1178 + $0x18b] sm:$0x1]
        %v1763 = vmax.f32 %v1755, %v1759
        %v1764 = vmax.f32 %v1756, %v1760
        %v1765 = vmax.f32 %v1757, %v1761
        %v1766 = vmax.f32 %v1758, %v1762
        %v1767 = vmax.f32 %v1751, %v1763
        %v1768 = vmax.f32 %v1752, %v1764
        %v1769 = vmax.f32 %v1753, %v1765
        %v1770 = vmax.f32 %v1754, %v1766
        %v1775 = vrot.slane %v1768, 7
        %v1776 = vsel %vm268, %v1775, %v1767
        %v1777 = vrot.slane %v1769, 6
        %v1778 = vsel %vm271, %v1777, %v1776
        %v1779 = vrot.slane %v1770, 5
        %v1780 = vsel %vm274, %v1779, %v1778
        %v1781 = vsel %vm276, %v1780, 0
        %1783 = vmatpush.msra.mxu0 0.0
        %1784 = vmatpush.msra.mxu0 0.0
        %1785 = vmatpush.msra.mxu0 0.0
        %1786 = vmatpush.msra.mxu0 0.0
        %1787 = vmatpush.msra.mxu0 0.0
        %1788 = vmatpush.msra.mxu0 0.0
        %1789 = vmatpush.msra.mxu0 0.0
        %1790 = vmatpush.msra.mxu0 0.0
        %1791 = vmatpush.msra.mxu0 0.0
        %1792 = vmatpush.msra.mxu0 0.0
        %1793 = vmatpush.msra.mxu0 0.0
        %1794 = vmatpush.msra.mxu0 0.0
        %1795 = vmatpush.msra.mxu0 0.0
        %1796 = vmatpush.msra.mxu0 0.0
        %1797 = vmatpush.msra.mxu0 %v225
        %1798 = vmatpush.msra.mxu0 %v224
        %1799 = vmatmul.f32.gmra.mxu0 %v1781
        %v1800 = vpop.f32.mrf.mxu0
        %v1801 = vadd.f32 0.0, %v1800
        %1802 = vdwg.mxu0
        %1803 = vmatpush.msra.mxu0 0.0
        %1804 = vmatpush.msra.mxu0 0.0
        %1805 = vmatpush.msra.mxu0 0.0
        %1806 = vmatpush.msra.mxu0 0.0
        %1807 = vmatpush.msra.mxu0 0.0
        %1808 = vmatpush.msra.mxu0 0.0
        %1809 = vmatpush.msra.mxu0 0.0
        %1810 = vmatpush.msra.mxu0 0.0
        %1811 = vmatpush.msra.mxu0 0.0
        %1812 = vmatpush.msra.mxu0 0.0
        %1813 = vmatpush.msra.mxu0 0.0
        %1814 = vmatpush.msra.mxu0 0.0
        %1815 = vmatpush.msra.mxu0 0.0
        %1816 = vmatpush.msra.mxu0 0.0
        %1817 = vmatpush.msra.mxu0 %v232
        %1818 = vmatpush.msra.mxu0 %v231
        %1819 = vmatmul.f32.gmra.mxu0 %v1781
        %v1820 = vpop.f32.mrf.mxu0
        %v1821 = vadd.f32 0.0, %v1820
        %1822 = vdwg.mxu0
        %v1823 = vmax.f32 %v1801, %v1821
        %v1825 = vsel %vm324, %v1823, 0
        %1827 = vmatpush.msra.mxu0 0.0
        %1828 = vmatpush.msra.mxu0 0.0
        %1829 = vmatpush.msra.mxu0 0.0
        %1830 = vmatpush.msra.mxu0 0.0
        %1831 = vmatpush.msra.mxu0 0.0
        %1832 = vmatpush.msra.mxu0 0.0
        %1833 = vmatpush.msra.mxu0 0.0
        %1834 = vmatpush.msra.mxu0 0.0
        %1835 = vmatpush.msra.mxu0 0.0
        %1836 = vmatpush.msra.mxu0 0.0
        %1837 = vmatpush.msra.mxu0 0.0
        %1838 = vmatpush.msra.mxu0 0.0
        %1839 = vmatpush.msra.mxu0 0.0
        %1840 = vmatpush.msra.mxu0 0.0
        %1841 = vmatpush.msra.mxu0 0.0
        %1842 = vmatpush.msra.mxu0 %v1825
        %1843 = vmatmul.f32.gmra.mxu0 %v322
        %v1844 = vpop.f32.mrf.mxu0
        %v1845 = vadd.f32 0.0, %v1844
        %1846 = vdwg.mxu0
        %v1848 = vrot.slane %v1845, 1
        %v1849 = vrot.slane %v1845, 2
        %v1850 = vrot.slane %v1845, 3
        %1854 = vst.msk [vmem:[%s1278 + $0x5] sm:$0x1] %vm355, %v1845
        %1855 = vst.msk [vmem:[%s1278 + $0x25] sm:$0x1] %vm355, %v1848
        %1856 = vst.msk [vmem:[%s1278 + $0x45] sm:$0x1] %vm355, %v1849
        %1857 = vst.msk [vmem:[%s1278 + $0x65] sm:$0x1] %vm355, %v1850
        %v1858 = vld [vmem:[%s1165 + $0xc] sm:$0x1]
        %v1859 = vld [vmem:[%s1165 + $0x8c] sm:$0x1]
        %v1860 = vld [vmem:[%s1165 + $0x10c] sm:$0x1]
        %v1861 = vld [vmem:[%s1165 + $0x18c] sm:$0x1]
        %v1862 = vld [vmem:[%s1165 + $0xd] sm:$0x1]
        %v1863 = vld [vmem:[%s1165 + $0x8d] sm:$0x1]
        %v1864 = vld [vmem:[%s1165 + $0x10d] sm:$0x1]
        %v1865 = vld [vmem:[%s1165 + $0x18d] sm:$0x1]
        %v1866 = vmax.f32 %v1858, %v1862
        %v1867 = vmax.f32 %v1859, %v1863
        %v1868 = vmax.f32 %v1860, %v1864
        %v1869 = vmax.f32 %v1861, %v1865
        %v1870 = vld [vmem:[%s1178 + $0xc] sm:$0x1]
        %v1871 = vld [vmem:[%s1178 + $0x8c] sm:$0x1]
        %v1872 = vld [vmem:[%s1178 + $0x10c] sm:$0x1]
        %v1873 = vld [vmem:[%s1178 + $0x18c] sm:$0x1]
        %v1874 = vld [vmem:[%s1178 + $0xd] sm:$0x1]
        %v1875 = vld [vmem:[%s1178 + $0x8d] sm:$0x1]
        %v1876 = vld [vmem:[%s1178 + $0x10d] sm:$0x1]
        %v1877 = vld [vmem:[%s1178 + $0x18d] sm:$0x1]
        %v1878 = vmax.f32 %v1870, %v1874
        %v1879 = vmax.f32 %v1871, %v1875
        %v1880 = vmax.f32 %v1872, %v1876
        %v1881 = vmax.f32 %v1873, %v1877
        %v1882 = vmax.f32 %v1866, %v1878
        %v1883 = vmax.f32 %v1867, %v1879
        %v1884 = vmax.f32 %v1868, %v1880
        %v1885 = vmax.f32 %v1869, %v1881
        %v1890 = vrot.slane %v1883, 7
        %v1891 = vsel %vm268, %v1890, %v1882
        %v1892 = vrot.slane %v1884, 6
        %v1893 = vsel %vm271, %v1892, %v1891
        %v1894 = vrot.slane %v1885, 5
        %v1895 = vsel %vm274, %v1894, %v1893
        %v1896 = vsel %vm276, %v1895, 0
        %1898 = vmatpush.msra.mxu0 0.0
        %1899 = vmatpush.msra.mxu0 0.0
        %1900 = vmatpush.msra.mxu0 0.0
        %1901 = vmatpush.msra.mxu0 0.0
        %1902 = vmatpush.msra.mxu0 0.0
        %1903 = vmatpush.msra.mxu0 0.0
        %1904 = vmatpush.msra.mxu0 0.0
        %1905 = vmatpush.msra.mxu0 0.0
        %1906 = vmatpush.msra.mxu0 0.0
        %1907 = vmatpush.msra.mxu0 0.0
        %1908 = vmatpush.msra.mxu0 0.0
        %1909 = vmatpush.msra.mxu0 0.0
        %1910 = vmatpush.msra.mxu0 0.0
        %1911 = vmatpush.msra.mxu0 0.0
        %1912 = vmatpush.msra.mxu0 %v225
        %1913 = vmatpush.msra.mxu0 %v224
        %1914 = vmatmul.f32.gmra.mxu0 %v1896
        %v1915 = vpop.f32.mrf.mxu0
        %v1916 = vadd.f32 0.0, %v1915
        %1917 = vdwg.mxu0
        %1918 = vmatpush.msra.mxu0 0.0
        %1919 = vmatpush.msra.mxu0 0.0
        %1920 = vmatpush.msra.mxu0 0.0
        %1921 = vmatpush.msra.mxu0 0.0
        %1922 = vmatpush.msra.mxu0 0.0
        %1923 = vmatpush.msra.mxu0 0.0
        %1924 = vmatpush.msra.mxu0 0.0
        %1925 = vmatpush.msra.mxu0 0.0
        %1926 = vmatpush.msra.mxu0 0.0
        %1927 = vmatpush.msra.mxu0 0.0
        %1928 = vmatpush.msra.mxu0 0.0
        %1929 = vmatpush.msra.mxu0 0.0
        %1930 = vmatpush.msra.mxu0 0.0
        %1931 = vmatpush.msra.mxu0 0.0
        %1932 = vmatpush.msra.mxu0 %v232
        %1933 = vmatpush.msra.mxu0 %v231
        %1934 = vmatmul.f32.gmra.mxu0 %v1896
        %v1935 = vpop.f32.mrf.mxu0
        %v1936 = vadd.f32 0.0, %v1935
        %1937 = vdwg.mxu0
        %v1938 = vmax.f32 %v1916, %v1936
        %v1940 = vsel %vm324, %v1938, 0
        %1942 = vmatpush.msra.mxu0 0.0
        %1943 = vmatpush.msra.mxu0 0.0
        %1944 = vmatpush.msra.mxu0 0.0
        %1945 = vmatpush.msra.mxu0 0.0
        %1946 = vmatpush.msra.mxu0 0.0
        %1947 = vmatpush.msra.mxu0 0.0
        %1948 = vmatpush.msra.mxu0 0.0
        %1949 = vmatpush.msra.mxu0 0.0
        %1950 = vmatpush.msra.mxu0 0.0
        %1951 = vmatpush.msra.mxu0 0.0
        %1952 = vmatpush.msra.mxu0 0.0
        %1953 = vmatpush.msra.mxu0 0.0
        %1954 = vmatpush.msra.mxu0 0.0
        %1955 = vmatpush.msra.mxu0 0.0
        %1956 = vmatpush.msra.mxu0 0.0
        %1957 = vmatpush.msra.mxu0 %v1940
        %1958 = vmatmul.f32.gmra.mxu0 %v322
        %v1959 = vpop.f32.mrf.mxu0
        %v1960 = vadd.f32 0.0, %v1959
        %1961 = vdwg.mxu0
        %v1963 = vrot.slane %v1960, 1
        %v1964 = vrot.slane %v1960, 2
        %v1965 = vrot.slane %v1960, 3
        %1969 = vst.msk [vmem:[%s1278 + $0x6] sm:$0x1] %vm355, %v1960
        %1970 = vst.msk [vmem:[%s1278 + $0x26] sm:$0x1] %vm355, %v1963
        %1971 = vst.msk [vmem:[%s1278 + $0x46] sm:$0x1] %vm355, %v1964
        %1972 = vst.msk [vmem:[%s1278 + $0x66] sm:$0x1] %vm355, %v1965
        %v1973 = vld [vmem:[%s1165 + $0xe] sm:$0x1]
        %v1974 = vld [vmem:[%s1165 + $0x8e] sm:$0x1]
        %v1975 = vld [vmem:[%s1165 + $0x10e] sm:$0x1]
        %v1976 = vld [vmem:[%s1165 + $0x18e] sm:$0x1]
        %v1977 = vld [vmem:[%s1165 + $0xf] sm:$0x1]
        %v1978 = vld [vmem:[%s1165 + $0x8f] sm:$0x1]
        %v1979 = vld [vmem:[%s1165 + $0x10f] sm:$0x1]
        %v1980 = vld [vmem:[%s1165 + $0x18f] sm:$0x1]
        %v1981 = vmax.f32 %v1973, %v1977
        %v1982 = vmax.f32 %v1974, %v1978
        %v1983 = vmax.f32 %v1975, %v1979
        %v1984 = vmax.f32 %v1976, %v1980
        %v1985 = vld [vmem:[%s1178 + $0xe] sm:$0x1]
        %v1986 = vld [vmem:[%s1178 + $0x8e] sm:$0x1]
        %v1987 = vld [vmem:[%s1178 + $0x10e] sm:$0x1]
        %v1988 = vld [vmem:[%s1178 + $0x18e] sm:$0x1]
        %v1989 = vld [vmem:[%s1178 + $0xf] sm:$0x1]
        %v1990 = vld [vmem:[%s1178 + $0x8f] sm:$0x1]
        %v1991 = vld [vmem:[%s1178 + $0x10f] sm:$0x1]
        %v1992 = vld [vmem:[%s1178 + $0x18f] sm:$0x1]
        %v1993 = vmax.f32 %v1985, %v1989
        %v1994 = vmax.f32 %v1986, %v1990
        %v1995 = vmax.f32 %v1987, %v1991
        %v1996 = vmax.f32 %v1988, %v1992
        %v1997 = vmax.f32 %v1981, %v1993
        %v1998 = vmax.f32 %v1982, %v1994
        %v1999 = vmax.f32 %v1983, %v1995
        %v2000 = vmax.f32 %v1984, %v1996
        %v2005 = vrot.slane %v1998, 7
        %v2006 = vsel %vm268, %v2005, %v1997
        %v2007 = vrot.slane %v1999, 6
        %v2008 = vsel %vm271, %v2007, %v2006
        %v2009 = vrot.slane %v2000, 5
        %v2010 = vsel %vm274, %v2009, %v2008
        %v2011 = vsel %vm276, %v2010, 0
        %2013 = vmatpush.msra.mxu0 0.0
        %2014 = vmatpush.msra.mxu0 0.0
        %2015 = vmatpush.msra.mxu0 0.0
        %2016 = vmatpush.msra.mxu0 0.0
        %2017 = vmatpush.msra.mxu0 0.0
        %2018 = vmatpush.msra.mxu0 0.0
        %2019 = vmatpush.msra.mxu0 0.0
        %2020 = vmatpush.msra.mxu0 0.0
        %2021 = vmatpush.msra.mxu0 0.0
        %2022 = vmatpush.msra.mxu0 0.0
        %2023 = vmatpush.msra.mxu0 0.0
        %2024 = vmatpush.msra.mxu0 0.0
        %2025 = vmatpush.msra.mxu0 0.0
        %2026 = vmatpush.msra.mxu0 0.0
        %2027 = vmatpush.msra.mxu0 %v225
        %2028 = vmatpush.msra.mxu0 %v224
        %2029 = vmatmul.f32.gmra.mxu0 %v2011
        %v2030 = vpop.f32.mrf.mxu0
        %v2031 = vadd.f32 0.0, %v2030
        %2032 = vdwg.mxu0
        %2033 = vmatpush.msra.mxu0 0.0
        %2034 = vmatpush.msra.mxu0 0.0
        %2035 = vmatpush.msra.mxu0 0.0
        %2036 = vmatpush.msra.mxu0 0.0
        %2037 = vmatpush.msra.mxu0 0.0
        %2038 = vmatpush.msra.mxu0 0.0
        %2039 = vmatpush.msra.mxu0 0.0
        %2040 = vmatpush.msra.mxu0 0.0
        %2041 = vmatpush.msra.mxu0 0.0
        %2042 = vmatpush.msra.mxu0 0.0
        %2043 = vmatpush.msra.mxu0 0.0
        %2044 = vmatpush.msra.mxu0 0.0
        %2045 = vmatpush.msra.mxu0 0.0
        %2046 = vmatpush.msra.mxu0 0.0
        %2047 = vmatpush.msra.mxu0 %v232
        %2048 = vmatpush.msra.mxu0 %v231
        %2049 = vmatmul.f32.gmra.mxu0 %v2011
        %v2050 = vpop.f32.mrf.mxu0
        %v2051 = vadd.f32 0.0, %v2050
        %2052 = vdwg.mxu0
        %v2053 = vmax.f32 %v2031, %v2051
        %v2055 = vsel %vm324, %v2053, 0
        %2057 = vmatpush.msra.mxu0 0.0
        %2058 = vmatpush.msra.mxu0 0.0
        %2059 = vmatpush.msra.mxu0 0.0
        %2060 = vmatpush.msra.mxu0 0.0
        %2061 = vmatpush.msra.mxu0 0.0
        %2062 = vmatpush.msra.mxu0 0.0
        %2063 = vmatpush.msra.mxu0 0.0
        %2064 = vmatpush.msra.mxu0 0.0
        %2065 = vmatpush.msra.mxu0 0.0
        %2066 = vmatpush.msra.mxu0 0.0
        %2067 = vmatpush.msra.mxu0 0.0
        %2068 = vmatpush.msra.mxu0 0.0
        %2069 = vmatpush.msra.mxu0 0.0
        %2070 = vmatpush.msra.mxu0 0.0
        %2071 = vmatpush.msra.mxu0 0.0
        %2072 = vmatpush.msra.mxu0 %v2055
        %2073 = vmatmul.f32.gmra.mxu0 %v322
        %v2074 = vpop.f32.mrf.mxu0
        %v2075 = vadd.f32 0.0, %v2074
        %2076 = vdwg.mxu0
        %v2078 = vrot.slane %v2075, 1
        %v2079 = vrot.slane %v2075, 2
        %v2080 = vrot.slane %v2075, 3
        %2084 = vst.msk [vmem:[%s1278 + $0x7] sm:$0x1] %vm355, %v2075
        %2085 = vst.msk [vmem:[%s1278 + $0x27] sm:$0x1] %vm355, %v2078
        %2086 = vst.msk [vmem:[%s1278 + $0x47] sm:$0x1] %vm355, %v2079
        %2087 = vst.msk [vmem:[%s1278 + $0x67] sm:$0x1] %vm355, %v2080
        %s2088 = scalar_lea.vmem %s189, 64 [#allocation5]
        %v2089 = vld [vmem:[%s2088] sm:$0x1]
        %v2090 = vld [vmem:[%s2088 + $0x80] sm:$0x1]
        %v2091 = vld [vmem:[%s2088 + $0x100] sm:$0x1]
        %v2092 = vld [vmem:[%s2088 + $0x180] sm:$0x1]
        %v2093 = vld [vmem:[%s2088 + $0x1] sm:$0x1]
        %v2094 = vld [vmem:[%s2088 + $0x81] sm:$0x1]
        %v2095 = vld [vmem:[%s2088 + $0x101] sm:$0x1]
        %v2096 = vld [vmem:[%s2088 + $0x181] sm:$0x1]
        %v2097 = vmax.f32 %v2089, %v2093
        %v2098 = vmax.f32 %v2090, %v2094
        %v2099 = vmax.f32 %v2091, %v2095
        %v2100 = vmax.f32 %v2092, %v2096
        %s2101 = scalar_lea.vmem %s189, 80 [#allocation5]
        %v2102 = vld [vmem:[%s2101] sm:$0x1]
        %v2103 = vld [vmem:[%s2101 + $0x80] sm:$0x1]
        %v2104 = vld [vmem:[%s2101 + $0x100] sm:$0x1]
        %v2105 = vld [vmem:[%s2101 + $0x180] sm:$0x1]
        %v2106 = vld [vmem:[%s2101 + $0x1] sm:$0x1]
        %v2107 = vld [vmem:[%s2101 + $0x81] sm:$0x1]
        %v2108 = vld [vmem:[%s2101 + $0x101] sm:$0x1]
        %v2109 = vld [vmem:[%s2101 + $0x181] sm:$0x1]
        %v2110 = vmax.f32 %v2102, %v2106
        %v2111 = vmax.f32 %v2103, %v2107
        %v2112 = vmax.f32 %v2104, %v2108
        %v2113 = vmax.f32 %v2105, %v2109
        %v2114 = vmax.f32 %v2097, %v2110
        %v2115 = vmax.f32 %v2098, %v2111
        %v2116 = vmax.f32 %v2099, %v2112
        %v2117 = vmax.f32 %v2100, %v2113
        %v2122 = vrot.slane %v2115, 7
        %v2123 = vsel %vm268, %v2122, %v2114
        %v2124 = vrot.slane %v2116, 6
        %v2125 = vsel %vm271, %v2124, %v2123
        %v2126 = vrot.slane %v2117, 5
        %v2127 = vsel %vm274, %v2126, %v2125
        %v2128 = vsel %vm276, %v2127, 0
        %2130 = vmatpush.msra.mxu0 0.0
        %2131 = vmatpush.msra.mxu0 0.0
        %2132 = vmatpush.msra.mxu0 0.0
        %2133 = vmatpush.msra.mxu0 0.0
        %2134 = vmatpush.msra.mxu0 0.0
        %2135 = vmatpush.msra.mxu0 0.0
        %2136 = vmatpush.msra.mxu0 0.0
        %2137 = vmatpush.msra.mxu0 0.0
        %2138 = vmatpush.msra.mxu0 0.0
        %2139 = vmatpush.msra.mxu0 0.0
        %2140 = vmatpush.msra.mxu0 0.0
        %2141 = vmatpush.msra.mxu0 0.0
        %2142 = vmatpush.msra.mxu0 0.0
        %2143 = vmatpush.msra.mxu0 0.0
        %2144 = vmatpush.msra.mxu0 %v225
        %2145 = vmatpush.msra.mxu0 %v224
        %2146 = vmatmul.f32.gmra.mxu0 %v2128
        %v2147 = vpop.f32.mrf.mxu0
        %v2148 = vadd.f32 0.0, %v2147
        %2149 = vdwg.mxu0
        %2150 = vmatpush.msra.mxu0 0.0
        %2151 = vmatpush.msra.mxu0 0.0
        %2152 = vmatpush.msra.mxu0 0.0
        %2153 = vmatpush.msra.mxu0 0.0
        %2154 = vmatpush.msra.mxu0 0.0
        %2155 = vmatpush.msra.mxu0 0.0
        %2156 = vmatpush.msra.mxu0 0.0
        %2157 = vmatpush.msra.mxu0 0.0
        %2158 = vmatpush.msra.mxu0 0.0
        %2159 = vmatpush.msra.mxu0 0.0
        %2160 = vmatpush.msra.mxu0 0.0
        %2161 = vmatpush.msra.mxu0 0.0
        %2162 = vmatpush.msra.mxu0 0.0
        %2163 = vmatpush.msra.mxu0 0.0
        %2164 = vmatpush.msra.mxu0 %v232
        %2165 = vmatpush.msra.mxu0 %v231
        %2166 = vmatmul.f32.gmra.mxu0 %v2128
        %v2167 = vpop.f32.mrf.mxu0
        %v2168 = vadd.f32 0.0, %v2167
        %2169 = vdwg.mxu0
        %v2170 = vmax.f32 %v2148, %v2168
        %v2172 = vsel %vm324, %v2170, 0
        %2174 = vmatpush.msra.mxu0 0.0
        %2175 = vmatpush.msra.mxu0 0.0
        %2176 = vmatpush.msra.mxu0 0.0
        %2177 = vmatpush.msra.mxu0 0.0
        %2178 = vmatpush.msra.mxu0 0.0
        %2179 = vmatpush.msra.mxu0 0.0
        %2180 = vmatpush.msra.mxu0 0.0
        %2181 = vmatpush.msra.mxu0 0.0
        %2182 = vmatpush.msra.mxu0 0.0
        %2183 = vmatpush.msra.mxu0 0.0
        %2184 = vmatpush.msra.mxu0 0.0
        %2185 = vmatpush.msra.mxu0 0.0
        %2186 = vmatpush.msra.mxu0 0.0
        %2187 = vmatpush.msra.mxu0 0.0
        %2188 = vmatpush.msra.mxu0 0.0
        %2189 = vmatpush.msra.mxu0 %v2172
        %2190 = vmatmul.f32.gmra.mxu0 %v322
        %v2191 = vpop.f32.mrf.mxu0
        %v2192 = vadd.f32 0.0, %v2191
        %2193 = vdwg.mxu0
        %v2195 = vrot.slane %v2192, 1
        %v2196 = vrot.slane %v2192, 2
        %v2197 = vrot.slane %v2192, 3
        %s2201 = scalar_lea.vmem %s210, 16 [#allocation7]
        %2202 = vst.msk [vmem:[%s2201] sm:$0x1] %vm355, %v2192
        %2203 = vst.msk [vmem:[%s2201 + $0x20] sm:$0x1] %vm355, %v2195
        %2204 = vst.msk [vmem:[%s2201 + $0x40] sm:$0x1] %vm355, %v2196
        %2205 = vst.msk [vmem:[%s2201 + $0x60] sm:$0x1] %vm355, %v2197
        %v2206 = vld [vmem:[%s2088 + $0x2] sm:$0x1]
        %v2207 = vld [vmem:[%s2088 + $0x82] sm:$0x1]
        %v2208 = vld [vmem:[%s2088 + $0x102] sm:$0x1]
        %v2209 = vld [vmem:[%s2088 + $0x182] sm:$0x1]
        %v2210 = vld [vmem:[%s2088 + $0x3] sm:$0x1]
        %v2211 = vld [vmem:[%s2088 + $0x83] sm:$0x1]
        %v2212 = vld [vmem:[%s2088 + $0x103] sm:$0x1]
        %v2213 = vld [vmem:[%s2088 + $0x183] sm:$0x1]
        %v2214 = vmax.f32 %v2206, %v2210
        %v2215 = vmax.f32 %v2207, %v2211
        %v2216 = vmax.f32 %v2208, %v2212
        %v2217 = vmax.f32 %v2209, %v2213
        %v2218 = vld [vmem:[%s2101 + $0x2] sm:$0x1]
        %v2219 = vld [vmem:[%s2101 + $0x82] sm:$0x1]
        %v2220 = vld [vmem:[%s2101 + $0x102] sm:$0x1]
        %v2221 = vld [vmem:[%s2101 + $0x182] sm:$0x1]
        %v2222 = vld [vmem:[%s2101 + $0x3] sm:$0x1]
        %v2223 = vld [vmem:[%s2101 + $0x83] sm:$0x1]
        %v2224 = vld [vmem:[%s2101 + $0x103] sm:$0x1]
        %v2225 = vld [vmem:[%s2101 + $0x183] sm:$0x1]
        %v2226 = vmax.f32 %v2218, %v2222
        %v2227 = vmax.f32 %v2219, %v2223
        %v2228 = vmax.f32 %v2220, %v2224
        %v2229 = vmax.f32 %v2221, %v2225
        %v2230 = vmax.f32 %v2214, %v2226
        %v2231 = vmax.f32 %v2215, %v2227
        %v2232 = vmax.f32 %v2216, %v2228
        %v2233 = vmax.f32 %v2217, %v2229
        %v2238 = vrot.slane %v2231, 7
        %v2239 = vsel %vm268, %v2238, %v2230
        %v2240 = vrot.slane %v2232, 6
        %v2241 = vsel %vm271, %v2240, %v2239
        %v2242 = vrot.slane %v2233, 5
        %v2243 = vsel %vm274, %v2242, %v2241
        %v2244 = vsel %vm276, %v2243, 0
        %2246 = vmatpush.msra.mxu0 0.0
        %2247 = vmatpush.msra.mxu0 0.0
        %2248 = vmatpush.msra.mxu0 0.0
        %2249 = vmatpush.msra.mxu0 0.0
        %2250 = vmatpush.msra.mxu0 0.0
        %2251 = vmatpush.msra.mxu0 0.0
        %2252 = vmatpush.msra.mxu0 0.0
        %2253 = vmatpush.msra.mxu0 0.0
        %2254 = vmatpush.msra.mxu0 0.0
        %2255 = vmatpush.msra.mxu0 0.0
        %2256 = vmatpush.msra.mxu0 0.0
        %2257 = vmatpush.msra.mxu0 0.0
        %2258 = vmatpush.msra.mxu0 0.0
        %2259 = vmatpush.msra.mxu0 0.0
        %2260 = vmatpush.msra.mxu0 %v225
        %2261 = vmatpush.msra.mxu0 %v224
        %2262 = vmatmul.f32.gmra.mxu0 %v2244
        %v2263 = vpop.f32.mrf.mxu0
        %v2264 = vadd.f32 0.0, %v2263
        %2265 = vdwg.mxu0
        %2266 = vmatpush.msra.mxu0 0.0
        %2267 = vmatpush.msra.mxu0 0.0
        %2268 = vmatpush.msra.mxu0 0.0
        %2269 = vmatpush.msra.mxu0 0.0
        %2270 = vmatpush.msra.mxu0 0.0
        %2271 = vmatpush.msra.mxu0 0.0
        %2272 = vmatpush.msra.mxu0 0.0
        %2273 = vmatpush.msra.mxu0 0.0
        %2274 = vmatpush.msra.mxu0 0.0
        %2275 = vmatpush.msra.mxu0 0.0
        %2276 = vmatpush.msra.mxu0 0.0
        %2277 = vmatpush.msra.mxu0 0.0
        %2278 = vmatpush.msra.mxu0 0.0
        %2279 = vmatpush.msra.mxu0 0.0
        %2280 = vmatpush.msra.mxu0 %v232
        %2281 = vmatpush.msra.mxu0 %v231
        %2282 = vmatmul.f32.gmra.mxu0 %v2244
        %v2283 = vpop.f32.mrf.mxu0
        %v2284 = vadd.f32 0.0, %v2283
        %2285 = vdwg.mxu0
        %v2286 = vmax.f32 %v2264, %v2284
        %v2288 = vsel %vm324, %v2286, 0
        %2290 = vmatpush.msra.mxu0 0.0
        %2291 = vmatpush.msra.mxu0 0.0
        %2292 = vmatpush.msra.mxu0 0.0
        %2293 = vmatpush.msra.mxu0 0.0
        %2294 = vmatpush.msra.mxu0 0.0
        %2295 = vmatpush.msra.mxu0 0.0
        %2296 = vmatpush.msra.mxu0 0.0
        %2297 = vmatpush.msra.mxu0 0.0
        %2298 = vmatpush.msra.mxu0 0.0
        %2299 = vmatpush.msra.mxu0 0.0
        %2300 = vmatpush.msra.mxu0 0.0
        %2301 = vmatpush.msra.mxu0 0.0
        %2302 = vmatpush.msra.mxu0 0.0
        %2303 = vmatpush.msra.mxu0 0.0
        %2304 = vmatpush.msra.mxu0 0.0
        %2305 = vmatpush.msra.mxu0 %v2288
        %2306 = vmatmul.f32.gmra.mxu0 %v322
        %v2307 = vpop.f32.mrf.mxu0
        %v2308 = vadd.f32 0.0, %v2307
        %2309 = vdwg.mxu0
        %v2311 = vrot.slane %v2308, 1
        %v2312 = vrot.slane %v2308, 2
        %v2313 = vrot.slane %v2308, 3
        %2317 = vst.msk [vmem:[%s2201 + $0x1] sm:$0x1] %vm355, %v2308
        %2318 = vst.msk [vmem:[%s2201 + $0x21] sm:$0x1] %vm355, %v2311
        %2319 = vst.msk [vmem:[%s2201 + $0x41] sm:$0x1] %vm355, %v2312
        %2320 = vst.msk [vmem:[%s2201 + $0x61] sm:$0x1] %vm355, %v2313
        %v2321 = vld [vmem:[%s2088 + $0x4] sm:$0x1]
        %v2322 = vld [vmem:[%s2088 + $0x84] sm:$0x1]
        %v2323 = vld [vmem:[%s2088 + $0x104] sm:$0x1]
        %v2324 = vld [vmem:[%s2088 + $0x184] sm:$0x1]
        %v2325 = vld [vmem:[%s2088 + $0x5] sm:$0x1]
        %v2326 = vld [vmem:[%s2088 + $0x85] sm:$0x1]
        %v2327 = vld [vmem:[%s2088 + $0x105] sm:$0x1]
        %v2328 = vld [vmem:[%s2088 + $0x185] sm:$0x1]
        %v2329 = vmax.f32 %v2321, %v2325
        %v2330 = vmax.f32 %v2322, %v2326
        %v2331 = vmax.f32 %v2323, %v2327
        %v2332 = vmax.f32 %v2324, %v2328
        %v2333 = vld [vmem:[%s2101 + $0x4] sm:$0x1]
        %v2334 = vld [vmem:[%s2101 + $0x84] sm:$0x1]
        %v2335 = vld [vmem:[%s2101 + $0x104] sm:$0x1]
        %v2336 = vld [vmem:[%s2101 + $0x184] sm:$0x1]
        %v2337 = vld [vmem:[%s2101 + $0x5] sm:$0x1]
        %v2338 = vld [vmem:[%s2101 + $0x85] sm:$0x1]
        %v2339 = vld [vmem:[%s2101 + $0x105] sm:$0x1]
        %v2340 = vld [vmem:[%s2101 + $0x185] sm:$0x1]
        %v2341 = vmax.f32 %v2333, %v2337
        %v2342 = vmax.f32 %v2334, %v2338
        %v2343 = vmax.f32 %v2335, %v2339
        %v2344 = vmax.f32 %v2336, %v2340
        %v2345 = vmax.f32 %v2329, %v2341
        %v2346 = vmax.f32 %v2330, %v2342
        %v2347 = vmax.f32 %v2331, %v2343
        %v2348 = vmax.f32 %v2332, %v2344
        %v2353 = vrot.slane %v2346, 7
        %v2354 = vsel %vm268, %v2353, %v2345
        %v2355 = vrot.slane %v2347, 6
        %v2356 = vsel %vm271, %v2355, %v2354
        %v2357 = vrot.slane %v2348, 5
        %v2358 = vsel %vm274, %v2357, %v2356
        %v2359 = vsel %vm276, %v2358, 0
        %2361 = vmatpush.msra.mxu0 0.0
        %2362 = vmatpush.msra.mxu0 0.0
        %2363 = vmatpush.msra.mxu0 0.0
        %2364 = vmatpush.msra.mxu0 0.0
        %2365 = vmatpush.msra.mxu0 0.0
        %2366 = vmatpush.msra.mxu0 0.0
        %2367 = vmatpush.msra.mxu0 0.0
        %2368 = vmatpush.msra.mxu0 0.0
        %2369 = vmatpush.msra.mxu0 0.0
        %2370 = vmatpush.msra.mxu0 0.0
        %2371 = vmatpush.msra.mxu0 0.0
        %2372 = vmatpush.msra.mxu0 0.0
        %2373 = vmatpush.msra.mxu0 0.0
        %2374 = vmatpush.msra.mxu0 0.0
        %2375 = vmatpush.msra.mxu0 %v225
        %2376 = vmatpush.msra.mxu0 %v224
        %2377 = vmatmul.f32.gmra.mxu0 %v2359
        %v2378 = vpop.f32.mrf.mxu0
        %v2379 = vadd.f32 0.0, %v2378
        %2380 = vdwg.mxu0
        %2381 = vmatpush.msra.mxu0 0.0
        %2382 = vmatpush.msra.mxu0 0.0
        %2383 = vmatpush.msra.mxu0 0.0
        %2384 = vmatpush.msra.mxu0 0.0
        %2385 = vmatpush.msra.mxu0 0.0
        %2386 = vmatpush.msra.mxu0 0.0
        %2387 = vmatpush.msra.mxu0 0.0
        %2388 = vmatpush.msra.mxu0 0.0
        %2389 = vmatpush.msra.mxu0 0.0
        %2390 = vmatpush.msra.mxu0 0.0
        %2391 = vmatpush.msra.mxu0 0.0
        %2392 = vmatpush.msra.mxu0 0.0
        %2393 = vmatpush.msra.mxu0 0.0
        %2394 = vmatpush.msra.mxu0 0.0
        %2395 = vmatpush.msra.mxu0 %v232
        %2396 = vmatpush.msra.mxu0 %v231
        %2397 = vmatmul.f32.gmra.mxu0 %v2359
        %v2398 = vpop.f32.mrf.mxu0
        %v2399 = vadd.f32 0.0, %v2398
        %2400 = vdwg.mxu0
        %v2401 = vmax.f32 %v2379, %v2399
        %v2403 = vsel %vm324, %v2401, 0
        %2405 = vmatpush.msra.mxu0 0.0
        %2406 = vmatpush.msra.mxu0 0.0
        %2407 = vmatpush.msra.mxu0 0.0
        %2408 = vmatpush.msra.mxu0 0.0
        %2409 = vmatpush.msra.mxu0 0.0
        %2410 = vmatpush.msra.mxu0 0.0
        %2411 = vmatpush.msra.mxu0 0.0
        %2412 = vmatpush.msra.mxu0 0.0
        %2413 = vmatpush.msra.mxu0 0.0
        %2414 = vmatpush.msra.mxu0 0.0
        %2415 = vmatpush.msra.mxu0 0.0
        %2416 = vmatpush.msra.mxu0 0.0
        %2417 = vmatpush.msra.mxu0 0.0
        %2418 = vmatpush.msra.mxu0 0.0
        %2419 = vmatpush.msra.mxu0 0.0
        %2420 = vmatpush.msra.mxu0 %v2403
        %2421 = vmatmul.f32.gmra.mxu0 %v322
        %v2422 = vpop.f32.mrf.mxu0
        %v2423 = vadd.f32 0.0, %v2422
        %2424 = vdwg.mxu0
        %v2426 = vrot.slane %v2423, 1
        %v2427 = vrot.slane %v2423, 2
        %v2428 = vrot.slane %v2423, 3
        %2432 = vst.msk [vmem:[%s2201 + $0x2] sm:$0x1] %vm355, %v2423
        %2433 = vst.msk [vmem:[%s2201 + $0x22] sm:$0x1] %vm355, %v2426
        %2434 = vst.msk [vmem:[%s2201 + $0x42] sm:$0x1] %vm355, %v2427
        %2435 = vst.msk [vmem:[%s2201 + $0x62] sm:$0x1] %vm355, %v2428
        %v2436 = vld [vmem:[%s2088 + $0x6] sm:$0x1]
        %v2437 = vld [vmem:[%s2088 + $0x86] sm:$0x1]
        %v2438 = vld [vmem:[%s2088 + $0x106] sm:$0x1]
        %v2439 = vld [vmem:[%s2088 + $0x186] sm:$0x1]
        %v2440 = vld [vmem:[%s2088 + $0x7] sm:$0x1]
        %v2441 = vld [vmem:[%s2088 + $0x87] sm:$0x1]
        %v2442 = vld [vmem:[%s2088 + $0x107] sm:$0x1]
        %v2443 = vld [vmem:[%s2088 + $0x187] sm:$0x1]
        %v2444 = vmax.f32 %v2436, %v2440
        %v2445 = vmax.f32 %v2437, %v2441
        %v2446 = vmax.f32 %v2438, %v2442
        %v2447 = vmax.f32 %v2439, %v2443
        %v2448 = vld [vmem:[%s2101 + $0x6] sm:$0x1]
        %v2449 = vld [vmem:[%s2101 + $0x86] sm:$0x1]
        %v2450 = vld [vmem:[%s2101 + $0x106] sm:$0x1]
        %v2451 = vld [vmem:[%s2101 + $0x186] sm:$0x1]
        %v2452 = vld [vmem:[%s2101 + $0x7] sm:$0x1]
        %v2453 = vld [vmem:[%s2101 + $0x87] sm:$0x1]
        %v2454 = vld [vmem:[%s2101 + $0x107] sm:$0x1]
        %v2455 = vld [vmem:[%s2101 + $0x187] sm:$0x1]
        %v2456 = vmax.f32 %v2448, %v2452
        %v2457 = vmax.f32 %v2449, %v2453
        %v2458 = vmax.f32 %v2450, %v2454
        %v2459 = vmax.f32 %v2451, %v2455
        %v2460 = vmax.f32 %v2444, %v2456
        %v2461 = vmax.f32 %v2445, %v2457
        %v2462 = vmax.f32 %v2446, %v2458
        %v2463 = vmax.f32 %v2447, %v2459
        %v2468 = vrot.slane %v2461, 7
        %v2469 = vsel %vm268, %v2468, %v2460
        %v2470 = vrot.slane %v2462, 6
        %v2471 = vsel %vm271, %v2470, %v2469
        %v2472 = vrot.slane %v2463, 5
        %v2473 = vsel %vm274, %v2472, %v2471
        %v2474 = vsel %vm276, %v2473, 0
        %2476 = vmatpush.msra.mxu0 0.0
        %2477 = vmatpush.msra.mxu0 0.0
        %2478 = vmatpush.msra.mxu0 0.0
        %2479 = vmatpush.msra.mxu0 0.0
        %2480 = vmatpush.msra.mxu0 0.0
        %2481 = vmatpush.msra.mxu0 0.0
        %2482 = vmatpush.msra.mxu0 0.0
        %2483 = vmatpush.msra.mxu0 0.0
        %2484 = vmatpush.msra.mxu0 0.0
        %2485 = vmatpush.msra.mxu0 0.0
        %2486 = vmatpush.msra.mxu0 0.0
        %2487 = vmatpush.msra.mxu0 0.0
        %2488 = vmatpush.msra.mxu0 0.0
        %2489 = vmatpush.msra.mxu0 0.0
        %2490 = vmatpush.msra.mxu0 %v225
        %2491 = vmatpush.msra.mxu0 %v224
        %2492 = vmatmul.f32.gmra.mxu0 %v2474
        %v2493 = vpop.f32.mrf.mxu0
        %v2494 = vadd.f32 0.0, %v2493
        %2495 = vdwg.mxu0
        %2496 = vmatpush.msra.mxu0 0.0
        %2497 = vmatpush.msra.mxu0 0.0
        %2498 = vmatpush.msra.mxu0 0.0
        %2499 = vmatpush.msra.mxu0 0.0
        %2500 = vmatpush.msra.mxu0 0.0
        %2501 = vmatpush.msra.mxu0 0.0
        %2502 = vmatpush.msra.mxu0 0.0
        %2503 = vmatpush.msra.mxu0 0.0
        %2504 = vmatpush.msra.mxu0 0.0
        %2505 = vmatpush.msra.mxu0 0.0
        %2506 = vmatpush.msra.mxu0 0.0
        %2507 = vmatpush.msra.mxu0 0.0
        %2508 = vmatpush.msra.mxu0 0.0
        %2509 = vmatpush.msra.mxu0 0.0
        %2510 = vmatpush.msra.mxu0 %v232
        %2511 = vmatpush.msra.mxu0 %v231
        %2512 = vmatmul.f32.gmra.mxu0 %v2474
        %v2513 = vpop.f32.mrf.mxu0
        %v2514 = vadd.f32 0.0, %v2513
        %2515 = vdwg.mxu0
        %v2516 = vmax.f32 %v2494, %v2514
        %v2518 = vsel %vm324, %v2516, 0
        %2520 = vmatpush.msra.mxu0 0.0
        %2521 = vmatpush.msra.mxu0 0.0
        %2522 = vmatpush.msra.mxu0 0.0
        %2523 = vmatpush.msra.mxu0 0.0
        %2524 = vmatpush.msra.mxu0 0.0
        %2525 = vmatpush.msra.mxu0 0.0
        %2526 = vmatpush.msra.mxu0 0.0
        %2527 = vmatpush.msra.mxu0 0.0
        %2528 = vmatpush.msra.mxu0 0.0
        %2529 = vmatpush.msra.mxu0 0.0
        %2530 = vmatpush.msra.mxu0 0.0
        %2531 = vmatpush.msra.mxu0 0.0
        %2532 = vmatpush.msra.mxu0 0.0
        %2533 = vmatpush.msra.mxu0 0.0
        %2534 = vmatpush.msra.mxu0 0.0
        %2535 = vmatpush.msra.mxu0 %v2518
        %2536 = vmatmul.f32.gmra.mxu0 %v322
        %v2537 = vpop.f32.mrf.mxu0
        %v2538 = vadd.f32 0.0, %v2537
        %2539 = vdwg.mxu0
        %v2541 = vrot.slane %v2538, 1
        %v2542 = vrot.slane %v2538, 2
        %v2543 = vrot.slane %v2538, 3
        %2547 = vst.msk [vmem:[%s2201 + $0x3] sm:$0x1] %vm355, %v2538
        %2548 = vst.msk [vmem:[%s2201 + $0x23] sm:$0x1] %vm355, %v2541
        %2549 = vst.msk [vmem:[%s2201 + $0x43] sm:$0x1] %vm355, %v2542
        %2550 = vst.msk [vmem:[%s2201 + $0x63] sm:$0x1] %vm355, %v2543
        %v2551 = vld [vmem:[%s2088 + $0x8] sm:$0x1]
        %v2552 = vld [vmem:[%s2088 + $0x88] sm:$0x1]
        %v2553 = vld [vmem:[%s2088 + $0x108] sm:$0x1]
        %v2554 = vld [vmem:[%s2088 + $0x188] sm:$0x1]
        %v2555 = vld [vmem:[%s2088 + $0x9] sm:$0x1]
        %v2556 = vld [vmem:[%s2088 + $0x89] sm:$0x1]
        %v2557 = vld [vmem:[%s2088 + $0x109] sm:$0x1]
        %v2558 = vld [vmem:[%s2088 + $0x189] sm:$0x1]
        %v2559 = vmax.f32 %v2551, %v2555
        %v2560 = vmax.f32 %v2552, %v2556
        %v2561 = vmax.f32 %v2553, %v2557
        %v2562 = vmax.f32 %v2554, %v2558
        %v2563 = vld [vmem:[%s2101 + $0x8] sm:$0x1]
        %v2564 = vld [vmem:[%s2101 + $0x88] sm:$0x1]
        %v2565 = vld [vmem:[%s2101 + $0x108] sm:$0x1]
        %v2566 = vld [vmem:[%s2101 + $0x188] sm:$0x1]
        %v2567 = vld [vmem:[%s2101 + $0x9] sm:$0x1]
        %v2568 = vld [vmem:[%s2101 + $0x89] sm:$0x1]
        %v2569 = vld [vmem:[%s2101 + $0x109] sm:$0x1]
        %v2570 = vld [vmem:[%s2101 + $0x189] sm:$0x1]
        %v2571 = vmax.f32 %v2563, %v2567
        %v2572 = vmax.f32 %v2564, %v2568
        %v2573 = vmax.f32 %v2565, %v2569
        %v2574 = vmax.f32 %v2566, %v2570
        %v2575 = vmax.f32 %v2559, %v2571
        %v2576 = vmax.f32 %v2560, %v2572
        %v2577 = vmax.f32 %v2561, %v2573
        %v2578 = vmax.f32 %v2562, %v2574
        %v2583 = vrot.slane %v2576, 7
        %v2584 = vsel %vm268, %v2583, %v2575
        %v2585 = vrot.slane %v2577, 6
        %v2586 = vsel %vm271, %v2585, %v2584
        %v2587 = vrot.slane %v2578, 5
        %v2588 = vsel %vm274, %v2587, %v2586
        %v2589 = vsel %vm276, %v2588, 0
        %2591 = vmatpush.msra.mxu0 0.0
        %2592 = vmatpush.msra.mxu0 0.0
        %2593 = vmatpush.msra.mxu0 0.0
        %2594 = vmatpush.msra.mxu0 0.0
        %2595 = vmatpush.msra.mxu0 0.0
        %2596 = vmatpush.msra.mxu0 0.0
        %2597 = vmatpush.msra.mxu0 0.0
        %2598 = vmatpush.msra.mxu0 0.0
        %2599 = vmatpush.msra.mxu0 0.0
        %2600 = vmatpush.msra.mxu0 0.0
        %2601 = vmatpush.msra.mxu0 0.0
        %2602 = vmatpush.msra.mxu0 0.0
        %2603 = vmatpush.msra.mxu0 0.0
        %2604 = vmatpush.msra.mxu0 0.0
        %2605 = vmatpush.msra.mxu0 %v225
        %2606 = vmatpush.msra.mxu0 %v224
        %2607 = vmatmul.f32.gmra.mxu0 %v2589
        %v2608 = vpop.f32.mrf.mxu0
        %v2609 = vadd.f32 0.0, %v2608
        %2610 = vdwg.mxu0
        %2611 = vmatpush.msra.mxu0 0.0
        %2612 = vmatpush.msra.mxu0 0.0
        %2613 = vmatpush.msra.mxu0 0.0
        %2614 = vmatpush.msra.mxu0 0.0
        %2615 = vmatpush.msra.mxu0 0.0
        %2616 = vmatpush.msra.mxu0 0.0
        %2617 = vmatpush.msra.mxu0 0.0
        %2618 = vmatpush.msra.mxu0 0.0
        %2619 = vmatpush.msra.mxu0 0.0
        %2620 = vmatpush.msra.mxu0 0.0
        %2621 = vmatpush.msra.mxu0 0.0
        %2622 = vmatpush.msra.mxu0 0.0
        %2623 = vmatpush.msra.mxu0 0.0
        %2624 = vmatpush.msra.mxu0 0.0
        %2625 = vmatpush.msra.mxu0 %v232
        %2626 = vmatpush.msra.mxu0 %v231
        %2627 = vmatmul.f32.gmra.mxu0 %v2589
        %v2628 = vpop.f32.mrf.mxu0
        %v2629 = vadd.f32 0.0, %v2628
        %2630 = vdwg.mxu0
        %v2631 = vmax.f32 %v2609, %v2629
        %v2633 = vsel %vm324, %v2631, 0
        %2635 = vmatpush.msra.mxu0 0.0
        %2636 = vmatpush.msra.mxu0 0.0
        %2637 = vmatpush.msra.mxu0 0.0
        %2638 = vmatpush.msra.mxu0 0.0
        %2639 = vmatpush.msra.mxu0 0.0
        %2640 = vmatpush.msra.mxu0 0.0
        %2641 = vmatpush.msra.mxu0 0.0
        %2642 = vmatpush.msra.mxu0 0.0
        %2643 = vmatpush.msra.mxu0 0.0
        %2644 = vmatpush.msra.mxu0 0.0
        %2645 = vmatpush.msra.mxu0 0.0
        %2646 = vmatpush.msra.mxu0 0.0
        %2647 = vmatpush.msra.mxu0 0.0
        %2648 = vmatpush.msra.mxu0 0.0
        %2649 = vmatpush.msra.mxu0 0.0
        %2650 = vmatpush.msra.mxu0 %v2633
        %2651 = vmatmul.f32.gmra.mxu0 %v322
        %v2652 = vpop.f32.mrf.mxu0
        %v2653 = vadd.f32 0.0, %v2652
        %2654 = vdwg.mxu0
        %v2656 = vrot.slane %v2653, 1
        %v2657 = vrot.slane %v2653, 2
        %v2658 = vrot.slane %v2653, 3
        %2662 = vst.msk [vmem:[%s2201 + $0x4] sm:$0x1] %vm355, %v2653
        %2663 = vst.msk [vmem:[%s2201 + $0x24] sm:$0x1] %vm355, %v2656
        %2664 = vst.msk [vmem:[%s2201 + $0x44] sm:$0x1] %vm355, %v2657
        %2665 = vst.msk [vmem:[%s2201 + $0x64] sm:$0x1] %vm355, %v2658
        %v2666 = vld [vmem:[%s2088 + $0xa] sm:$0x1]
        %v2667 = vld [vmem:[%s2088 + $0x8a] sm:$0x1]
        %v2668 = vld [vmem:[%s2088 + $0x10a] sm:$0x1]
        %v2669 = vld [vmem:[%s2088 + $0x18a] sm:$0x1]
        %v2670 = vld [vmem:[%s2088 + $0xb] sm:$0x1]
        %v2671 = vld [vmem:[%s2088 + $0x8b] sm:$0x1]
        %v2672 = vld [vmem:[%s2088 + $0x10b] sm:$0x1]
        %v2673 = vld [vmem:[%s2088 + $0x18b] sm:$0x1]
        %v2674 = vmax.f32 %v2666, %v2670
        %v2675 = vmax.f32 %v2667, %v2671
        %v2676 = vmax.f32 %v2668, %v2672
        %v2677 = vmax.f32 %v2669, %v2673
        %v2678 = vld [vmem:[%s2101 + $0xa] sm:$0x1]
        %v2679 = vld [vmem:[%s2101 + $0x8a] sm:$0x1]
        %v2680 = vld [vmem:[%s2101 + $0x10a] sm:$0x1]
        %v2681 = vld [vmem:[%s2101 + $0x18a] sm:$0x1]
        %v2682 = vld [vmem:[%s2101 + $0xb] sm:$0x1]
        %v2683 = vld [vmem:[%s2101 + $0x8b] sm:$0x1]
        %v2684 = vld [vmem:[%s2101 + $0x10b] sm:$0x1]
        %v2685 = vld [vmem:[%s2101 + $0x18b] sm:$0x1]
        %v2686 = vmax.f32 %v2678, %v2682
        %v2687 = vmax.f32 %v2679, %v2683
        %v2688 = vmax.f32 %v2680, %v2684
        %v2689 = vmax.f32 %v2681, %v2685
        %v2690 = vmax.f32 %v2674, %v2686
        %v2691 = vmax.f32 %v2675, %v2687
        %v2692 = vmax.f32 %v2676, %v2688
        %v2693 = vmax.f32 %v2677, %v2689
        %v2698 = vrot.slane %v2691, 7
        %v2699 = vsel %vm268, %v2698, %v2690
        %v2700 = vrot.slane %v2692, 6
        %v2701 = vsel %vm271, %v2700, %v2699
        %v2702 = vrot.slane %v2693, 5
        %v2703 = vsel %vm274, %v2702, %v2701
        %v2704 = vsel %vm276, %v2703, 0
        %2706 = vmatpush.msra.mxu0 0.0
        %2707 = vmatpush.msra.mxu0 0.0
        %2708 = vmatpush.msra.mxu0 0.0
        %2709 = vmatpush.msra.mxu0 0.0
        %2710 = vmatpush.msra.mxu0 0.0
        %2711 = vmatpush.msra.mxu0 0.0
        %2712 = vmatpush.msra.mxu0 0.0
        %2713 = vmatpush.msra.mxu0 0.0
        %2714 = vmatpush.msra.mxu0 0.0
        %2715 = vmatpush.msra.mxu0 0.0
        %2716 = vmatpush.msra.mxu0 0.0
        %2717 = vmatpush.msra.mxu0 0.0
        %2718 = vmatpush.msra.mxu0 0.0
        %2719 = vmatpush.msra.mxu0 0.0
        %2720 = vmatpush.msra.mxu0 %v225
        %2721 = vmatpush.msra.mxu0 %v224
        %2722 = vmatmul.f32.gmra.mxu0 %v2704
        %v2723 = vpop.f32.mrf.mxu0
        %v2724 = vadd.f32 0.0, %v2723
        %2725 = vdwg.mxu0
        %2726 = vmatpush.msra.mxu0 0.0
        %2727 = vmatpush.msra.mxu0 0.0
        %2728 = vmatpush.msra.mxu0 0.0
        %2729 = vmatpush.msra.mxu0 0.0
        %2730 = vmatpush.msra.mxu0 0.0
        %2731 = vmatpush.msra.mxu0 0.0
        %2732 = vmatpush.msra.mxu0 0.0
        %2733 = vmatpush.msra.mxu0 0.0
        %2734 = vmatpush.msra.mxu0 0.0
        %2735 = vmatpush.msra.mxu0 0.0
        %2736 = vmatpush.msra.mxu0 0.0
        %2737 = vmatpush.msra.mxu0 0.0
        %2738 = vmatpush.msra.mxu0 0.0
        %2739 = vmatpush.msra.mxu0 0.0
        %2740 = vmatpush.msra.mxu0 %v232
        %2741 = vmatpush.msra.mxu0 %v231
        %2742 = vmatmul.f32.gmra.mxu0 %v2704
        %v2743 = vpop.f32.mrf.mxu0
        %v2744 = vadd.f32 0.0, %v2743
        %2745 = vdwg.mxu0
        %v2746 = vmax.f32 %v2724, %v2744
        %v2748 = vsel %vm324, %v2746, 0
        %2750 = vmatpush.msra.mxu0 0.0
        %2751 = vmatpush.msra.mxu0 0.0
        %2752 = vmatpush.msra.mxu0 0.0
        %2753 = vmatpush.msra.mxu0 0.0
        %2754 = vmatpush.msra.mxu0 0.0
        %2755 = vmatpush.msra.mxu0 0.0
        %2756 = vmatpush.msra.mxu0 0.0
        %2757 = vmatpush.msra.mxu0 0.0
        %2758 = vmatpush.msra.mxu0 0.0
        %2759 = vmatpush.msra.mxu0 0.0
        %2760 = vmatpush.msra.mxu0 0.0
        %2761 = vmatpush.msra.mxu0 0.0
        %2762 = vmatpush.msra.mxu0 0.0
        %2763 = vmatpush.msra.mxu0 0.0
        %2764 = vmatpush.msra.mxu0 0.0
        %2765 = vmatpush.msra.mxu0 %v2748
        %2766 = vmatmul.f32.gmra.mxu0 %v322
        %v2767 = vpop.f32.mrf.mxu0
        %v2768 = vadd.f32 0.0, %v2767
        %2769 = vdwg.mxu0
        %v2771 = vrot.slane %v2768, 1
        %v2772 = vrot.slane %v2768, 2
        %v2773 = vrot.slane %v2768, 3
        %2777 = vst.msk [vmem:[%s2201 + $0x5] sm:$0x1] %vm355, %v2768
        %2778 = vst.msk [vmem:[%s2201 + $0x25] sm:$0x1] %vm355, %v2771
        %2779 = vst.msk [vmem:[%s2201 + $0x45] sm:$0x1] %vm355, %v2772
        %2780 = vst.msk [vmem:[%s2201 + $0x65] sm:$0x1] %vm355, %v2773
        %v2781 = vld [vmem:[%s2088 + $0xc] sm:$0x1]
        %v2782 = vld [vmem:[%s2088 + $0x8c] sm:$0x1]
        %v2783 = vld [vmem:[%s2088 + $0x10c] sm:$0x1]
        %v2784 = vld [vmem:[%s2088 + $0x18c] sm:$0x1]
        %v2785 = vld [vmem:[%s2088 + $0xd] sm:$0x1]
        %v2786 = vld [vmem:[%s2088 + $0x8d] sm:$0x1]
        %v2787 = vld [vmem:[%s2088 + $0x10d] sm:$0x1]
        %v2788 = vld [vmem:[%s2088 + $0x18d] sm:$0x1]
        %v2789 = vmax.f32 %v2781, %v2785
        %v2790 = vmax.f32 %v2782, %v2786
        %v2791 = vmax.f32 %v2783, %v2787
        %v2792 = vmax.f32 %v2784, %v2788
        %v2793 = vld [vmem:[%s2101 + $0xc] sm:$0x1]
        %v2794 = vld [vmem:[%s2101 + $0x8c] sm:$0x1]
        %v2795 = vld [vmem:[%s2101 + $0x10c] sm:$0x1]
        %v2796 = vld [vmem:[%s2101 + $0x18c] sm:$0x1]
        %v2797 = vld [vmem:[%s2101 + $0xd] sm:$0x1]
        %v2798 = vld [vmem:[%s2101 + $0x8d] sm:$0x1]
        %v2799 = vld [vmem:[%s2101 + $0x10d] sm:$0x1]
        %v2800 = vld [vmem:[%s2101 + $0x18d] sm:$0x1]
        %v2801 = vmax.f32 %v2793, %v2797
        %v2802 = vmax.f32 %v2794, %v2798
        %v2803 = vmax.f32 %v2795, %v2799
        %v2804 = vmax.f32 %v2796, %v2800
        %v2805 = vmax.f32 %v2789, %v2801
        %v2806 = vmax.f32 %v2790, %v2802
        %v2807 = vmax.f32 %v2791, %v2803
        %v2808 = vmax.f32 %v2792, %v2804
        %v2813 = vrot.slane %v2806, 7
        %v2814 = vsel %vm268, %v2813, %v2805
        %v2815 = vrot.slane %v2807, 6
        %v2816 = vsel %vm271, %v2815, %v2814
        %v2817 = vrot.slane %v2808, 5
        %v2818 = vsel %vm274, %v2817, %v2816
        %v2819 = vsel %vm276, %v2818, 0
        %2821 = vmatpush.msra.mxu0 0.0
        %2822 = vmatpush.msra.mxu0 0.0
        %2823 = vmatpush.msra.mxu0 0.0
        %2824 = vmatpush.msra.mxu0 0.0
        %2825 = vmatpush.msra.mxu0 0.0
        %2826 = vmatpush.msra.mxu0 0.0
        %2827 = vmatpush.msra.mxu0 0.0
        %2828 = vmatpush.msra.mxu0 0.0
        %2829 = vmatpush.msra.mxu0 0.0
        %2830 = vmatpush.msra.mxu0 0.0
        %2831 = vmatpush.msra.mxu0 0.0
        %2832 = vmatpush.msra.mxu0 0.0
        %2833 = vmatpush.msra.mxu0 0.0
        %2834 = vmatpush.msra.mxu0 0.0
        %2835 = vmatpush.msra.mxu0 %v225
        %2836 = vmatpush.msra.mxu0 %v224
        %2837 = vmatmul.f32.gmra.mxu0 %v2819
        %v2838 = vpop.f32.mrf.mxu0
        %v2839 = vadd.f32 0.0, %v2838
        %2840 = vdwg.mxu0
        %2841 = vmatpush.msra.mxu0 0.0
        %2842 = vmatpush.msra.mxu0 0.0
        %2843 = vmatpush.msra.mxu0 0.0
        %2844 = vmatpush.msra.mxu0 0.0
        %2845 = vmatpush.msra.mxu0 0.0
        %2846 = vmatpush.msra.mxu0 0.0
        %2847 = vmatpush.msra.mxu0 0.0
        %2848 = vmatpush.msra.mxu0 0.0
        %2849 = vmatpush.msra.mxu0 0.0
        %2850 = vmatpush.msra.mxu0 0.0
        %2851 = vmatpush.msra.mxu0 0.0
        %2852 = vmatpush.msra.mxu0 0.0
        %2853 = vmatpush.msra.mxu0 0.0
        %2854 = vmatpush.msra.mxu0 0.0
        %2855 = vmatpush.msra.mxu0 %v232
        %2856 = vmatpush.msra.mxu0 %v231
        %2857 = vmatmul.f32.gmra.mxu0 %v2819
        %v2858 = vpop.f32.mrf.mxu0
        %v2859 = vadd.f32 0.0, %v2858
        %2860 = vdwg.mxu0
        %v2861 = vmax.f32 %v2839, %v2859
        %v2863 = vsel %vm324, %v2861, 0
        %2865 = vmatpush.msra.mxu0 0.0
        %2866 = vmatpush.msra.mxu0 0.0
        %2867 = vmatpush.msra.mxu0 0.0
        %2868 = vmatpush.msra.mxu0 0.0
        %2869 = vmatpush.msra.mxu0 0.0
        %2870 = vmatpush.msra.mxu0 0.0
        %2871 = vmatpush.msra.mxu0 0.0
        %2872 = vmatpush.msra.mxu0 0.0
        %2873 = vmatpush.msra.mxu0 0.0
        %2874 = vmatpush.msra.mxu0 0.0
        %2875 = vmatpush.msra.mxu0 0.0
        %2876 = vmatpush.msra.mxu0 0.0
        %2877 = vmatpush.msra.mxu0 0.0
        %2878 = vmatpush.msra.mxu0 0.0
        %2879 = vmatpush.msra.mxu0 0.0
        %2880 = vmatpush.msra.mxu0 %v2863
        %2881 = vmatmul.f32.gmra.mxu0 %v322
        %v2882 = vpop.f32.mrf.mxu0
        %v2883 = vadd.f32 0.0, %v2882
        %2884 = vdwg.mxu0
        %v2886 = vrot.slane %v2883, 1
        %v2887 = vrot.slane %v2883, 2
        %v2888 = vrot.slane %v2883, 3
        %2892 = vst.msk [vmem:[%s2201 + $0x6] sm:$0x1] %vm355, %v2883
        %2893 = vst.msk [vmem:[%s2201 + $0x26] sm:$0x1] %vm355, %v2886
        %2894 = vst.msk [vmem:[%s2201 + $0x46] sm:$0x1] %vm355, %v2887
        %2895 = vst.msk [vmem:[%s2201 + $0x66] sm:$0x1] %vm355, %v2888
        %v2896 = vld [vmem:[%s2088 + $0xe] sm:$0x1]
        %v2897 = vld [vmem:[%s2088 + $0x8e] sm:$0x1]
        %v2898 = vld [vmem:[%s2088 + $0x10e] sm:$0x1]
        %v2899 = vld [vmem:[%s2088 + $0x18e] sm:$0x1]
        %v2900 = vld [vmem:[%s2088 + $0xf] sm:$0x1]
        %v2901 = vld [vmem:[%s2088 + $0x8f] sm:$0x1]
        %v2902 = vld [vmem:[%s2088 + $0x10f] sm:$0x1]
        %v2903 = vld [vmem:[%s2088 + $0x18f] sm:$0x1]
        %v2904 = vmax.f32 %v2896, %v2900
        %v2905 = vmax.f32 %v2897, %v2901
        %v2906 = vmax.f32 %v2898, %v2902
        %v2907 = vmax.f32 %v2899, %v2903
        %v2908 = vld [vmem:[%s2101 + $0xe] sm:$0x1]
        %v2909 = vld [vmem:[%s2101 + $0x8e] sm:$0x1]
        %v2910 = vld [vmem:[%s2101 + $0x10e] sm:$0x1]
        %v2911 = vld [vmem:[%s2101 + $0x18e] sm:$0x1]
        %v2912 = vld [vmem:[%s2101 + $0xf] sm:$0x1]
        %v2913 = vld [vmem:[%s2101 + $0x8f] sm:$0x1]
        %v2914 = vld [vmem:[%s2101 + $0x10f] sm:$0x1]
        %v2915 = vld [vmem:[%s2101 + $0x18f] sm:$0x1]
        %v2916 = vmax.f32 %v2908, %v2912
        %v2917 = vmax.f32 %v2909, %v2913
        %v2918 = vmax.f32 %v2910, %v2914
        %v2919 = vmax.f32 %v2911, %v2915
        %v2920 = vmax.f32 %v2904, %v2916
        %v2921 = vmax.f32 %v2905, %v2917
        %v2922 = vmax.f32 %v2906, %v2918
        %v2923 = vmax.f32 %v2907, %v2919
        %v2928 = vrot.slane %v2921, 7
        %v2929 = vsel %vm268, %v2928, %v2920
        %v2930 = vrot.slane %v2922, 6
        %v2931 = vsel %vm271, %v2930, %v2929
        %v2932 = vrot.slane %v2923, 5
        %v2933 = vsel %vm274, %v2932, %v2931
        %v2934 = vsel %vm276, %v2933, 0
        %2936 = vmatpush.msra.mxu0 0.0
        %2937 = vmatpush.msra.mxu0 0.0
        %2938 = vmatpush.msra.mxu0 0.0
        %2939 = vmatpush.msra.mxu0 0.0
        %2940 = vmatpush.msra.mxu0 0.0
        %2941 = vmatpush.msra.mxu0 0.0
        %2942 = vmatpush.msra.mxu0 0.0
        %2943 = vmatpush.msra.mxu0 0.0
        %2944 = vmatpush.msra.mxu0 0.0
        %2945 = vmatpush.msra.mxu0 0.0
        %2946 = vmatpush.msra.mxu0 0.0
        %2947 = vmatpush.msra.mxu0 0.0
        %2948 = vmatpush.msra.mxu0 0.0
        %2949 = vmatpush.msra.mxu0 0.0
        %2950 = vmatpush.msra.mxu0 %v225
        %2951 = vmatpush.msra.mxu0 %v224
        %2952 = vmatmul.f32.gmra.mxu0 %v2934
        %v2953 = vpop.f32.mrf.mxu0
        %v2954 = vadd.f32 0.0, %v2953
        %2955 = vdwg.mxu0
        %2956 = vmatpush.msra.mxu0 0.0
        %2957 = vmatpush.msra.mxu0 0.0
        %2958 = vmatpush.msra.mxu0 0.0
        %2959 = vmatpush.msra.mxu0 0.0
        %2960 = vmatpush.msra.mxu0 0.0
        %2961 = vmatpush.msra.mxu0 0.0
        %2962 = vmatpush.msra.mxu0 0.0
        %2963 = vmatpush.msra.mxu0 0.0
        %2964 = vmatpush.msra.mxu0 0.0
        %2965 = vmatpush.msra.mxu0 0.0
        %2966 = vmatpush.msra.mxu0 0.0
        %2967 = vmatpush.msra.mxu0 0.0
        %2968 = vmatpush.msra.mxu0 0.0
        %2969 = vmatpush.msra.mxu0 0.0
        %2970 = vmatpush.msra.mxu0 %v232
        %2971 = vmatpush.msra.mxu0 %v231
        %2972 = vmatmul.f32.gmra.mxu0 %v2934
        %v2973 = vpop.f32.mrf.mxu0
        %v2974 = vadd.f32 0.0, %v2973
        %2975 = vdwg.mxu0
        %v2976 = vmax.f32 %v2954, %v2974
        %v2978 = vsel %vm324, %v2976, 0
        %2980 = vmatpush.msra.mxu0 0.0
        %2981 = vmatpush.msra.mxu0 0.0
        %2982 = vmatpush.msra.mxu0 0.0
        %2983 = vmatpush.msra.mxu0 0.0
        %2984 = vmatpush.msra.mxu0 0.0
        %2985 = vmatpush.msra.mxu0 0.0
        %2986 = vmatpush.msra.mxu0 0.0
        %2987 = vmatpush.msra.mxu0 0.0
        %2988 = vmatpush.msra.mxu0 0.0
        %2989 = vmatpush.msra.mxu0 0.0
        %2990 = vmatpush.msra.mxu0 0.0
        %2991 = vmatpush.msra.mxu0 0.0
        %2992 = vmatpush.msra.mxu0 0.0
        %2993 = vmatpush.msra.mxu0 0.0
        %2994 = vmatpush.msra.mxu0 0.0
        %2995 = vmatpush.msra.mxu0 %v2978
        %2996 = vmatmul.f32.gmra.mxu0 %v322
        %v2997 = vpop.f32.mrf.mxu0
        %v2998 = vadd.f32 0.0, %v2997
        %2999 = vdwg.mxu0
        %v3001 = vrot.slane %v2998, 1
        %v3002 = vrot.slane %v2998, 2
        %v3003 = vrot.slane %v2998, 3
        %3007 = vst.msk [vmem:[%s2201 + $0x7] sm:$0x1] %vm355, %v2998
        %3008 = vst.msk [vmem:[%s2201 + $0x27] sm:$0x1] %vm355, %v3001
        %3009 = vst.msk [vmem:[%s2201 + $0x47] sm:$0x1] %vm355, %v3002
        %3010 = vst.msk [vmem:[%s2201 + $0x67] sm:$0x1] %vm355, %v3003
        %s3011 = scalar_lea.vmem %s189, 96 [#allocation5]
        %v3012 = vld [vmem:[%s3011] sm:$0x1]
        %v3013 = vld [vmem:[%s3011 + $0x80] sm:$0x1]
        %v3014 = vld [vmem:[%s3011 + $0x100] sm:$0x1]
        %v3015 = vld [vmem:[%s3011 + $0x180] sm:$0x1]
        %v3016 = vld [vmem:[%s3011 + $0x1] sm:$0x1]
        %v3017 = vld [vmem:[%s3011 + $0x81] sm:$0x1]
        %v3018 = vld [vmem:[%s3011 + $0x101] sm:$0x1]
        %v3019 = vld [vmem:[%s3011 + $0x181] sm:$0x1]
        %v3020 = vmax.f32 %v3012, %v3016
        %v3021 = vmax.f32 %v3013, %v3017
        %v3022 = vmax.f32 %v3014, %v3018
        %v3023 = vmax.f32 %v3015, %v3019
        %s3024 = scalar_lea.vmem %s189, 112 [#allocation5]
        %v3025 = vld [vmem:[%s3024] sm:$0x1]
        %v3026 = vld [vmem:[%s3024 + $0x80] sm:$0x1]
        %v3027 = vld [vmem:[%s3024 + $0x100] sm:$0x1]
        %v3028 = vld [vmem:[%s3024 + $0x180] sm:$0x1]
        %v3029 = vld [vmem:[%s3024 + $0x1] sm:$0x1]
        %v3030 = vld [vmem:[%s3024 + $0x81] sm:$0x1]
        %v3031 = vld [vmem:[%s3024 + $0x101] sm:$0x1]
        %v3032 = vld [vmem:[%s3024 + $0x181] sm:$0x1]
        %v3033 = vmax.f32 %v3025, %v3029
        %v3034 = vmax.f32 %v3026, %v3030
        %v3035 = vmax.f32 %v3027, %v3031
        %v3036 = vmax.f32 %v3028, %v3032
        %v3037 = vmax.f32 %v3020, %v3033
        %v3038 = vmax.f32 %v3021, %v3034
        %v3039 = vmax.f32 %v3022, %v3035
        %v3040 = vmax.f32 %v3023, %v3036
        %v3045 = vrot.slane %v3038, 7
        %v3046 = vsel %vm268, %v3045, %v3037
        %v3047 = vrot.slane %v3039, 6
        %v3048 = vsel %vm271, %v3047, %v3046
        %v3049 = vrot.slane %v3040, 5
        %v3050 = vsel %vm274, %v3049, %v3048
        %v3051 = vsel %vm276, %v3050, 0
        %3053 = vmatpush.msra.mxu0 0.0
        %3054 = vmatpush.msra.mxu0 0.0
        %3055 = vmatpush.msra.mxu0 0.0
        %3056 = vmatpush.msra.mxu0 0.0
        %3057 = vmatpush.msra.mxu0 0.0
        %3058 = vmatpush.msra.mxu0 0.0
        %3059 = vmatpush.msra.mxu0 0.0
        %3060 = vmatpush.msra.mxu0 0.0
        %3061 = vmatpush.msra.mxu0 0.0
        %3062 = vmatpush.msra.mxu0 0.0
        %3063 = vmatpush.msra.mxu0 0.0
        %3064 = vmatpush.msra.mxu0 0.0
        %3065 = vmatpush.msra.mxu0 0.0
        %3066 = vmatpush.msra.mxu0 0.0
        %3067 = vmatpush.msra.mxu0 %v225
        %3068 = vmatpush.msra.mxu0 %v224
        %3069 = vmatmul.f32.gmra.mxu0 %v3051
        %v3070 = vpop.f32.mrf.mxu0
        %v3071 = vadd.f32 0.0, %v3070
        %3072 = vdwg.mxu0
        %3073 = vmatpush.msra.mxu0 0.0
        %3074 = vmatpush.msra.mxu0 0.0
        %3075 = vmatpush.msra.mxu0 0.0
        %3076 = vmatpush.msra.mxu0 0.0
        %3077 = vmatpush.msra.mxu0 0.0
        %3078 = vmatpush.msra.mxu0 0.0
        %3079 = vmatpush.msra.mxu0 0.0
        %3080 = vmatpush.msra.mxu0 0.0
        %3081 = vmatpush.msra.mxu0 0.0
        %3082 = vmatpush.msra.mxu0 0.0
        %3083 = vmatpush.msra.mxu0 0.0
        %3084 = vmatpush.msra.mxu0 0.0
        %3085 = vmatpush.msra.mxu0 0.0
        %3086 = vmatpush.msra.mxu0 0.0
        %3087 = vmatpush.msra.mxu0 %v232
        %3088 = vmatpush.msra.mxu0 %v231
        %3089 = vmatmul.f32.gmra.mxu0 %v3051
        %v3090 = vpop.f32.mrf.mxu0
        %v3091 = vadd.f32 0.0, %v3090
        %3092 = vdwg.mxu0
        %v3093 = vmax.f32 %v3071, %v3091
        %v3095 = vsel %vm324, %v3093, 0
        %3097 = vmatpush.msra.mxu0 0.0
        %3098 = vmatpush.msra.mxu0 0.0
        %3099 = vmatpush.msra.mxu0 0.0
        %3100 = vmatpush.msra.mxu0 0.0
        %3101 = vmatpush.msra.mxu0 0.0
        %3102 = vmatpush.msra.mxu0 0.0
        %3103 = vmatpush.msra.mxu0 0.0
        %3104 = vmatpush.msra.mxu0 0.0
        %3105 = vmatpush.msra.mxu0 0.0
        %3106 = vmatpush.msra.mxu0 0.0
        %3107 = vmatpush.msra.mxu0 0.0
        %3108 = vmatpush.msra.mxu0 0.0
        %3109 = vmatpush.msra.mxu0 0.0
        %3110 = vmatpush.msra.mxu0 0.0
        %3111 = vmatpush.msra.mxu0 0.0
        %3112 = vmatpush.msra.mxu0 %v3095
        %3113 = vmatmul.f32.gmra.mxu0 %v322
        %v3114 = vpop.f32.mrf.mxu0
        %v3115 = vadd.f32 0.0, %v3114
        %3116 = vdwg.mxu0
        %v3118 = vrot.slane %v3115, 1
        %v3119 = vrot.slane %v3115, 2
        %v3120 = vrot.slane %v3115, 3
        %s3124 = scalar_lea.vmem %s210, 24 [#allocation7]
        %3125 = vst.msk [vmem:[%s3124] sm:$0x1] %vm355, %v3115
        %3126 = vst.msk [vmem:[%s3124 + $0x20] sm:$0x1] %vm355, %v3118
        %3127 = vst.msk [vmem:[%s3124 + $0x40] sm:$0x1] %vm355, %v3119
        %3128 = vst.msk [vmem:[%s3124 + $0x60] sm:$0x1] %vm355, %v3120
        %v3129 = vld [vmem:[%s3011 + $0x2] sm:$0x1]
        %v3130 = vld [vmem:[%s3011 + $0x82] sm:$0x1]
        %v3131 = vld [vmem:[%s3011 + $0x102] sm:$0x1]
        %v3132 = vld [vmem:[%s3011 + $0x182] sm:$0x1]
        %v3133 = vld [vmem:[%s3011 + $0x3] sm:$0x1]
        %v3134 = vld [vmem:[%s3011 + $0x83] sm:$0x1]
        %v3135 = vld [vmem:[%s3011 + $0x103] sm:$0x1]
        %v3136 = vld [vmem:[%s3011 + $0x183] sm:$0x1]
        %v3137 = vmax.f32 %v3129, %v3133
        %v3138 = vmax.f32 %v3130, %v3134
        %v3139 = vmax.f32 %v3131, %v3135
        %v3140 = vmax.f32 %v3132, %v3136
        %v3141 = vld [vmem:[%s3024 + $0x2] sm:$0x1]
        %v3142 = vld [vmem:[%s3024 + $0x82] sm:$0x1]
        %v3143 = vld [vmem:[%s3024 + $0x102] sm:$0x1]
        %v3144 = vld [vmem:[%s3024 + $0x182] sm:$0x1]
        %v3145 = vld [vmem:[%s3024 + $0x3] sm:$0x1]
        %v3146 = vld [vmem:[%s3024 + $0x83] sm:$0x1]
        %v3147 = vld [vmem:[%s3024 + $0x103] sm:$0x1]
        %v3148 = vld [vmem:[%s3024 + $0x183] sm:$0x1]
        %v3149 = vmax.f32 %v3141, %v3145
        %v3150 = vmax.f32 %v3142, %v3146
        %v3151 = vmax.f32 %v3143, %v3147
        %v3152 = vmax.f32 %v3144, %v3148
        %v3153 = vmax.f32 %v3137, %v3149
        %v3154 = vmax.f32 %v3138, %v3150
        %v3155 = vmax.f32 %v3139, %v3151
        %v3156 = vmax.f32 %v3140, %v3152
        %v3161 = vrot.slane %v3154, 7
        %v3162 = vsel %vm268, %v3161, %v3153
        %v3163 = vrot.slane %v3155, 6
        %v3164 = vsel %vm271, %v3163, %v3162
        %v3165 = vrot.slane %v3156, 5
        %v3166 = vsel %vm274, %v3165, %v3164
        %v3167 = vsel %vm276, %v3166, 0
        %3169 = vmatpush.msra.mxu0 0.0
        %3170 = vmatpush.msra.mxu0 0.0
        %3171 = vmatpush.msra.mxu0 0.0
        %3172 = vmatpush.msra.mxu0 0.0
        %3173 = vmatpush.msra.mxu0 0.0
        %3174 = vmatpush.msra.mxu0 0.0
        %3175 = vmatpush.msra.mxu0 0.0
        %3176 = vmatpush.msra.mxu0 0.0
        %3177 = vmatpush.msra.mxu0 0.0
        %3178 = vmatpush.msra.mxu0 0.0
        %3179 = vmatpush.msra.mxu0 0.0
        %3180 = vmatpush.msra.mxu0 0.0
        %3181 = vmatpush.msra.mxu0 0.0
        %3182 = vmatpush.msra.mxu0 0.0
        %3183 = vmatpush.msra.mxu0 %v225
        %3184 = vmatpush.msra.mxu0 %v224
        %3185 = vmatmul.f32.gmra.mxu0 %v3167
        %v3186 = vpop.f32.mrf.mxu0
        %v3187 = vadd.f32 0.0, %v3186
        %3188 = vdwg.mxu0
        %3189 = vmatpush.msra.mxu0 0.0
        %3190 = vmatpush.msra.mxu0 0.0
        %3191 = vmatpush.msra.mxu0 0.0
        %3192 = vmatpush.msra.mxu0 0.0
        %3193 = vmatpush.msra.mxu0 0.0
        %3194 = vmatpush.msra.mxu0 0.0
        %3195 = vmatpush.msra.mxu0 0.0
        %3196 = vmatpush.msra.mxu0 0.0
        %3197 = vmatpush.msra.mxu0 0.0
        %3198 = vmatpush.msra.mxu0 0.0
        %3199 = vmatpush.msra.mxu0 0.0
        %3200 = vmatpush.msra.mxu0 0.0
        %3201 = vmatpush.msra.mxu0 0.0
        %3202 = vmatpush.msra.mxu0 0.0
        %3203 = vmatpush.msra.mxu0 %v232
        %3204 = vmatpush.msra.mxu0 %v231
        %3205 = vmatmul.f32.gmra.mxu0 %v3167
        %v3206 = vpop.f32.mrf.mxu0
        %v3207 = vadd.f32 0.0, %v3206
        %3208 = vdwg.mxu0
        %v3209 = vmax.f32 %v3187, %v3207
        %v3211 = vsel %vm324, %v3209, 0
        %3213 = vmatpush.msra.mxu0 0.0
        %3214 = vmatpush.msra.mxu0 0.0
        %3215 = vmatpush.msra.mxu0 0.0
        %3216 = vmatpush.msra.mxu0 0.0
        %3217 = vmatpush.msra.mxu0 0.0
        %3218 = vmatpush.msra.mxu0 0.0
        %3219 = vmatpush.msra.mxu0 0.0
        %3220 = vmatpush.msra.mxu0 0.0
        %3221 = vmatpush.msra.mxu0 0.0
        %3222 = vmatpush.msra.mxu0 0.0
        %3223 = vmatpush.msra.mxu0 0.0
        %3224 = vmatpush.msra.mxu0 0.0
        %3225 = vmatpush.msra.mxu0 0.0
        %3226 = vmatpush.msra.mxu0 0.0
        %3227 = vmatpush.msra.mxu0 0.0
        %3228 = vmatpush.msra.mxu0 %v3211
        %3229 = vmatmul.f32.gmra.mxu0 %v322
        %v3230 = vpop.f32.mrf.mxu0
        %v3231 = vadd.f32 0.0, %v3230
        %3232 = vdwg.mxu0
        %v3234 = vrot.slane %v3231, 1
        %v3235 = vrot.slane %v3231, 2
        %v3236 = vrot.slane %v3231, 3
        %3240 = vst.msk [vmem:[%s3124 + $0x1] sm:$0x1] %vm355, %v3231
        %3241 = vst.msk [vmem:[%s3124 + $0x21] sm:$0x1] %vm355, %v3234
        %3242 = vst.msk [vmem:[%s3124 + $0x41] sm:$0x1] %vm355, %v3235
        %3243 = vst.msk [vmem:[%s3124 + $0x61] sm:$0x1] %vm355, %v3236
        %v3244 = vld [vmem:[%s3011 + $0x4] sm:$0x1]
        %v3245 = vld [vmem:[%s3011 + $0x84] sm:$0x1]
        %v3246 = vld [vmem:[%s3011 + $0x104] sm:$0x1]
        %v3247 = vld [vmem:[%s3011 + $0x184] sm:$0x1]
        %v3248 = vld [vmem:[%s3011 + $0x5] sm:$0x1]
        %v3249 = vld [vmem:[%s3011 + $0x85] sm:$0x1]
        %v3250 = vld [vmem:[%s3011 + $0x105] sm:$0x1]
        %v3251 = vld [vmem:[%s3011 + $0x185] sm:$0x1]
        %v3252 = vmax.f32 %v3244, %v3248
        %v3253 = vmax.f32 %v3245, %v3249
        %v3254 = vmax.f32 %v3246, %v3250
        %v3255 = vmax.f32 %v3247, %v3251
        %v3256 = vld [vmem:[%s3024 + $0x4] sm:$0x1]
        %v3257 = vld [vmem:[%s3024 + $0x84] sm:$0x1]
        %v3258 = vld [vmem:[%s3024 + $0x104] sm:$0x1]
        %v3259 = vld [vmem:[%s3024 + $0x184] sm:$0x1]
        %v3260 = vld [vmem:[%s3024 + $0x5] sm:$0x1]
        %v3261 = vld [vmem:[%s3024 + $0x85] sm:$0x1]
        %v3262 = vld [vmem:[%s3024 + $0x105] sm:$0x1]
        %v3263 = vld [vmem:[%s3024 + $0x185] sm:$0x1]
        %v3264 = vmax.f32 %v3256, %v3260
        %v3265 = vmax.f32 %v3257, %v3261
        %v3266 = vmax.f32 %v3258, %v3262
        %v3267 = vmax.f32 %v3259, %v3263
        %v3268 = vmax.f32 %v3252, %v3264
        %v3269 = vmax.f32 %v3253, %v3265
        %v3270 = vmax.f32 %v3254, %v3266
        %v3271 = vmax.f32 %v3255, %v3267
        %v3276 = vrot.slane %v3269, 7
        %v3277 = vsel %vm268, %v3276, %v3268
        %v3278 = vrot.slane %v3270, 6
        %v3279 = vsel %vm271, %v3278, %v3277
        %v3280 = vrot.slane %v3271, 5
        %v3281 = vsel %vm274, %v3280, %v3279
        %v3282 = vsel %vm276, %v3281, 0
        %3284 = vmatpush.msra.mxu0 0.0
        %3285 = vmatpush.msra.mxu0 0.0
        %3286 = vmatpush.msra.mxu0 0.0
        %3287 = vmatpush.msra.mxu0 0.0
        %3288 = vmatpush.msra.mxu0 0.0
        %3289 = vmatpush.msra.mxu0 0.0
        %3290 = vmatpush.msra.mxu0 0.0
        %3291 = vmatpush.msra.mxu0 0.0
        %3292 = vmatpush.msra.mxu0 0.0
        %3293 = vmatpush.msra.mxu0 0.0
        %3294 = vmatpush.msra.mxu0 0.0
        %3295 = vmatpush.msra.mxu0 0.0
        %3296 = vmatpush.msra.mxu0 0.0
        %3297 = vmatpush.msra.mxu0 0.0
        %3298 = vmatpush.msra.mxu0 %v225
        %3299 = vmatpush.msra.mxu0 %v224
        %3300 = vmatmul.f32.gmra.mxu0 %v3282
        %v3301 = vpop.f32.mrf.mxu0
        %v3302 = vadd.f32 0.0, %v3301
        %3303 = vdwg.mxu0
        %3304 = vmatpush.msra.mxu0 0.0
        %3305 = vmatpush.msra.mxu0 0.0
        %3306 = vmatpush.msra.mxu0 0.0
        %3307 = vmatpush.msra.mxu0 0.0
        %3308 = vmatpush.msra.mxu0 0.0
        %3309 = vmatpush.msra.mxu0 0.0
        %3310 = vmatpush.msra.mxu0 0.0
        %3311 = vmatpush.msra.mxu0 0.0
        %3312 = vmatpush.msra.mxu0 0.0
        %3313 = vmatpush.msra.mxu0 0.0
        %3314 = vmatpush.msra.mxu0 0.0
        %3315 = vmatpush.msra.mxu0 0.0
        %3316 = vmatpush.msra.mxu0 0.0
        %3317 = vmatpush.msra.mxu0 0.0
        %3318 = vmatpush.msra.mxu0 %v232
        %3319 = vmatpush.msra.mxu0 %v231
        %3320 = vmatmul.f32.gmra.mxu0 %v3282
        %v3321 = vpop.f32.mrf.mxu0
        %v3322 = vadd.f32 0.0, %v3321
        %3323 = vdwg.mxu0
        %v3324 = vmax.f32 %v3302, %v3322
        %v3326 = vsel %vm324, %v3324, 0
        %3328 = vmatpush.msra.mxu0 0.0
        %3329 = vmatpush.msra.mxu0 0.0
        %3330 = vmatpush.msra.mxu0 0.0
        %3331 = vmatpush.msra.mxu0 0.0
        %3332 = vmatpush.msra.mxu0 0.0
        %3333 = vmatpush.msra.mxu0 0.0
        %3334 = vmatpush.msra.mxu0 0.0
        %3335 = vmatpush.msra.mxu0 0.0
        %3336 = vmatpush.msra.mxu0 0.0
        %3337 = vmatpush.msra.mxu0 0.0
        %3338 = vmatpush.msra.mxu0 0.0
        %3339 = vmatpush.msra.mxu0 0.0
        %3340 = vmatpush.msra.mxu0 0.0
        %3341 = vmatpush.msra.mxu0 0.0
        %3342 = vmatpush.msra.mxu0 0.0
        %3343 = vmatpush.msra.mxu0 %v3326
        %3344 = vmatmul.f32.gmra.mxu0 %v322
        %v3345 = vpop.f32.mrf.mxu0
        %v3346 = vadd.f32 0.0, %v3345
        %3347 = vdwg.mxu0
        %v3349 = vrot.slane %v3346, 1
        %v3350 = vrot.slane %v3346, 2
        %v3351 = vrot.slane %v3346, 3
        %3355 = vst.msk [vmem:[%s3124 + $0x2] sm:$0x1] %vm355, %v3346
        %3356 = vst.msk [vmem:[%s3124 + $0x22] sm:$0x1] %vm355, %v3349
        %3357 = vst.msk [vmem:[%s3124 + $0x42] sm:$0x1] %vm355, %v3350
        %3358 = vst.msk [vmem:[%s3124 + $0x62] sm:$0x1] %vm355, %v3351
        %v3359 = vld [vmem:[%s3011 + $0x6] sm:$0x1]
        %v3360 = vld [vmem:[%s3011 + $0x86] sm:$0x1]
        %v3361 = vld [vmem:[%s3011 + $0x106] sm:$0x1]
        %v3362 = vld [vmem:[%s3011 + $0x186] sm:$0x1]
        %v3363 = vld [vmem:[%s3011 + $0x7] sm:$0x1]
        %v3364 = vld [vmem:[%s3011 + $0x87] sm:$0x1]
        %v3365 = vld [vmem:[%s3011 + $0x107] sm:$0x1]
        %v3366 = vld [vmem:[%s3011 + $0x187] sm:$0x1]
        %v3367 = vmax.f32 %v3359, %v3363
        %v3368 = vmax.f32 %v3360, %v3364
        %v3369 = vmax.f32 %v3361, %v3365
        %v3370 = vmax.f32 %v3362, %v3366
        %v3371 = vld [vmem:[%s3024 + $0x6] sm:$0x1]
        %v3372 = vld [vmem:[%s3024 + $0x86] sm:$0x1]
        %v3373 = vld [vmem:[%s3024 + $0x106] sm:$0x1]
        %v3374 = vld [vmem:[%s3024 + $0x186] sm:$0x1]
        %v3375 = vld [vmem:[%s3024 + $0x7] sm:$0x1]
        %v3376 = vld [vmem:[%s3024 + $0x87] sm:$0x1]
        %v3377 = vld [vmem:[%s3024 + $0x107] sm:$0x1]
        %v3378 = vld [vmem:[%s3024 + $0x187] sm:$0x1]
        %v3379 = vmax.f32 %v3371, %v3375
        %v3380 = vmax.f32 %v3372, %v3376
        %v3381 = vmax.f32 %v3373, %v3377
        %v3382 = vmax.f32 %v3374, %v3378
        %v3383 = vmax.f32 %v3367, %v3379
        %v3384 = vmax.f32 %v3368, %v3380
        %v3385 = vmax.f32 %v3369, %v3381
        %v3386 = vmax.f32 %v3370, %v3382
        %v3391 = vrot.slane %v3384, 7
        %v3392 = vsel %vm268, %v3391, %v3383
        %v3393 = vrot.slane %v3385, 6
        %v3394 = vsel %vm271, %v3393, %v3392
        %v3395 = vrot.slane %v3386, 5
        %v3396 = vsel %vm274, %v3395, %v3394
        %v3397 = vsel %vm276, %v3396, 0
        %3399 = vmatpush.msra.mxu0 0.0
        %3400 = vmatpush.msra.mxu0 0.0
        %3401 = vmatpush.msra.mxu0 0.0
        %3402 = vmatpush.msra.mxu0 0.0
        %3403 = vmatpush.msra.mxu0 0.0
        %3404 = vmatpush.msra.mxu0 0.0
        %3405 = vmatpush.msra.mxu0 0.0
        %3406 = vmatpush.msra.mxu0 0.0
        %3407 = vmatpush.msra.mxu0 0.0
        %3408 = vmatpush.msra.mxu0 0.0
        %3409 = vmatpush.msra.mxu0 0.0
        %3410 = vmatpush.msra.mxu0 0.0
        %3411 = vmatpush.msra.mxu0 0.0
        %3412 = vmatpush.msra.mxu0 0.0
        %3413 = vmatpush.msra.mxu0 %v225
        %3414 = vmatpush.msra.mxu0 %v224
        %3415 = vmatmul.f32.gmra.mxu0 %v3397
        %v3416 = vpop.f32.mrf.mxu0
        %v3417 = vadd.f32 0.0, %v3416
        %3418 = vdwg.mxu0
        %3419 = vmatpush.msra.mxu0 0.0
        %3420 = vmatpush.msra.mxu0 0.0
        %3421 = vmatpush.msra.mxu0 0.0
        %3422 = vmatpush.msra.mxu0 0.0
        %3423 = vmatpush.msra.mxu0 0.0
        %3424 = vmatpush.msra.mxu0 0.0
        %3425 = vmatpush.msra.mxu0 0.0
        %3426 = vmatpush.msra.mxu0 0.0
        %3427 = vmatpush.msra.mxu0 0.0
        %3428 = vmatpush.msra.mxu0 0.0
        %3429 = vmatpush.msra.mxu0 0.0
        %3430 = vmatpush.msra.mxu0 0.0
        %3431 = vmatpush.msra.mxu0 0.0
        %3432 = vmatpush.msra.mxu0 0.0
        %3433 = vmatpush.msra.mxu0 %v232
        %3434 = vmatpush.msra.mxu0 %v231
        %3435 = vmatmul.f32.gmra.mxu0 %v3397
        %v3436 = vpop.f32.mrf.mxu0
        %v3437 = vadd.f32 0.0, %v3436
        %3438 = vdwg.mxu0
        %v3439 = vmax.f32 %v3417, %v3437
        %v3441 = vsel %vm324, %v3439, 0
        %3443 = vmatpush.msra.mxu0 0.0
        %3444 = vmatpush.msra.mxu0 0.0
        %3445 = vmatpush.msra.mxu0 0.0
        %3446 = vmatpush.msra.mxu0 0.0
        %3447 = vmatpush.msra.mxu0 0.0
        %3448 = vmatpush.msra.mxu0 0.0
        %3449 = vmatpush.msra.mxu0 0.0
        %3450 = vmatpush.msra.mxu0 0.0
        %3451 = vmatpush.msra.mxu0 0.0
        %3452 = vmatpush.msra.mxu0 0.0
        %3453 = vmatpush.msra.mxu0 0.0
        %3454 = vmatpush.msra.mxu0 0.0
        %3455 = vmatpush.msra.mxu0 0.0
        %3456 = vmatpush.msra.mxu0 0.0
        %3457 = vmatpush.msra.mxu0 0.0
        %3458 = vmatpush.msra.mxu0 %v3441
        %3459 = vmatmul.f32.gmra.mxu0 %v322
        %v3460 = vpop.f32.mrf.mxu0
        %v3461 = vadd.f32 0.0, %v3460
        %3462 = vdwg.mxu0
        %v3464 = vrot.slane %v3461, 1
        %v3465 = vrot.slane %v3461, 2
        %v3466 = vrot.slane %v3461, 3
        %3470 = vst.msk [vmem:[%s3124 + $0x3] sm:$0x1] %vm355, %v3461
        %3471 = vst.msk [vmem:[%s3124 + $0x23] sm:$0x1] %vm355, %v3464
        %3472 = vst.msk [vmem:[%s3124 + $0x43] sm:$0x1] %vm355, %v3465
        %3473 = vst.msk [vmem:[%s3124 + $0x63] sm:$0x1] %vm355, %v3466
        %v3474 = vld [vmem:[%s3011 + $0x8] sm:$0x1]
        %v3475 = vld [vmem:[%s3011 + $0x88] sm:$0x1]
        %v3476 = vld [vmem:[%s3011 + $0x108] sm:$0x1]
        %v3477 = vld [vmem:[%s3011 + $0x188] sm:$0x1]
        %v3478 = vld [vmem:[%s3011 + $0x9] sm:$0x1]
        %v3479 = vld [vmem:[%s3011 + $0x89] sm:$0x1]
        %v3480 = vld [vmem:[%s3011 + $0x109] sm:$0x1]
        %v3481 = vld [vmem:[%s3011 + $0x189] sm:$0x1]
        %v3482 = vmax.f32 %v3474, %v3478
        %v3483 = vmax.f32 %v3475, %v3479
        %v3484 = vmax.f32 %v3476, %v3480
        %v3485 = vmax.f32 %v3477, %v3481
        %v3486 = vld [vmem:[%s3024 + $0x8] sm:$0x1]
        %v3487 = vld [vmem:[%s3024 + $0x88] sm:$0x1]
        %v3488 = vld [vmem:[%s3024 + $0x108] sm:$0x1]
        %v3489 = vld [vmem:[%s3024 + $0x188] sm:$0x1]
        %v3490 = vld [vmem:[%s3024 + $0x9] sm:$0x1]
        %v3491 = vld [vmem:[%s3024 + $0x89] sm:$0x1]
        %v3492 = vld [vmem:[%s3024 + $0x109] sm:$0x1]
        %v3493 = vld [vmem:[%s3024 + $0x189] sm:$0x1]
        %v3494 = vmax.f32 %v3486, %v3490
        %v3495 = vmax.f32 %v3487, %v3491
        %v3496 = vmax.f32 %v3488, %v3492
        %v3497 = vmax.f32 %v3489, %v3493
        %v3498 = vmax.f32 %v3482, %v3494
        %v3499 = vmax.f32 %v3483, %v3495
        %v3500 = vmax.f32 %v3484, %v3496
        %v3501 = vmax.f32 %v3485, %v3497
        %v3506 = vrot.slane %v3499, 7
        %v3507 = vsel %vm268, %v3506, %v3498
        %v3508 = vrot.slane %v3500, 6
        %v3509 = vsel %vm271, %v3508, %v3507
        %v3510 = vrot.slane %v3501, 5
        %v3511 = vsel %vm274, %v3510, %v3509
        %v3512 = vsel %vm276, %v3511, 0
        %3514 = vmatpush.msra.mxu0 0.0
        %3515 = vmatpush.msra.mxu0 0.0
        %3516 = vmatpush.msra.mxu0 0.0
        %3517 = vmatpush.msra.mxu0 0.0
        %3518 = vmatpush.msra.mxu0 0.0
        %3519 = vmatpush.msra.mxu0 0.0
        %3520 = vmatpush.msra.mxu0 0.0
        %3521 = vmatpush.msra.mxu0 0.0
        %3522 = vmatpush.msra.mxu0 0.0
        %3523 = vmatpush.msra.mxu0 0.0
        %3524 = vmatpush.msra.mxu0 0.0
        %3525 = vmatpush.msra.mxu0 0.0
        %3526 = vmatpush.msra.mxu0 0.0
        %3527 = vmatpush.msra.mxu0 0.0
        %3528 = vmatpush.msra.mxu0 %v225
        %3529 = vmatpush.msra.mxu0 %v224
        %3530 = vmatmul.f32.gmra.mxu0 %v3512
        %v3531 = vpop.f32.mrf.mxu0
        %v3532 = vadd.f32 0.0, %v3531
        %3533 = vdwg.mxu0
        %3534 = vmatpush.msra.mxu0 0.0
        %3535 = vmatpush.msra.mxu0 0.0
        %3536 = vmatpush.msra.mxu0 0.0
        %3537 = vmatpush.msra.mxu0 0.0
        %3538 = vmatpush.msra.mxu0 0.0
        %3539 = vmatpush.msra.mxu0 0.0
        %3540 = vmatpush.msra.mxu0 0.0
        %3541 = vmatpush.msra.mxu0 0.0
        %3542 = vmatpush.msra.mxu0 0.0
        %3543 = vmatpush.msra.mxu0 0.0
        %3544 = vmatpush.msra.mxu0 0.0
        %3545 = vmatpush.msra.mxu0 0.0
        %3546 = vmatpush.msra.mxu0 0.0
        %3547 = vmatpush.msra.mxu0 0.0
        %3548 = vmatpush.msra.mxu0 %v232
        %3549 = vmatpush.msra.mxu0 %v231
        %3550 = vmatmul.f32.gmra.mxu0 %v3512
        %v3551 = vpop.f32.mrf.mxu0
        %v3552 = vadd.f32 0.0, %v3551
        %3553 = vdwg.mxu0
        %v3554 = vmax.f32 %v3532, %v3552
        %v3556 = vsel %vm324, %v3554, 0
        %3558 = vmatpush.msra.mxu0 0.0
        %3559 = vmatpush.msra.mxu0 0.0
        %3560 = vmatpush.msra.mxu0 0.0
        %3561 = vmatpush.msra.mxu0 0.0
        %3562 = vmatpush.msra.mxu0 0.0
        %3563 = vmatpush.msra.mxu0 0.0
        %3564 = vmatpush.msra.mxu0 0.0
        %3565 = vmatpush.msra.mxu0 0.0
        %3566 = vmatpush.msra.mxu0 0.0
        %3567 = vmatpush.msra.mxu0 0.0
        %3568 = vmatpush.msra.mxu0 0.0
        %3569 = vmatpush.msra.mxu0 0.0
        %3570 = vmatpush.msra.mxu0 0.0
        %3571 = vmatpush.msra.mxu0 0.0
        %3572 = vmatpush.msra.mxu0 0.0
        %3573 = vmatpush.msra.mxu0 %v3556
        %3574 = vmatmul.f32.gmra.mxu0 %v322
        %v3575 = vpop.f32.mrf.mxu0
        %v3576 = vadd.f32 0.0, %v3575
        %3577 = vdwg.mxu0
        %v3579 = vrot.slane %v3576, 1
        %v3580 = vrot.slane %v3576, 2
        %v3581 = vrot.slane %v3576, 3
        %3585 = vst.msk [vmem:[%s3124 + $0x4] sm:$0x1] %vm355, %v3576
        %3586 = vst.msk [vmem:[%s3124 + $0x24] sm:$0x1] %vm355, %v3579
        %3587 = vst.msk [vmem:[%s3124 + $0x44] sm:$0x1] %vm355, %v3580
        %3588 = vst.msk [vmem:[%s3124 + $0x64] sm:$0x1] %vm355, %v3581
        %v3589 = vld [vmem:[%s3011 + $0xa] sm:$0x1]
        %v3590 = vld [vmem:[%s3011 + $0x8a] sm:$0x1]
        %v3591 = vld [vmem:[%s3011 + $0x10a] sm:$0x1]
        %v3592 = vld [vmem:[%s3011 + $0x18a] sm:$0x1]
        %v3593 = vld [vmem:[%s3011 + $0xb] sm:$0x1]
        %v3594 = vld [vmem:[%s3011 + $0x8b] sm:$0x1]
        %v3595 = vld [vmem:[%s3011 + $0x10b] sm:$0x1]
        %v3596 = vld [vmem:[%s3011 + $0x18b] sm:$0x1]
        %v3597 = vmax.f32 %v3589, %v3593
        %v3598 = vmax.f32 %v3590, %v3594
        %v3599 = vmax.f32 %v3591, %v3595
        %v3600 = vmax.f32 %v3592, %v3596
        %v3601 = vld [vmem:[%s3024 + $0xa] sm:$0x1]
        %v3602 = vld [vmem:[%s3024 + $0x8a] sm:$0x1]
        %v3603 = vld [vmem:[%s3024 + $0x10a] sm:$0x1]
        %v3604 = vld [vmem:[%s3024 + $0x18a] sm:$0x1]
        %v3605 = vld [vmem:[%s3024 + $0xb] sm:$0x1]
        %v3606 = vld [vmem:[%s3024 + $0x8b] sm:$0x1]
        %v3607 = vld [vmem:[%s3024 + $0x10b] sm:$0x1]
        %v3608 = vld [vmem:[%s3024 + $0x18b] sm:$0x1]
        %v3609 = vmax.f32 %v3601, %v3605
        %v3610 = vmax.f32 %v3602, %v3606
        %v3611 = vmax.f32 %v3603, %v3607
        %v3612 = vmax.f32 %v3604, %v3608
        %v3613 = vmax.f32 %v3597, %v3609
        %v3614 = vmax.f32 %v3598, %v3610
        %v3615 = vmax.f32 %v3599, %v3611
        %v3616 = vmax.f32 %v3600, %v3612
        %v3621 = vrot.slane %v3614, 7
        %v3622 = vsel %vm268, %v3621, %v3613
        %v3623 = vrot.slane %v3615, 6
        %v3624 = vsel %vm271, %v3623, %v3622
        %v3625 = vrot.slane %v3616, 5
        %v3626 = vsel %vm274, %v3625, %v3624
        %v3627 = vsel %vm276, %v3626, 0
        %3629 = vmatpush.msra.mxu0 0.0
        %3630 = vmatpush.msra.mxu0 0.0
        %3631 = vmatpush.msra.mxu0 0.0
        %3632 = vmatpush.msra.mxu0 0.0
        %3633 = vmatpush.msra.mxu0 0.0
        %3634 = vmatpush.msra.mxu0 0.0
        %3635 = vmatpush.msra.mxu0 0.0
        %3636 = vmatpush.msra.mxu0 0.0
        %3637 = vmatpush.msra.mxu0 0.0
        %3638 = vmatpush.msra.mxu0 0.0
        %3639 = vmatpush.msra.mxu0 0.0
        %3640 = vmatpush.msra.mxu0 0.0
        %3641 = vmatpush.msra.mxu0 0.0
        %3642 = vmatpush.msra.mxu0 0.0
        %3643 = vmatpush.msra.mxu0 %v225
        %3644 = vmatpush.msra.mxu0 %v224
        %3645 = vmatmul.f32.gmra.mxu0 %v3627
        %v3646 = vpop.f32.mrf.mxu0
        %v3647 = vadd.f32 0.0, %v3646
        %3648 = vdwg.mxu0
        %3649 = vmatpush.msra.mxu0 0.0
        %3650 = vmatpush.msra.mxu0 0.0
        %3651 = vmatpush.msra.mxu0 0.0
        %3652 = vmatpush.msra.mxu0 0.0
        %3653 = vmatpush.msra.mxu0 0.0
        %3654 = vmatpush.msra.mxu0 0.0
        %3655 = vmatpush.msra.mxu0 0.0
        %3656 = vmatpush.msra.mxu0 0.0
        %3657 = vmatpush.msra.mxu0 0.0
        %3658 = vmatpush.msra.mxu0 0.0
        %3659 = vmatpush.msra.mxu0 0.0
        %3660 = vmatpush.msra.mxu0 0.0
        %3661 = vmatpush.msra.mxu0 0.0
        %3662 = vmatpush.msra.mxu0 0.0
        %3663 = vmatpush.msra.mxu0 %v232
        %3664 = vmatpush.msra.mxu0 %v231
        %3665 = vmatmul.f32.gmra.mxu0 %v3627
        %v3666 = vpop.f32.mrf.mxu0
        %v3667 = vadd.f32 0.0, %v3666
        %3668 = vdwg.mxu0
        %v3669 = vmax.f32 %v3647, %v3667
        %v3671 = vsel %vm324, %v3669, 0
        %3673 = vmatpush.msra.mxu0 0.0
        %3674 = vmatpush.msra.mxu0 0.0
        %3675 = vmatpush.msra.mxu0 0.0
        %3676 = vmatpush.msra.mxu0 0.0
        %3677 = vmatpush.msra.mxu0 0.0
        %3678 = vmatpush.msra.mxu0 0.0
        %3679 = vmatpush.msra.mxu0 0.0
        %3680 = vmatpush.msra.mxu0 0.0
        %3681 = vmatpush.msra.mxu0 0.0
        %3682 = vmatpush.msra.mxu0 0.0
        %3683 = vmatpush.msra.mxu0 0.0
        %3684 = vmatpush.msra.mxu0 0.0
        %3685 = vmatpush.msra.mxu0 0.0
        %3686 = vmatpush.msra.mxu0 0.0
        %3687 = vmatpush.msra.mxu0 0.0
        %3688 = vmatpush.msra.mxu0 %v3671
        %3689 = vmatmul.f32.gmra.mxu0 %v322
        %v3690 = vpop.f32.mrf.mxu0
        %v3691 = vadd.f32 0.0, %v3690
        %3692 = vdwg.mxu0
        %v3694 = vrot.slane %v3691, 1
        %v3695 = vrot.slane %v3691, 2
        %v3696 = vrot.slane %v3691, 3
        %3700 = vst.msk [vmem:[%s3124 + $0x5] sm:$0x1] %vm355, %v3691
        %3701 = vst.msk [vmem:[%s3124 + $0x25] sm:$0x1] %vm355, %v3694
        %3702 = vst.msk [vmem:[%s3124 + $0x45] sm:$0x1] %vm355, %v3695
        %3703 = vst.msk [vmem:[%s3124 + $0x65] sm:$0x1] %vm355, %v3696
        %v3704 = vld [vmem:[%s3011 + $0xc] sm:$0x1]
        %v3705 = vld [vmem:[%s3011 + $0x8c] sm:$0x1]
        %v3706 = vld [vmem:[%s3011 + $0x10c] sm:$0x1]
        %v3707 = vld [vmem:[%s3011 + $0x18c] sm:$0x1]
        %v3708 = vld [vmem:[%s3011 + $0xd] sm:$0x1]
        %v3709 = vld [vmem:[%s3011 + $0x8d] sm:$0x1]
        %v3710 = vld [vmem:[%s3011 + $0x10d] sm:$0x1]
        %v3711 = vld [vmem:[%s3011 + $0x18d] sm:$0x1]
        %v3712 = vmax.f32 %v3704, %v3708
        %v3713 = vmax.f32 %v3705, %v3709
        %v3714 = vmax.f32 %v3706, %v3710
        %v3715 = vmax.f32 %v3707, %v3711
        %v3716 = vld [vmem:[%s3024 + $0xc] sm:$0x1]
        %v3717 = vld [vmem:[%s3024 + $0x8c] sm:$0x1]
        %v3718 = vld [vmem:[%s3024 + $0x10c] sm:$0x1]
        %v3719 = vld [vmem:[%s3024 + $0x18c] sm:$0x1]
        %v3720 = vld [vmem:[%s3024 + $0xd] sm:$0x1]
        %v3721 = vld [vmem:[%s3024 + $0x8d] sm:$0x1]
        %v3722 = vld [vmem:[%s3024 + $0x10d] sm:$0x1]
        %v3723 = vld [vmem:[%s3024 + $0x18d] sm:$0x1]
        %v3724 = vmax.f32 %v3716, %v3720
        %v3725 = vmax.f32 %v3717, %v3721
        %v3726 = vmax.f32 %v3718, %v3722
        %v3727 = vmax.f32 %v3719, %v3723
        %v3728 = vmax.f32 %v3712, %v3724
        %v3729 = vmax.f32 %v3713, %v3725
        %v3730 = vmax.f32 %v3714, %v3726
        %v3731 = vmax.f32 %v3715, %v3727
        %v3736 = vrot.slane %v3729, 7
        %v3737 = vsel %vm268, %v3736, %v3728
        %v3738 = vrot.slane %v3730, 6
        %v3739 = vsel %vm271, %v3738, %v3737
        %v3740 = vrot.slane %v3731, 5
        %v3741 = vsel %vm274, %v3740, %v3739
        %v3742 = vsel %vm276, %v3741, 0
        %3744 = vmatpush.msra.mxu0 0.0
        %3745 = vmatpush.msra.mxu0 0.0
        %3746 = vmatpush.msra.mxu0 0.0
        %3747 = vmatpush.msra.mxu0 0.0
        %3748 = vmatpush.msra.mxu0 0.0
        %3749 = vmatpush.msra.mxu0 0.0
        %3750 = vmatpush.msra.mxu0 0.0
        %3751 = vmatpush.msra.mxu0 0.0
        %3752 = vmatpush.msra.mxu0 0.0
        %3753 = vmatpush.msra.mxu0 0.0
        %3754 = vmatpush.msra.mxu0 0.0
        %3755 = vmatpush.msra.mxu0 0.0
        %3756 = vmatpush.msra.mxu0 0.0
        %3757 = vmatpush.msra.mxu0 0.0
        %3758 = vmatpush.msra.mxu0 %v225
        %3759 = vmatpush.msra.mxu0 %v224
        %3760 = vmatmul.f32.gmra.mxu0 %v3742
        %v3761 = vpop.f32.mrf.mxu0
        %v3762 = vadd.f32 0.0, %v3761
        %3763 = vdwg.mxu0
        %3764 = vmatpush.msra.mxu0 0.0
        %3765 = vmatpush.msra.mxu0 0.0
        %3766 = vmatpush.msra.mxu0 0.0
        %3767 = vmatpush.msra.mxu0 0.0
        %3768 = vmatpush.msra.mxu0 0.0
        %3769 = vmatpush.msra.mxu0 0.0
        %3770 = vmatpush.msra.mxu0 0.0
        %3771 = vmatpush.msra.mxu0 0.0
        %3772 = vmatpush.msra.mxu0 0.0
        %3773 = vmatpush.msra.mxu0 0.0
        %3774 = vmatpush.msra.mxu0 0.0
        %3775 = vmatpush.msra.mxu0 0.0
        %3776 = vmatpush.msra.mxu0 0.0
        %3777 = vmatpush.msra.mxu0 0.0
        %3778 = vmatpush.msra.mxu0 %v232
        %3779 = vmatpush.msra.mxu0 %v231
        %3780 = vmatmul.f32.gmra.mxu0 %v3742
        %v3781 = vpop.f32.mrf.mxu0
        %v3782 = vadd.f32 0.0, %v3781
        %3783 = vdwg.mxu0
        %v3784 = vmax.f32 %v3762, %v3782
        %v3786 = vsel %vm324, %v3784, 0
        %3788 = vmatpush.msra.mxu0 0.0
        %3789 = vmatpush.msra.mxu0 0.0
        %3790 = vmatpush.msra.mxu0 0.0
        %3791 = vmatpush.msra.mxu0 0.0
        %3792 = vmatpush.msra.mxu0 0.0
        %3793 = vmatpush.msra.mxu0 0.0
        %3794 = vmatpush.msra.mxu0 0.0
        %3795 = vmatpush.msra.mxu0 0.0
        %3796 = vmatpush.msra.mxu0 0.0
        %3797 = vmatpush.msra.mxu0 0.0
        %3798 = vmatpush.msra.mxu0 0.0
        %3799 = vmatpush.msra.mxu0 0.0
        %3800 = vmatpush.msra.mxu0 0.0
        %3801 = vmatpush.msra.mxu0 0.0
        %3802 = vmatpush.msra.mxu0 0.0
        %3803 = vmatpush.msra.mxu0 %v3786
        %3804 = vmatmul.f32.gmra.mxu0 %v322
        %v3805 = vpop.f32.mrf.mxu0
        %v3806 = vadd.f32 0.0, %v3805
        %3807 = vdwg.mxu0
        %v3809 = vrot.slane %v3806, 1
        %v3810 = vrot.slane %v3806, 2
        %v3811 = vrot.slane %v3806, 3
        %3815 = vst.msk [vmem:[%s3124 + $0x6] sm:$0x1] %vm355, %v3806
        %3816 = vst.msk [vmem:[%s3124 + $0x26] sm:$0x1] %vm355, %v3809
        %3817 = vst.msk [vmem:[%s3124 + $0x46] sm:$0x1] %vm355, %v3810
        %3818 = vst.msk [vmem:[%s3124 + $0x66] sm:$0x1] %vm355, %v3811
        %v3819 = vld [vmem:[%s3011 + $0xe] sm:$0x1]
        %v3820 = vld [vmem:[%s3011 + $0x8e] sm:$0x1]
        %v3821 = vld [vmem:[%s3011 + $0x10e] sm:$0x1]
        %v3822 = vld [vmem:[%s3011 + $0x18e] sm:$0x1]
        %v3823 = vld [vmem:[%s3011 + $0xf] sm:$0x1]
        %v3824 = vld [vmem:[%s3011 + $0x8f] sm:$0x1]
        %v3825 = vld [vmem:[%s3011 + $0x10f] sm:$0x1]
        %v3826 = vld [vmem:[%s3011 + $0x18f] sm:$0x1]
        %v3827 = vmax.f32 %v3819, %v3823
        %v3828 = vmax.f32 %v3820, %v3824
        %v3829 = vmax.f32 %v3821, %v3825
        %v3830 = vmax.f32 %v3822, %v3826
        %v3831 = vld [vmem:[%s3024 + $0xe] sm:$0x1]
        %v3832 = vld [vmem:[%s3024 + $0x8e] sm:$0x1]
        %v3833 = vld [vmem:[%s3024 + $0x10e] sm:$0x1]
        %v3834 = vld [vmem:[%s3024 + $0x18e] sm:$0x1]
        %v3835 = vld [vmem:[%s3024 + $0xf] sm:$0x1]
        %v3836 = vld [vmem:[%s3024 + $0x8f] sm:$0x1]
        %v3837 = vld [vmem:[%s3024 + $0x10f] sm:$0x1]
        %v3838 = vld [vmem:[%s3024 + $0x18f] sm:$0x1]
        %v3839 = vmax.f32 %v3831, %v3835
        %v3840 = vmax.f32 %v3832, %v3836
        %v3841 = vmax.f32 %v3833, %v3837
        %v3842 = vmax.f32 %v3834, %v3838
        %v3843 = vmax.f32 %v3827, %v3839
        %v3844 = vmax.f32 %v3828, %v3840
        %v3845 = vmax.f32 %v3829, %v3841
        %v3846 = vmax.f32 %v3830, %v3842
        %v3851 = vrot.slane %v3844, 7
        %v3852 = vsel %vm268, %v3851, %v3843
        %v3853 = vrot.slane %v3845, 6
        %v3854 = vsel %vm271, %v3853, %v3852
        %v3855 = vrot.slane %v3846, 5
        %v3856 = vsel %vm274, %v3855, %v3854
        %v3857 = vsel %vm276, %v3856, 0
        %3859 = vmatpush.msra.mxu0 0.0
        %3860 = vmatpush.msra.mxu0 0.0
        %3861 = vmatpush.msra.mxu0 0.0
        %3862 = vmatpush.msra.mxu0 0.0
        %3863 = vmatpush.msra.mxu0 0.0
        %3864 = vmatpush.msra.mxu0 0.0
        %3865 = vmatpush.msra.mxu0 0.0
        %3866 = vmatpush.msra.mxu0 0.0
        %3867 = vmatpush.msra.mxu0 0.0
        %3868 = vmatpush.msra.mxu0 0.0
        %3869 = vmatpush.msra.mxu0 0.0
        %3870 = vmatpush.msra.mxu0 0.0
        %3871 = vmatpush.msra.mxu0 0.0
        %3872 = vmatpush.msra.mxu0 0.0
        %3873 = vmatpush.msra.mxu0 %v225
        %3874 = vmatpush.msra.mxu0 %v224
        %3875 = vmatmul.f32.gmra.mxu0 %v3857
        %v3876 = vpop.f32.mrf.mxu0
        %v3877 = vadd.f32 0.0, %v3876
        %3878 = vdwg.mxu0
        %3879 = vmatpush.msra.mxu0 0.0
        %3880 = vmatpush.msra.mxu0 0.0
        %3881 = vmatpush.msra.mxu0 0.0
        %3882 = vmatpush.msra.mxu0 0.0
        %3883 = vmatpush.msra.mxu0 0.0
        %3884 = vmatpush.msra.mxu0 0.0
        %3885 = vmatpush.msra.mxu0 0.0
        %3886 = vmatpush.msra.mxu0 0.0
        %3887 = vmatpush.msra.mxu0 0.0
        %3888 = vmatpush.msra.mxu0 0.0
        %3889 = vmatpush.msra.mxu0 0.0
        %3890 = vmatpush.msra.mxu0 0.0
        %3891 = vmatpush.msra.mxu0 0.0
        %3892 = vmatpush.msra.mxu0 0.0
        %3893 = vmatpush.msra.mxu0 %v232
        %3894 = vmatpush.msra.mxu0 %v231
        %3895 = vmatmul.f32.gmra.mxu0 %v3857
        %v3896 = vpop.f32.mrf.mxu0
        %v3897 = vadd.f32 0.0, %v3896
        %3898 = vdwg.mxu0
        %v3899 = vmax.f32 %v3877, %v3897
        %v3901 = vsel %vm324, %v3899, 0
        %3903 = vmatpush.msra.mxu0 0.0
        %3904 = vmatpush.msra.mxu0 0.0
        %3905 = vmatpush.msra.mxu0 0.0
        %3906 = vmatpush.msra.mxu0 0.0
        %3907 = vmatpush.msra.mxu0 0.0
        %3908 = vmatpush.msra.mxu0 0.0
        %3909 = vmatpush.msra.mxu0 0.0
        %3910 = vmatpush.msra.mxu0 0.0
        %3911 = vmatpush.msra.mxu0 0.0
        %3912 = vmatpush.msra.mxu0 0.0
        %3913 = vmatpush.msra.mxu0 0.0
        %3914 = vmatpush.msra.mxu0 0.0
        %3915 = vmatpush.msra.mxu0 0.0
        %3916 = vmatpush.msra.mxu0 0.0
        %3917 = vmatpush.msra.mxu0 0.0
        %3918 = vmatpush.msra.mxu0 %v3901
        %3919 = vmatmul.f32.gmra.mxu0 %v322
        %v3920 = vpop.f32.mrf.mxu0
        %v3921 = vadd.f32 0.0, %v3920
        %3922 = vdwg.mxu0
        %v3924 = vrot.slane %v3921, 1
        %v3925 = vrot.slane %v3921, 2
        %v3926 = vrot.slane %v3921, 3
        %3930 = vst.msk [vmem:[%s3124 + $0x7] sm:$0x1] %vm355, %v3921
        %3931 = vst.msk [vmem:[%s3124 + $0x27] sm:$0x1] %vm355, %v3924
        %3932 = vst.msk [vmem:[%s3124 + $0x47] sm:$0x1] %vm355, %v3925
        %3933 = vst.msk [vmem:[%s3124 + $0x67] sm:$0x1] %vm355, %v3926
        %s3934 = sand.u32 %s102, 1
        %s3935 = scalar_lea.sflag [#allocation4], %s3934
        %s3936 = sand.u32 %s102, 1
        %s3937 = smul.addr %s3936, 128
        %s3938 = scalar_lea.vmem [#allocation7], %s3937
        // Predicated region
        $region37: #{tpu_custom_call.1} parent=27 // pred_check
          %p3939 = pneg %p112
        $region38: #{tpu_custom_call.1} parent=27 // pred_check_branch
          %3941 = sbr.rel (%p3939) target = $region40
        $region39: #{tpu_custom_call.1} parent=27 // pred_region
          %s3942 = smul.u32 4, %s26
          %3944 = vsyncadd %s3935, 0
          %s3945 = sadd.s32 %s27, %s3942
          %s3946 = smul.addr %s25, 16
          %s3947 = sadd.s32 %s3945, %s3946
          %s3948 = smul.addr %s3947, 8
          %s3949 = scalar_lea.hbm %s2, %s3948
          %s3950 = sshll.u32 %s3938, 4
          %s3951 = int_to_ptr.vmem [resolvable:$true] %s3950
          %s3952 = sshll.u32 %s3949, 4
          %s3953 = int_to_ptr.hbm [resolvable:$true] %s3952
          %3958 = dma.vmem_to_hbm [thread:$0]  %s3951, 2048, %s3953, %s3935, 128, 128, 8
        $region40: #{tpu_custom_call.1} parent=27 // pred_fallthru
          _
      $region28: #{tpu_custom_call.1} parent=5 // pred_fallthru
        _
      %p3959 = scmp.le.s32.totalorder 2, %s15
      // Predicated region
      $region41: #{tpu_custom_call.1} parent=5 // pred_check
        %p3960 = pneg %p3959
      $region42: #{tpu_custom_call.1} parent=5 // pred_check_branch
        %3962 = sbr.rel (%p3960) target = $region44
      $region43: #{tpu_custom_call.1} parent=5 // pred_region
        %s3963 = ssub.s32 %s15, 2
        // Predicated region
        $region45: #{tpu_custom_call.1} parent=43 // pred_check
          %p3964 = pneg %p118
        $region46: #{tpu_custom_call.1} parent=43 // pred_check_branch
          %3966 = sbr.rel (%p3964) target = $region48
        $region47: #{tpu_custom_call.1} parent=43 // pred_region
          %s3967 = sand.u32 %s103, 1
          %s3968 = scalar_lea.sflag [#allocation4], %s3967
          %s3969 = sand.u32 %s103, 1
          %s3970 = smul.addr %s3969, 128
          %s3971 = scalar_lea.vmem [#allocation7], %s3970
          %3973 = dma.done %s3968, 2048
        $region48: #{tpu_custom_call.1} parent=43 // pred_fallthru
          _
      $region44: #{tpu_custom_call.1} parent=5 // pred_fallthru
        _
    $region6: #{tpu_custom_call.1} parent=1 // loop_footer
      %s19 = sadd.s32 1, %s15
    $region7: #{tpu_custom_call.1} parent=1 // loop_footer_branch
      %14 = sbr.rel target = $region3
    $region8: #{tpu_custom_call.1} parent=1 // loop_exit
      _
    %3974 = vsyncpa [#allocation3], 1
    %s3975 = scalar_lea.sflag [#allocation3], 1
    %3976 = vsyncpa %s3975, 1
    %3977 = vsyncpa [#allocation6], 1
    %s3978 = scalar_lea.sflag [#allocation6], 1
    %3979 = vsyncpa %s3978, 1
    %3980 = vsyncpa [#allocation4], 1
    %s3981 = scalar_lea.sflag [#allocation4], 1
    %3982 = vsyncpa %s3981, 1

</llo_original>
